<compile_context>
chip_gen: v5e
topology: v5e:2x2
jax: 0.10.0
libtpu: 0.0.40
codegen_flags: <defaults>
</compile_context>

<pallas_src>
import jax
import jax.numpy as jnp
from jax.experimental import pallas as pl
from jax.experimental.pallas import tpu as pltpu


def _basic_block_v2_kernel(x_ref, s1_ref, b1_ref, w1_ref, s2_ref, b2_ref,
                           w2_ref, out_ref, pad_ref):
    """One batch element per grid step.

    x_ref   : (1, H, W*C)   lane-dense input tile (also the residual)
    s*/b*   : (1, C)        folded BN scale / shift
    w*      : (9*C, C)      conv weights, HWIO reshaped to rows (dy*3+dx)*C+ci
    out_ref : (1, H, W*C)   lane-dense output tile
    pad_ref : (H+2, W+2, C) halo scratch (1-pixel border kept at zero)
    """
    H = x_ref.shape[1]
    WC = x_ref.shape[2]
    C = s1_ref.shape[1]
    W = WC // C

    # Re-zero only the 1-pixel halo border (the interior is fully overwritten
    # below).  Done every step -- cheap, and megacore-safe: with a "parallel"
    # batch axis a `program_id(0) == 0` init would be skipped on the 2nd core.
    zrow = jnp.zeros((1, W + 2, C), jnp.float32)
    zcol = jnp.zeros((H + 2, 1, C), jnp.float32)
    pad_ref[0:1, :, :] = zrow
    pad_ref[H + 1:H + 2, :, :] = zrow
    pad_ref[:, 0:1, :] = zcol
    pad_ref[:, W + 1:W + 2, :] = zcol

    x2d = x_ref[0]                          # (H, W*C) lane-dense load
    x3d = x2d.reshape(H, W, C)

    def conv3x3(act_hwc, w_ref):
        # 3x3 / stride 1 / pad 1 / no bias, as one big matmul with K = 9*C.
        pad_ref[1:H + 1, 1:W + 1, :] = act_hwc
        p = pad_ref[...]                    # single VMEM load per conv
        pieces = [p[dy:dy + H, dx:dx + W, :]
                  for dy in range(3) for dx in range(3)]
        slab = jnp.concatenate(pieces, axis=2).reshape(H * W, 9 * C)
        return jnp.dot(slab, w_ref[...], preferred_element_type=jnp.float32)

    # ---- BN1 (inference affine) + ReLU (pre-activation) ----
    t = jnp.maximum(x3d * s1_ref[0] + b1_ref[0], 0.0)
    # ---- conv1 ----
    y1 = conv3x3(t, w1_ref)                 # (H*W, C) f32, no acc Ref round trip
    # ---- BN2 + ReLU ----
    u = jnp.maximum(y1 * s2_ref[0] + b2_ref[0], 0.0)
    # ---- conv2 (reuses the same halo scratch) ----
    y2 = conv3x3(u.reshape(H, W, C), w2_ref)
    # ---- identity residual ----
    out = y2.reshape(H, W, C) + x3d
    out_ref[0] = out.reshape(H, WC).astype(out_ref.dtype)


def basic_block_v2(x_nchw, scale1, shift1, w1_hwio, scale2, shift2, w2_hwio):
    """x_nchw: (N, C, H, W) float32; returns (N, C, H, W)."""
    N, C, H, W = x_nchw.shape
    # NCHW -> NHWC -> lane-dense (N, H, W*C).
    # TODO(synk): if the surrounding model runs NHWC these transposes go away.
    x = jnp.transpose(x_nchw, (0, 2, 3, 1)).astype(jnp.float32)
    x = x.reshape(N, H, W * C)

    s1 = scale1.reshape(1, C).astype(jnp.float32)
    b1 = shift1.reshape(1, C).astype(jnp.float32)
    s2 = scale2.reshape(1, C).astype(jnp.float32)
    b2 = shift2.reshape(1, C).astype(jnp.float32)
    # HWIO (3, 3, Cin, Cout) -> (9*Cin, Cout); row order (dy, dx, ci) matches
    # the im2col concatenation order inside the kernel.
    w1 = w1_hwio.astype(jnp.float32).reshape(9 * C, C)
    w2 = w2_hwio.astype(jnp.float32).reshape(9 * C, C)

    out = pl.pallas_call(
        _basic_block_v2_kernel,
        out_shape=jax.ShapeDtypeStruct((N, H, W * C), jnp.float32),
        grid_spec=pltpu.PrefetchScalarGridSpec(
            num_scalar_prefetch=0,
            grid=(N,),
            in_specs=[
                pl.BlockSpec((1, H, W * C), lambda n: (n, 0, 0)),   # x
                pl.BlockSpec((1, C), lambda n: (0, 0)),             # scale1
                pl.BlockSpec((1, C), lambda n: (0, 0)),             # shift1
                pl.BlockSpec((9 * C, C), lambda n: (0, 0)),         # w1
                pl.BlockSpec((1, C), lambda n: (0, 0)),             # scale2
                pl.BlockSpec((1, C), lambda n: (0, 0)),             # shift2
                pl.BlockSpec((9 * C, C), lambda n: (0, 0)),         # w2
            ],
            out_specs=pl.BlockSpec((1, H, W * C), lambda n: (n, 0, 0)),
            scratch_shapes=[
                pltpu.VMEM((H + 2, W + 2, C), jnp.float32),         # halo buf
            ],
        ),
        compiler_params=pltpu.CompilerParams(
            # batch elements are independent -> shard across v7x's 2 TCs.
            dimension_semantics=("parallel",),
            # headroom above v5e's 16 MiB scoped default; equals the v6e/v7x
            # default, so safe on every generation.
            vmem_limit_bytes=32 * 1024 * 1024,
        ),
    )(x, s1, b1, w1, s2, b2, w2)

    out = out.reshape(N, H, W, C)
    return jnp.transpose(out, (0, 3, 1, 2))                         # -> NCHW


def _reference(x, scale1, shift1, w1_oihw, scale2, shift2, w2_oihw):
    """Pure-JAX reference of the same forward (NCHW, OIHW)."""
    def bn_relu(v, s, b):
        return jnp.maximum(v * s[None, :, None, None] + b[None, :, None, None], 0.0)

    def conv(v, w):
        return jax.lax.conv_general_dilated(
            v, w, window_strides=(1, 1), padding="SAME",
            dimension_numbers=("NCHW", "OIHW", "NCHW"))

    t = bn_relu(x, scale1, shift1)
    c1 = conv(t, w1_oihw)
    u = bn_relu(c1, scale2, shift2)
    c2 = conv(u, w2_oihw)
    return c2 + x


if __name__ == "__main__":
    # Small shapes consistent with the module: inplanes == planes (downsample=None).
    N, C, H, W = 2, 4, 16, 16
    eps = 1e-5

    key = jax.random.PRNGKey(0)
    keys = jax.random.split(key, 11)

    x = jax.random.normal(keys[0], (N, C, H, W), dtype=jnp.float32)

    # BatchNorm2d parameters (inference / running stats), deterministic init.
    gamma1 = jax.random.uniform(keys[1], (C,), minval=0.5, maxval=1.5)
    beta1 = 0.1 * jax.random.normal(keys[2], (C,))
    rmean1 = 0.1 * jax.random.normal(keys[3], (C,))
    rvar1 = jax.random.uniform(keys[4], (C,), minval=0.5, maxval=1.5)

    gamma2 = jax.random.uniform(keys[5], (C,), minval=0.5, maxval=1.5)
    beta2 = 0.1 * jax.random.normal(keys[6], (C,))
    rmean2 = 0.1 * jax.random.normal(keys[7], (C,))
    rvar2 = jax.random.uniform(keys[8], (C,), minval=0.5, maxval=1.5)

    # conv3x3 weights, PyTorch layout (Cout, Cin, 3, 3), no bias.
    fan_in = C * 3 * 3
    w1_oihw = jax.random.normal(keys[9], (C, C, 3, 3)) * (1.0 / jnp.sqrt(fan_in))
    w2_oihw = jax.random.normal(keys[10], (C, C, 3, 3)) * (1.0 / jnp.sqrt(fan_in))

    # Fold BN into per-channel affine:  y = x * scale + shift
    scale1 = gamma1 / jnp.sqrt(rvar1 + eps)
    shift1 = beta1 - rmean1 * scale1
    scale2 = gamma2 / jnp.sqrt(rvar2 + eps)
    shift2 = beta2 - rmean2 * scale2

    # Kernel wants HWIO weights.
    w1_hwio = jnp.transpose(w1_oihw, (2, 3, 1, 0))
    w2_hwio = jnp.transpose(w2_oihw, (2, 3, 1, 0))

    out = basic_block_v2(x, scale1, shift1, w1_hwio, scale2, shift2, w2_hwio)
    out = jax.block_until_ready(out)

    ref = _reference(x, scale1, shift1, w1_oihw, scale2, shift2, w2_oihw)
    ref = jax.block_until_ready(ref)

    assert out.shape == (N, C, H, W)
    assert jnp.allclose(out, ref, atol=1e-4, rtol=1e-4), (
        f"max abs err = {jnp.max(jnp.abs(out - ref))}")

    print("KERNEL_OK")
</pallas_src>

<mosaic_0001>
module attributes {stable_mosaic.version = 11 : i64} {
  func.func @_basic_block_v2_kernel(%arg0: i32, %arg1: memref<1x16x64xf32, #tpu.memory_space<vmem>>, %arg2: memref<1x4xf32, #tpu.memory_space<vmem>>, %arg3: memref<1x4xf32, #tpu.memory_space<vmem>>, %arg4: memref<36x4xf32, #tpu.memory_space<vmem>>, %arg5: memref<1x4xf32, #tpu.memory_space<vmem>>, %arg6: memref<1x4xf32, #tpu.memory_space<vmem>>, %arg7: memref<36x4xf32, #tpu.memory_space<vmem>>, %arg8: memref<1x16x64xf32, #tpu.memory_space<vmem>>, %arg9: memref<18x18x4xf32, #tpu.memory_space<vmem>>) attributes {dimension_semantics = [#tpu.dimension_semantics<parallel>], iteration_bounds = array<i64: 2>, scalar_prefetch = 0 : i64, scratch_operands = 1 : i64, tpu.core_type = #tpu.core_type<tc>, window_params = [{transform_indices = @transform_0, window_bounds = array<i64: 1, 16, 64>}, {pipeline_mode = #tpu.pipeline_mode<synchronous>, transform_indices = @transform_1, window_bounds = array<i64: 1, 4>}, {pipeline_mode = #tpu.pipeline_mode<synchronous>, transform_indices = @transform_2, window_bounds = array<i64: 1, 4>}, {pipeline_mode = #tpu.pipeline_mode<synchronous>, transform_indices = @transform_3, window_bounds = array<i64: 36, 4>}, {pipeline_mode = #tpu.pipeline_mode<synchronous>, transform_indices = @transform_4, window_bounds = array<i64: 1, 4>}, {pipeline_mode = #tpu.pipeline_mode<synchronous>, transform_indices = @transform_5, window_bounds = array<i64: 1, 4>}, {pipeline_mode = #tpu.pipeline_mode<synchronous>, transform_indices = @transform_6, window_bounds = array<i64: 36, 4>}, {transform_indices = @transform_7, window_bounds = array<i64: 1, 16, 64>}]} {
    %cst = arith.constant 0.000000e+00 : f32
    %0 = vector.broadcast %cst : f32 to vector<1x18x4xf32>
    %cst_0 = arith.constant 0.000000e+00 : f32
    %1 = vector.broadcast %cst_0 : f32 to vector<18x1x4xf32>
    %c0 = arith.constant 0 : index
    %c0_1 = arith.constant 0 : index
    %c0_2 = arith.constant 0 : index
    %2 = vector.load %arg9[%c0, %c0_1, %c0_2] : memref<18x18x4xf32, #tpu.memory_space<vmem>>, vector<1x18x4xf32>
    tpu.vector_store %arg9[%c0, %c0_1, %c0_2], %0 {strides = array<i32>} : memref<18x18x4xf32, #tpu.memory_space<vmem>>, vector<1x18x4xf32>,
    %c17 = arith.constant 17 : index
    %c0_3 = arith.constant 0 : index
    %c0_4 = arith.constant 0 : index
    %3 = vector.load %arg9[%c17, %c0_3, %c0_4] : memref<18x18x4xf32, #tpu.memory_space<vmem>>, vector<1x18x4xf32>
    tpu.vector_store %arg9[%c17, %c0_3, %c0_4], %0 {strides = array<i32>} : memref<18x18x4xf32, #tpu.memory_space<vmem>>, vector<1x18x4xf32>,
    %c0_5 = arith.constant 0 : index
    %c0_6 = arith.constant 0 : index
    %c0_7 = arith.constant 0 : index
    %4 = vector.load %arg9[%c0_5, %c0_6, %c0_7] : memref<18x18x4xf32, #tpu.memory_space<vmem>>, vector<18x1x4xf32>
    tpu.vector_store %arg9[%c0_5, %c0_6, %c0_7], %1 {strides = array<i32>} : memref<18x18x4xf32, #tpu.memory_space<vmem>>, vector<18x1x4xf32>,
    %c0_8 = arith.constant 0 : index
    %c17_9 = arith.constant 17 : index
    %c0_10 = arith.constant 0 : index
    %5 = vector.load %arg9[%c0_8, %c17_9, %c0_10] : memref<18x18x4xf32, #tpu.memory_space<vmem>>, vector<18x1x4xf32>
    tpu.vector_store %arg9[%c0_8, %c17_9, %c0_10], %1 {strides = array<i32>} : memref<18x18x4xf32, #tpu.memory_space<vmem>>, vector<18x1x4xf32>,
    %c0_11 = arith.constant 0 : index
    %c0_12 = arith.constant 0 : index
    %c0_13 = arith.constant 0 : index
    %6 = vector.load %arg1[%c0_11, %c0_12, %c0_13] : memref<1x16x64xf32, #tpu.memory_space<vmem>>, vector<1x16x64xf32>
    %7 = vector.shape_cast %6 : vector<1x16x64xf32> to vector<16x64xf32>
    %8 = vector.shape_cast %7 : vector<16x64xf32> to vector<16x16x4xf32>
    %c0_14 = arith.constant 0 : index
    %c0_15 = arith.constant 0 : index
    %9 = vector.load %arg2[%c0_14, %c0_15] : memref<1x4xf32, #tpu.memory_space<vmem>>, vector<1x4xf32>
    %10 = vector.shape_cast %9 : vector<1x4xf32> to vector<4xf32>
    %11 = vector.shape_cast %10 : vector<4xf32> to vector<1x1x4xf32>
    %12 = vector.broadcast %11 : vector<1x1x4xf32> to vector<16x16x4xf32>
    %13 = arith.mulf %8, %12 : vector<16x16x4xf32>
    %c0_16 = arith.constant 0 : index
    %c0_17 = arith.constant 0 : index
    %14 = vector.load %arg3[%c0_16, %c0_17] : memref<1x4xf32, #tpu.memory_space<vmem>>, vector<1x4xf32>
    %15 = vector.shape_cast %14 : vector<1x4xf32> to vector<4xf32>
    %16 = vector.shape_cast %15 : vector<4xf32> to vector<1x1x4xf32>
    %17 = vector.broadcast %16 : vector<1x1x4xf32> to vector<16x16x4xf32>
    %18 = arith.addf %13, %17 : vector<16x16x4xf32>
    %cst_18 = arith.constant 0.000000e+00 : f32
    %19 = vector.broadcast %cst_18 : f32 to vector<16x16x4xf32>
    %20 = arith.maximumf %18, %19 : vector<16x16x4xf32>
    %c1 = arith.constant 1 : index
    %c1_19 = arith.constant 1 : index
    %c0_20 = arith.constant 0 : index
    %21 = vector.load %arg9[%c1, %c1_19, %c0_20] : memref<18x18x4xf32, #tpu.memory_space<vmem>>, vector<16x16x4xf32>
    tpu.vector_store %arg9[%c1, %c1_19, %c0_20], %20 {strides = array<i32>} : memref<18x18x4xf32, #tpu.memory_space<vmem>>, vector<16x16x4xf32>,
    %c0_21 = arith.constant 0 : index
    %c0_22 = arith.constant 0 : index
    %c0_23 = arith.constant 0 : index
    %22 = vector.load %arg9[%c0_21, %c0_22, %c0_23] : memref<18x18x4xf32, #tpu.memory_space<vmem>>, vector<18x18x4xf32>
    %23 = vector.extract_strided_slice %22 {offsets = [0, 0, 0], sizes = [16, 16, 4], strides = [1, 1, 1]} : vector<18x18x4xf32> to vector<16x16x4xf32>
    %24 = vector.extract_strided_slice %22 {offsets = [0, 1, 0], sizes = [16, 16, 4], strides = [1, 1, 1]} : vector<18x18x4xf32> to vector<16x16x4xf32>
    %25 = vector.extract_strided_slice %22 {offsets = [0, 2, 0], sizes = [16, 16, 4], strides = [1, 1, 1]} : vector<18x18x4xf32> to vector<16x16x4xf32>
    %26 = vector.extract_strided_slice %22 {offsets = [1, 0, 0], sizes = [16, 16, 4], strides = [1, 1, 1]} : vector<18x18x4xf32> to vector<16x16x4xf32>
    %27 = vector.extract_strided_slice %22 {offsets = [1, 1, 0], sizes = [16, 16, 4], strides = [1, 1, 1]} : vector<18x18x4xf32> to vector<16x16x4xf32>
    %28 = vector.extract_strided_slice %22 {offsets = [1, 2, 0], sizes = [16, 16, 4], strides = [1, 1, 1]} : vector<18x18x4xf32> to vector<16x16x4xf32>
    %29 = vector.extract_strided_slice %22 {offsets = [2, 0, 0], sizes = [16, 16, 4], strides = [1, 1, 1]} : vector<18x18x4xf32> to vector<16x16x4xf32>
    %30 = vector.extract_strided_slice %22 {offsets = [2, 1, 0], sizes = [16, 16, 4], strides = [1, 1, 1]} : vector<18x18x4xf32> to vector<16x16x4xf32>
    %31 = vector.extract_strided_slice %22 {offsets = [2, 2, 0], sizes = [16, 16, 4], strides = [1, 1, 1]} : vector<18x18x4xf32> to vector<16x16x4xf32>
    %32 = tpu.concatenate %23, %24, %25, %26, %27, %28, %29, %30, %31 in 2 : vector<16x16x4xf32>, vector<16x16x4xf32>, vector<16x16x4xf32>, vector<16x16x4xf32>, vector<16x16x4xf32>, vector<16x16x4xf32>, vector<16x16x4xf32>, vector<16x16x4xf32>, vector<16x16x4xf32> -> vector<16x16x36xf32>
    %33 = vector.shape_cast %32 : vector<16x16x36xf32> to vector<256x36xf32>
    %c0_24 = arith.constant 0 : index
    %c0_25 = arith.constant 0 : index
    %34 = vector.load %arg4[%c0_24, %c0_25] : memref<36x4xf32, #tpu.memory_space<vmem>>, vector<36x4xf32>
    %cst_26 = arith.constant dense<0.000000e+00> : vector<256x4xf32>
    %35 = tpu.matmul %33, %34, %cst_26 {dimension_numbers = #tpu.dot_dimension_numbers<[1], [0], [0], [1], [0, 0, 1, 1], [], []>} : vector<256x36xf32>, vector<36x4xf32>, vector<256x4xf32> -> vector<256x4xf32>
    %c0_27 = arith.constant 0 : index
    %c0_28 = arith.constant 0 : index
    %36 = vector.load %arg5[%c0_27, %c0_28] : memref<1x4xf32, #tpu.memory_space<vmem>>, vector<1x4xf32>
    %37 = vector.shape_cast %36 : vector<1x4xf32> to vector<4xf32>
    %38 = vector.shape_cast %37 : vector<4xf32> to vector<1x4xf32>
    %39 = vector.broadcast %38 : vector<1x4xf32> to vector<256x4xf32>
    %40 = arith.mulf %35, %39 : vector<256x4xf32>
    %c0_29 = arith.constant 0 : index
    %c0_30 = arith.constant 0 : index
    %41 = vector.load %arg6[%c0_29, %c0_30] : memref<1x4xf32, #tpu.memory_space<vmem>>, vector<1x4xf32>
    %42 = vector.shape_cast %41 : vector<1x4xf32> to vector<4xf32>
    %43 = vector.shape_cast %42 : vector<4xf32> to vector<1x4xf32>
    %44 = vector.broadcast %43 : vector<1x4xf32> to vector<256x4xf32>
    %45 = arith.addf %40, %44 : vector<256x4xf32>
    %cst_31 = arith.constant 0.000000e+00 : f32
    %46 = vector.broadcast %cst_31 : f32 to vector<256x4xf32>
    %47 = arith.maximumf %45, %46 : vector<256x4xf32>
    %48 = vector.shape_cast %47 : vector<256x4xf32> to vector<16x16x4xf32>
    %c1_32 = arith.constant 1 : index
    %c1_33 = arith.constant 1 : index
    %c0_34 = arith.constant 0 : index
    %49 = vector.load %arg9[%c1_32, %c1_33, %c0_34] : memref<18x18x4xf32, #tpu.memory_space<vmem>>, vector<16x16x4xf32>
    tpu.vector_store %arg9[%c1_32, %c1_33, %c0_34], %48 {strides = array<i32>} : memref<18x18x4xf32, #tpu.memory_space<vmem>>, vector<16x16x4xf32>,
    %c0_35 = arith.constant 0 : index
    %c0_36 = arith.constant 0 : index
    %c0_37 = arith.constant 0 : index
    %50 = vector.load %arg9[%c0_35, %c0_36, %c0_37] : memref<18x18x4xf32, #tpu.memory_space<vmem>>, vector<18x18x4xf32>
    %51 = vector.extract_strided_slice %50 {offsets = [0, 0, 0], sizes = [16, 16, 4], strides = [1, 1, 1]} : vector<18x18x4xf32> to vector<16x16x4xf32>
    %52 = vector.extract_strided_slice %50 {offsets = [0, 1, 0], sizes = [16, 16, 4], strides = [1, 1, 1]} : vector<18x18x4xf32> to vector<16x16x4xf32>
    %53 = vector.extract_strided_slice %50 {offsets = [0, 2, 0], sizes = [16, 16, 4], strides = [1, 1, 1]} : vector<18x18x4xf32> to vector<16x16x4xf32>
    %54 = vector.extract_strided_slice %50 {offsets = [1, 0, 0], sizes = [16, 16, 4], strides = [1, 1, 1]} : vector<18x18x4xf32> to vector<16x16x4xf32>
    %55 = vector.extract_strided_slice %50 {offsets = [1, 1, 0], sizes = [16, 16, 4], strides = [1, 1, 1]} : vector<18x18x4xf32> to vector<16x16x4xf32>
    %56 = vector.extract_strided_slice %50 {offsets = [1, 2, 0], sizes = [16, 16, 4], strides = [1, 1, 1]} : vector<18x18x4xf32> to vector<16x16x4xf32>
    %57 = vector.extract_strided_slice %50 {offsets = [2, 0, 0], sizes = [16, 16, 4], strides = [1, 1, 1]} : vector<18x18x4xf32> to vector<16x16x4xf32>
    %58 = vector.extract_strided_slice %50 {offsets = [2, 1, 0], sizes = [16, 16, 4], strides = [1, 1, 1]} : vector<18x18x4xf32> to vector<16x16x4xf32>
    %59 = vector.extract_strided_slice %50 {offsets = [2, 2, 0], sizes = [16, 16, 4], strides = [1, 1, 1]} : vector<18x18x4xf32> to vector<16x16x4xf32>
    %60 = tpu.concatenate %51, %52, %53, %54, %55, %56, %57, %58, %59 in 2 : vector<16x16x4xf32>, vector<16x16x4xf32>, vector<16x16x4xf32>, vector<16x16x4xf32>, vector<16x16x4xf32>, vector<16x16x4xf32>, vector<16x16x4xf32>, vector<16x16x4xf32>, vector<16x16x4xf32> -> vector<16x16x36xf32>
    %61 = vector.shape_cast %60 : vector<16x16x36xf32> to vector<256x36xf32>
    %c0_38 = arith.constant 0 : index
    %c0_39 = arith.constant 0 : index
    %62 = vector.load %arg7[%c0_38, %c0_39] : memref<36x4xf32, #tpu.memory_space<vmem>>, vector<36x4xf32>
    %cst_40 = arith.constant dense<0.000000e+00> : vector<256x4xf32>
    %63 = tpu.matmul %61, %62, %cst_40 {dimension_numbers = #tpu.dot_dimension_numbers<[1], [0], [0], [1], [0, 0, 1, 1], [], []>} : vector<256x36xf32>, vector<36x4xf32>, vector<256x4xf32> -> vector<256x4xf32>
    %64 = vector.shape_cast %63 : vector<256x4xf32> to vector<16x16x4xf32>
    %65 = arith.addf %64, %8 : vector<16x16x4xf32>
    %66 = vector.shape_cast %65 : vector<16x16x4xf32> to vector<16x64xf32>
    %c0_41 = arith.constant 0 : index
    %c0_42 = arith.constant 0 : index
    %c0_43 = arith.constant 0 : index
    %67 = vector.load %arg8[%c0_41, %c0_42, %c0_43] : memref<1x16x64xf32, #tpu.memory_space<vmem>>, vector<1x16x64xf32>
    %68 = vector.shape_cast %67 : vector<1x16x64xf32> to vector<16x64xf32>
    %69 = vector.shape_cast %66 : vector<16x64xf32> to vector<1x16x64xf32>
    tpu.vector_store %arg8[%c0_41, %c0_42, %c0_43], %69 {strides = array<i32>} : memref<1x16x64xf32, #tpu.memory_space<vmem>>, vector<1x16x64xf32>,
    return
  }
  func.func @transform_0(%arg0: i32) -> (i32, i32, i32) {
    %c0_i32 = arith.constant 0 : i32
    %c0_i32_0 = arith.constant 0 : i32
    %c0_i32_1 = arith.constant 0 : i32
    return %arg0, %c0_i32, %c0_i32_0 : i32, i32, i32
  }
  func.func @transform_1(%arg0: i32) -> (i32, i32) {
    %c0_i32 = arith.constant 0 : i32
    %c0_i32_0 = arith.constant 0 : i32
    %c0_i32_1 = arith.constant 0 : i32
    return %c0_i32, %c0_i32_0 : i32, i32
  }
  func.func @transform_2(%arg0: i32) -> (i32, i32) {
    %c0_i32 = arith.constant 0 : i32
    %c0_i32_0 = arith.constant 0 : i32
    %c0_i32_1 = arith.constant 0 : i32
    return %c0_i32, %c0_i32_0 : i32, i32
  }
  func.func @transform_3(%arg0: i32) -> (i32, i32) {
    %c0_i32 = arith.constant 0 : i32
    %c0_i32_0 = arith.constant 0 : i32
    %c0_i32_1 = arith.constant 0 : i32
    return %c0_i32, %c0_i32_0 : i32, i32
  }
  func.func @transform_4(%arg0: i32) -> (i32, i32) {
    %c0_i32 = arith.constant 0 : i32
    %c0_i32_0 = arith.constant 0 : i32
    %c0_i32_1 = arith.constant 0 : i32
    return %c0_i32, %c0_i32_0 : i32, i32
  }
  func.func @transform_5(%arg0: i32) -> (i32, i32) {
    %c0_i32 = arith.constant 0 : i32
    %c0_i32_0 = arith.constant 0 : i32
    %c0_i32_1 = arith.constant 0 : i32
    return %c0_i32, %c0_i32_0 : i32, i32
  }
  func.func @transform_6(%arg0: i32) -> (i32, i32) {
    %c0_i32 = arith.constant 0 : i32
    %c0_i32_0 = arith.constant 0 : i32
    %c0_i32_1 = arith.constant 0 : i32
    return %c0_i32, %c0_i32_0 : i32, i32
  }
  func.func @transform_7(%arg0: i32) -> (i32, i32, i32) {
    %c0_i32 = arith.constant 0 : i32
    %c0_i32_0 = arith.constant 0 : i32
    %c0_i32_1 = arith.constant 0 : i32
    return %arg0, %c0_i32, %c0_i32_0 : i32, i32, i32
  }
}

</mosaic_0001>

<llo_original>
// kernel: tpu_custom_call.1
$region0: #{tpu_custom_call.1}
  #allocation0 [shape = 'u32[]', space=smem, size = 0x4, offset = 0x4, fixed_abs, tag = 'smem constant byte address 0x4 - core index']
  #allocation1 [shape = 'u32[72,128]{1,0:T(1,128)}', space=vmem, size = 0x9000, scoped, tag = 'internal scratch']
  #allocation2 [shape = 'f32[18,18,4]{2,1,0:T(8,128)}', space=vmem, size = 0x36000, scoped, tag = 'scratch operand']
  %s0 = inlined_call_operand.vmem [shape: f32[2,16,64], index: 0, kind: input, shape index: {}]
  %s1 = inlined_call_operand.vmem [shape: f32[1,4], index: 1, kind: input, shape index: {}]
  %s2 = inlined_call_operand.vmem [shape: f32[1,4], index: 2, kind: input, shape index: {}]
  %s3 = inlined_call_operand.vmem [shape: f32[36,4], index: 3, kind: input, shape index: {}]
  %s4 = inlined_call_operand.vmem [shape: f32[1,4], index: 4, kind: input, shape index: {}]
  %s5 = inlined_call_operand.vmem [shape: f32[1,4], index: 5, kind: input, shape index: {}]
  %s6 = inlined_call_operand.vmem [shape: f32[36,4], index: 6, kind: input, shape index: {}]
  %s7 = inlined_call_operand.hbm [shape: f32[2,16,64], index: 7, kind: output, shape index: {}]
  %s8 = sld [smem:[#allocation0]]
  $region61: #{tpu_custom_call.1} parent=0
    _
  %s10 = ssub.s32 1, %s8
  %s11 = scalar_select 0, %s10, %s8
  $region1: #{tpu_custom_call.1} parent=0
    #allocation3 [shape = 'u8[16384]{0}', space=vmem, size = 0x4000, scoped, tag = 'output window, operand 0']
    #allocation4 [shape = 's32[2]{0}', space=sflag, size = 0x8, scoped, tag = 'scoped memory for tpu_custom_call.1']
    %12 = vsyncpa [#allocation4], 0
    %s13 = scalar_lea.sflag [#allocation4], 1
    %14 = vsyncpa %s13, 0
    loop: start=0, step=1, limit=4
    $region2: #{tpu_custom_call.1} parent=1 // loop_pre_header
      _
    $region3: #{tpu_custom_call.1} parent=1 // loop_header
      %s16 = sphi 0, %s20
      %p17 = scmp.ge.s32.totalorder %s16, 4
      %s26 = sphi 0, %s28
      %s29 = sphi 0, %s26
      %s30 = sphi 0, %s29
      %s46 = sphi 0, %s30
      %s50 = sphi 0, %s50
      %s52 = sphi 0, %s50
      %s53 = sphi 0, %s52
      %s67 = sphi 0, %s53
      %s71 = sphi 0, %s71
      %s73 = sphi 0, %s71
      %s74 = sphi 0, %s73
      %s88 = sphi 0, %s74
      %s92 = sphi 0, %s92
      %s94 = sphi 0, %s92
      %s95 = sphi 0, %s94
      %s109 = sphi 0, %s95
      %s113 = sphi 0, %s113
      %s115 = sphi 0, %s113
      %s116 = sphi 0, %s115
      %s130 = sphi 0, %s116
      %s134 = sphi 0, %s134
      %s136 = sphi 0, %s134
      %s137 = sphi 0, %s136
      %s151 = sphi 0, %s137
      %s155 = sphi 0, %s155
      %s157 = sphi 0, %s155
      %s158 = sphi 0, %s157
      %s172 = sphi 0, %s158
      %s178 = sphi 0, %s180
      %s181 = sphi 0, %s178
      %s182 = sphi 0, %s181
      %s198 = sphi 0, %s182
    $region4: #{tpu_custom_call.1} parent=1 // loop_header_branch
      %19 = sbr.rel (%p17) target = $region8
    $region5: #{tpu_custom_call.1} parent=1 // loop_body
      %s21 = ssub.s32 %s16, 1
      %s22 = ssub.s32 %s16, 2
      %s23 = sadd.s32 %s16, 1
      %s24 = ssub.s32 %s16, %s23
      %p25 = scmp.eq.s32.totalorder %s24, 0
      %s27 = sadd.s32 %s26, 1
      %s28 = scalar_select %p25, %s26, %s27
      %p31 = pneg %p25
      %p32 = scmp.eq.s32.totalorder %s16, 1
      %p33 = por %p31, %p32
      %p34 = scmp.ne.s32.totalorder %s26, %s29
      %p35 = scmp.eq.s32.totalorder %s16, 0
      %p36 = por %p34, %p35
      %p37 = scmp.ne.s32.totalorder %s26, %s29
      %p38 = scmp.eq.s32.totalorder %s21, 1
      %p39 = por %p37, %p38
      %p40 = scmp.ne.s32.totalorder %s29, %s30
      %p41 = scmp.eq.s32.totalorder %s21, 0
      %p42 = por %p40, %p41
      %p43 = scmp.ne.s32.totalorder %s29, %s30
      %p44 = scmp.eq.s32.totalorder %s22, 1
      %p45 = por %p43, %p44
      %p47 = scmp.ne.s32.totalorder %s30, %s46
      %p48 = scmp.eq.s32.totalorder %s22, 0
      %p49 = por %p47, %p48
      %s51 = sadd.s32 %s50, 1
      %p54 = scmp.eq.s32.totalorder %s16, 1
      %p55 = scmp.ne.s32.totalorder %s50, %s52
      %p56 = scmp.eq.s32.totalorder %s16, 0
      %p57 = por %p55, %p56
      %p58 = scmp.ne.s32.totalorder %s50, %s52
      %p59 = scmp.eq.s32.totalorder %s21, 1
      %p60 = por %p58, %p59
      %p61 = scmp.ne.s32.totalorder %s52, %s53
      %p62 = scmp.eq.s32.totalorder %s21, 0
      %p63 = por %p61, %p62
      %p64 = scmp.ne.s32.totalorder %s52, %s53
      %p65 = scmp.eq.s32.totalorder %s22, 1
      %p66 = por %p64, %p65
      %p68 = scmp.ne.s32.totalorder %s53, %s67
      %p69 = scmp.eq.s32.totalorder %s22, 0
      %p70 = por %p68, %p69
      %s72 = sadd.s32 %s71, 1
      %p75 = scmp.eq.s32.totalorder %s16, 1
      %p76 = scmp.ne.s32.totalorder %s71, %s73
      %p77 = scmp.eq.s32.totalorder %s16, 0
      %p78 = por %p76, %p77
      %p79 = scmp.ne.s32.totalorder %s71, %s73
      %p80 = scmp.eq.s32.totalorder %s21, 1
      %p81 = por %p79, %p80
      %p82 = scmp.ne.s32.totalorder %s73, %s74
      %p83 = scmp.eq.s32.totalorder %s21, 0
      %p84 = por %p82, %p83
      %p85 = scmp.ne.s32.totalorder %s73, %s74
      %p86 = scmp.eq.s32.totalorder %s22, 1
      %p87 = por %p85, %p86
      %p89 = scmp.ne.s32.totalorder %s74, %s88
      %p90 = scmp.eq.s32.totalorder %s22, 0
      %p91 = por %p89, %p90
      %s93 = sadd.s32 %s92, 1
      %p96 = scmp.eq.s32.totalorder %s16, 1
      %p97 = scmp.ne.s32.totalorder %s92, %s94
      %p98 = scmp.eq.s32.totalorder %s16, 0
      %p99 = por %p97, %p98
      %p100 = scmp.ne.s32.totalorder %s92, %s94
      %p101 = scmp.eq.s32.totalorder %s21, 1
      %p102 = por %p100, %p101
      %p103 = scmp.ne.s32.totalorder %s94, %s95
      %p104 = scmp.eq.s32.totalorder %s21, 0
      %p105 = por %p103, %p104
      %p106 = scmp.ne.s32.totalorder %s94, %s95
      %p107 = scmp.eq.s32.totalorder %s22, 1
      %p108 = por %p106, %p107
      %p110 = scmp.ne.s32.totalorder %s95, %s109
      %p111 = scmp.eq.s32.totalorder %s22, 0
      %p112 = por %p110, %p111
      %s114 = sadd.s32 %s113, 1
      %p117 = scmp.eq.s32.totalorder %s16, 1
      %p118 = scmp.ne.s32.totalorder %s113, %s115
      %p119 = scmp.eq.s32.totalorder %s16, 0
      %p120 = por %p118, %p119
      %p121 = scmp.ne.s32.totalorder %s113, %s115
      %p122 = scmp.eq.s32.totalorder %s21, 1
      %p123 = por %p121, %p122
      %p124 = scmp.ne.s32.totalorder %s115, %s116
      %p125 = scmp.eq.s32.totalorder %s21, 0
      %p126 = por %p124, %p125
      %p127 = scmp.ne.s32.totalorder %s115, %s116
      %p128 = scmp.eq.s32.totalorder %s22, 1
      %p129 = por %p127, %p128
      %p131 = scmp.ne.s32.totalorder %s116, %s130
      %p132 = scmp.eq.s32.totalorder %s22, 0
      %p133 = por %p131, %p132
      %s135 = sadd.s32 %s134, 1
      %p138 = scmp.eq.s32.totalorder %s16, 1
      %p139 = scmp.ne.s32.totalorder %s134, %s136
      %p140 = scmp.eq.s32.totalorder %s16, 0
      %p141 = por %p139, %p140
      %p142 = scmp.ne.s32.totalorder %s134, %s136
      %p143 = scmp.eq.s32.totalorder %s21, 1
      %p144 = por %p142, %p143
      %p145 = scmp.ne.s32.totalorder %s136, %s137
      %p146 = scmp.eq.s32.totalorder %s21, 0
      %p147 = por %p145, %p146
      %p148 = scmp.ne.s32.totalorder %s136, %s137
      %p149 = scmp.eq.s32.totalorder %s22, 1
      %p150 = por %p148, %p149
      %p152 = scmp.ne.s32.totalorder %s137, %s151
      %p153 = scmp.eq.s32.totalorder %s22, 0
      %p154 = por %p152, %p153
      %s156 = sadd.s32 %s155, 1
      %p159 = scmp.eq.s32.totalorder %s16, 1
      %p160 = scmp.ne.s32.totalorder %s155, %s157
      %p161 = scmp.eq.s32.totalorder %s16, 0
      %p162 = por %p160, %p161
      %p163 = scmp.ne.s32.totalorder %s155, %s157
      %p164 = scmp.eq.s32.totalorder %s21, 1
      %p165 = por %p163, %p164
      %p166 = scmp.ne.s32.totalorder %s157, %s158
      %p167 = scmp.eq.s32.totalorder %s21, 0
      %p168 = por %p166, %p167
      %p169 = scmp.ne.s32.totalorder %s157, %s158
      %p170 = scmp.eq.s32.totalorder %s22, 1
      %p171 = por %p169, %p170
      %p173 = scmp.ne.s32.totalorder %s158, %s172
      %p174 = scmp.eq.s32.totalorder %s22, 0
      %p175 = por %p173, %p174
      %s176 = ssub.s32 %s16, %s23
      %p177 = scmp.eq.s32.totalorder %s176, 0
      %s179 = sadd.s32 %s178, 1
      %s180 = scalar_select %p177, %s178, %s179
      %p183 = pneg %p177
      %p184 = scmp.eq.s32.totalorder %s16, 1
      %p185 = por %p183, %p184
      %p186 = scmp.ne.s32.totalorder %s178, %s181
      %p187 = scmp.eq.s32.totalorder %s16, 0
      %p188 = por %p186, %p187
      %p189 = scmp.ne.s32.totalorder %s178, %s181
      %p190 = scmp.eq.s32.totalorder %s21, 1
      %p191 = por %p189, %p190
      %p192 = scmp.ne.s32.totalorder %s181, %s182
      %p193 = scmp.eq.s32.totalorder %s21, 0
      %p194 = por %p192, %p193
      %p195 = scmp.ne.s32.totalorder %s181, %s182
      %p196 = scmp.eq.s32.totalorder %s22, 1
      %p197 = por %p195, %p196
      %p199 = scmp.ne.s32.totalorder %s182, %s198
      %p200 = scmp.eq.s32.totalorder %s22, 0
      %p201 = por %p199, %p200
      %p202 = scmp.le.s32.totalorder 1, %s16
      %p203 = scmp.lt.s32.totalorder %s16, 3
      %p204 = pnand %p202, %p203
      %p205 = pneg %p204
      // Predicated region
      $region9: #{tpu_custom_call.1} parent=5 // pred_check
        _
      $region10: #{tpu_custom_call.1} parent=5 // pred_check_branch
        %207 = sbr.rel (%p204) target = $region12
      $region11: #{tpu_custom_call.1} parent=5 // pred_region
        %s208 = ssub.s32 %s16, 1
        // Predicated region
        $region13: #{tpu_custom_call.1} parent=11 // pred_check
          %p209 = pneg %p63
        $region14: #{tpu_custom_call.1} parent=11 // pred_check_branch
          %211 = sbr.rel (%p209) target = $region16
        $region15: #{tpu_custom_call.1} parent=11 // pred_region
          _
        $region16: #{tpu_custom_call.1} parent=11 // pred_fallthru
          _
        // Predicated region
        $region17: #{tpu_custom_call.1} parent=11 // pred_check
          %p212 = pneg %p84
        $region18: #{tpu_custom_call.1} parent=11 // pred_check_branch
          %214 = sbr.rel (%p212) target = $region20
        $region19: #{tpu_custom_call.1} parent=11 // pred_region
          _
        $region20: #{tpu_custom_call.1} parent=11 // pred_fallthru
          _
        // Predicated region
        $region21: #{tpu_custom_call.1} parent=11 // pred_check
          %p215 = pneg %p105
        $region22: #{tpu_custom_call.1} parent=11 // pred_check_branch
          %217 = sbr.rel (%p215) target = $region24
        $region23: #{tpu_custom_call.1} parent=11 // pred_region
          _
        $region24: #{tpu_custom_call.1} parent=11 // pred_fallthru
          _
        // Predicated region
        $region25: #{tpu_custom_call.1} parent=11 // pred_check
          %p218 = pneg %p126
        $region26: #{tpu_custom_call.1} parent=11 // pred_check_branch
          %220 = sbr.rel (%p218) target = $region28
        $region27: #{tpu_custom_call.1} parent=11 // pred_region
          _
        $region28: #{tpu_custom_call.1} parent=11 // pred_fallthru
          _
        // Predicated region
        $region29: #{tpu_custom_call.1} parent=11 // pred_check
          %p221 = pneg %p147
        $region30: #{tpu_custom_call.1} parent=11 // pred_check_branch
          %223 = sbr.rel (%p221) target = $region32
        $region31: #{tpu_custom_call.1} parent=11 // pred_region
          _
        $region32: #{tpu_custom_call.1} parent=11 // pred_fallthru
          _
        // Predicated region
        $region33: #{tpu_custom_call.1} parent=11 // pred_check
          %p224 = pneg %p168
        $region34: #{tpu_custom_call.1} parent=11 // pred_check_branch
          %226 = sbr.rel (%p224) target = $region36
        $region35: #{tpu_custom_call.1} parent=11 // pred_region
          _
        $region36: #{tpu_custom_call.1} parent=11 // pred_fallthru
          _
      $region12: #{tpu_custom_call.1} parent=5 // pred_fallthru
        _
      %p227 = scmp.lt.s32.totalorder %s16, 2
      // Predicated region
      $region37: #{tpu_custom_call.1} parent=5 // pred_check
        %p228 = pneg %p227
      $region38: #{tpu_custom_call.1} parent=5 // pred_check_branch
        %230 = sbr.rel (%p228) target = $region40
      $region39: #{tpu_custom_call.1} parent=5 // pred_region
        // Predicated region
        $region41: #{tpu_custom_call.1} parent=39 // pred_check
          %p231 = pneg %p36
        $region42: #{tpu_custom_call.1} parent=39 // pred_check_branch
          %233 = sbr.rel (%p231) target = $region44
        $region43: #{tpu_custom_call.1} parent=39 // pred_region
          %p234 = scmp.lt.s32.totalorder %s16, 1
          %s235 = scalar_select %p234, %s16, 1
          %s236 = smul.addr %s235, 2
          %s237 = smul.addr %s236, 8
          %s238 = scalar_lea.vmem %s0, %s237
        $region44: #{tpu_custom_call.1} parent=39 // pred_fallthru
          _
      $region40: #{tpu_custom_call.1} parent=5 // pred_fallthru
        _
      %p239 = scmp.le.s32.totalorder 1, %s16
      %p240 = scmp.lt.s32.totalorder %s16, 3
      %p241 = pnand %p239, %p240
      %p242 = pneg %p241
      // Predicated region
      $region45: #{tpu_custom_call.1} parent=5 // pred_check
        _
      $region46: #{tpu_custom_call.1} parent=5 // pred_check_branch
        %244 = sbr.rel (%p241) target = $region48
      $region47: #{tpu_custom_call.1} parent=5 // pred_region
        %s245 = ssub.s32 %s16, 1
        %p246 = scmp.lt.s32.totalorder %s21, 1
        %s247 = scalar_select %p246, %s21, 1
        %s248 = smul.addr %s247, 2
        %s249 = smul.addr %s248, 8
        %s250 = scalar_lea.vmem %s0, %s249
        %p251 = pneg %p42
        %p252 = pneg %p39
        %p253 = pneg %p63
        %p254 = pneg %p60
        %p255 = pneg %p84
        %p256 = pneg %p81
        %p257 = pneg %p105
        %p258 = pneg %p102
        %p259 = pneg %p126
        %p260 = pneg %p123
        %p261 = pneg %p147
        %p262 = pneg %p144
        %p263 = pneg %p168
        %p264 = pneg %p165
        %p265 = pneg %p194
        %p266 = pneg %p191
        %s267 = sand.u32 %s181, 1
        %s268 = scalar_lea.sflag [#allocation4], %s267
        %s269 = sand.u32 %s181, 1
        %s270 = smul.addr %s269, 16
        %s271 = scalar_lea.vmem [#allocation3], %s270
        %p272 = scmp.lt.s32.totalorder %s21, 1
        %s273 = scalar_select %p272, %s21, 1
        %s274 = smul.addr %s273, 2
        %s275 = smul.addr %s274, 8
        %s276 = scalar_lea.vmem %s0, %s275
        %vm277 = vcmask 31744
        %278 = vst.msk [vmem:[#allocation2] sm:$0xff] %vm277, 0.0
        %279 = vst.msk [vmem:[#allocation2 + $0x8] sm:$0xff] %vm277, 0.0
        %vm280 = vcmask 25600
        %281 = vst.msk [vmem:[#allocation2 + $0x10] sm:$0x3] %vm280, 0.0
        %s282 = scalar_lea.vmem [#allocation2], 408
        %283 = vst.msk [vmem:[%s282] sm:$0xff] %vm277, 0.0
        %284 = vst.msk [vmem:[%s282 + $0x8] sm:$0xff] %vm277, 0.0
        %285 = vst.msk [vmem:[%s282 + $0x10] sm:$0x3] %vm280, 0.0
        %vm286 = vcmask 24576
        %287 = vst.msk [vmem:[#allocation2] sm:$0x1] %vm286, 0.0
        %288 = vst.msk [vmem:[#allocation2 + $0x18] sm:$0x1] %vm286, 0.0
        %289 = vst.msk [vmem:[#allocation2 + $0x30] sm:$0x1] %vm286, 0.0
        %290 = vst.msk [vmem:[#allocation2 + $0x48] sm:$0x1] %vm286, 0.0
        %291 = vst.msk [vmem:[#allocation2 + $0x60] sm:$0x1] %vm286, 0.0
        %292 = vst.msk [vmem:[#allocation2 + $0x78] sm:$0x1] %vm286, 0.0
        %293 = vst.msk [vmem:[#allocation2 + $0x90] sm:$0x1] %vm286, 0.0
        %294 = vst.msk [vmem:[#allocation2 + $0xa8] sm:$0x1] %vm286, 0.0
        %295 = vst.msk [vmem:[#allocation2 + $0xc0] sm:$0x1] %vm286, 0.0
        %296 = vst.msk [vmem:[#allocation2 + $0xd8] sm:$0x1] %vm286, 0.0
        %297 = vst.msk [vmem:[#allocation2 + $0xf0] sm:$0x1] %vm286, 0.0
        %298 = vst.msk [vmem:[#allocation2 + $0x108] sm:$0x1] %vm286, 0.0
        %299 = vst.msk [vmem:[#allocation2 + $0x120] sm:$0x1] %vm286, 0.0
        %300 = vst.msk [vmem:[#allocation2 + $0x138] sm:$0x1] %vm286, 0.0
        %301 = vst.msk [vmem:[#allocation2 + $0x150] sm:$0x1] %vm286, 0.0
        %302 = vst.msk [vmem:[#allocation2 + $0x168] sm:$0x1] %vm286, 0.0
        %303 = vst.msk [vmem:[#allocation2 + $0x180] sm:$0x1] %vm286, 0.0
        %304 = vst.msk [vmem:[#allocation2 + $0x198] sm:$0x1] %vm286, 0.0
        %305 = vst.msk [vmem:[#allocation2 + $0x11] sm:$0x1] %vm286, 0.0
        %306 = vst.msk [vmem:[#allocation2 + $0x29] sm:$0x1] %vm286, 0.0
        %307 = vst.msk [vmem:[#allocation2 + $0x41] sm:$0x1] %vm286, 0.0
        %308 = vst.msk [vmem:[#allocation2 + $0x59] sm:$0x1] %vm286, 0.0
        %309 = vst.msk [vmem:[#allocation2 + $0x71] sm:$0x1] %vm286, 0.0
        %310 = vst.msk [vmem:[#allocation2 + $0x89] sm:$0x1] %vm286, 0.0
        %311 = vst.msk [vmem:[#allocation2 + $0xa1] sm:$0x1] %vm286, 0.0
        %312 = vst.msk [vmem:[#allocation2 + $0xb9] sm:$0x1] %vm286, 0.0
        %313 = vst.msk [vmem:[#allocation2 + $0xd1] sm:$0x1] %vm286, 0.0
        %314 = vst.msk [vmem:[#allocation2 + $0xe9] sm:$0x1] %vm286, 0.0
        %315 = vst.msk [vmem:[#allocation2 + $0x101] sm:$0x1] %vm286, 0.0
        %316 = vst.msk [vmem:[#allocation2 + $0x119] sm:$0x1] %vm286, 0.0
        %317 = vst.msk [vmem:[#allocation2 + $0x131] sm:$0x1] %vm286, 0.0
        %318 = vst.msk [vmem:[#allocation2 + $0x149] sm:$0x1] %vm286, 0.0
        %319 = vst.msk [vmem:[#allocation2 + $0x161] sm:$0x1] %vm286, 0.0
        %320 = vst.msk [vmem:[#allocation2 + $0x179] sm:$0x1] %vm286, 0.0
        %321 = vst.msk [vmem:[#allocation2 + $0x191] sm:$0x1] %vm286, 0.0
        %322 = vst.msk [vmem:[#allocation2 + $0x1a9] sm:$0x1] %vm286, 0.0
        %v323 = vld [vmem:[%s276] sm:$0xff]
        %v324 = vld [vmem:[%s276 + $0x8] sm:$0xff]
        %327 = vrot.lane.b32.xlu0 %v323, 124
        %v328 = vpop.permute.xlu0 %327
        %329 = vrot.lane.b32.xlu0 %v324, 124
        %v330 = vpop.permute.xlu0 %329
        %333 = vrot.lane.b32.xlu0 %v323, 120
        %v334 = vpop.permute.xlu0 %333
        %335 = vrot.lane.b32.xlu0 %v324, 120
        %v336 = vpop.permute.xlu0 %335
        %339 = vrot.lane.b32.xlu0 %v323, 116
        %v340 = vpop.permute.xlu0 %339
        %341 = vrot.lane.b32.xlu0 %v324, 116
        %v342 = vpop.permute.xlu0 %341
        %345 = vrot.lane.b32.xlu0 %v323, 112
        %v346 = vpop.permute.xlu0 %345
        %347 = vrot.lane.b32.xlu0 %v324, 112
        %v348 = vpop.permute.xlu0 %347
        %351 = vrot.lane.b32.xlu0 %v323, 108
        %v352 = vpop.permute.xlu0 %351
        %353 = vrot.lane.b32.xlu0 %v324, 108
        %v354 = vpop.permute.xlu0 %353
        %357 = vrot.lane.b32.xlu0 %v323, 104
        %v358 = vpop.permute.xlu0 %357
        %359 = vrot.lane.b32.xlu0 %v324, 104
        %v360 = vpop.permute.xlu0 %359
        %363 = vrot.lane.b32.xlu0 %v323, 100
        %v364 = vpop.permute.xlu0 %363
        %365 = vrot.lane.b32.xlu0 %v324, 100
        %v366 = vpop.permute.xlu0 %365
        %369 = vrot.lane.b32.xlu0 %v323, 96
        %v370 = vpop.permute.xlu0 %369
        %371 = vrot.lane.b32.xlu0 %v324, 96
        %v372 = vpop.permute.xlu0 %371
        %375 = vrot.lane.b32.xlu0 %v323, 92
        %v376 = vpop.permute.xlu0 %375
        %377 = vrot.lane.b32.xlu0 %v324, 92
        %v378 = vpop.permute.xlu0 %377
        %381 = vrot.lane.b32.xlu0 %v323, 88
        %v382 = vpop.permute.xlu0 %381
        %383 = vrot.lane.b32.xlu0 %v324, 88
        %v384 = vpop.permute.xlu0 %383
        %387 = vrot.lane.b32.xlu0 %v323, 84
        %v388 = vpop.permute.xlu0 %387
        %389 = vrot.lane.b32.xlu0 %v324, 84
        %v390 = vpop.permute.xlu0 %389
        %393 = vrot.lane.b32.xlu0 %v323, 80
        %v394 = vpop.permute.xlu0 %393
        %395 = vrot.lane.b32.xlu0 %v324, 80
        %v396 = vpop.permute.xlu0 %395
        %399 = vrot.lane.b32.xlu0 %v323, 76
        %v400 = vpop.permute.xlu0 %399
        %401 = vrot.lane.b32.xlu0 %v324, 76
        %v402 = vpop.permute.xlu0 %401
        %405 = vrot.lane.b32.xlu0 %v323, 72
        %v406 = vpop.permute.xlu0 %405
        %407 = vrot.lane.b32.xlu0 %v324, 72
        %v408 = vpop.permute.xlu0 %407
        %411 = vrot.lane.b32.xlu0 %v323, 68
        %v412 = vpop.permute.xlu0 %411
        %413 = vrot.lane.b32.xlu0 %v324, 68
        %v414 = vpop.permute.xlu0 %413
        %v417 = vrot.slane %v334, 4
        %vm418 = vcmask 1047556
        %v419 = vsel %vm418, %v417, %v323
        %v420 = vrot.slane %v323, 4
        %v421 = vsel %vm418, %v334, %v420
        %v423 = vunpack.c.l.s4 1983009808
        %v424 = vunpack.c.0.s8 %v423
        %v425 = vperm.slane %v419, %v424
        %v427 = vunpack.c.l.s4 1983009808
        %v428 = vunpack.c.0.s8 %v427
        %v429 = vperm.slane %v421, %v428
        %v430 = vrot.slane %v340, 4
        %v431 = vsel %vm418, %v430, %v328
        %v432 = vrot.slane %v328, 4
        %v433 = vsel %vm418, %v340, %v432
        %v435 = vunpack.c.l.s4 1983009808
        %v436 = vunpack.c.0.s8 %v435
        %v437 = vperm.slane %v431, %v436
        %v439 = vunpack.c.l.s4 1983009808
        %v440 = vunpack.c.0.s8 %v439
        %v441 = vperm.slane %v433, %v440
        %v442 = vrot.slane %v358, 4
        %v443 = vsel %vm418, %v442, %v346
        %v444 = vrot.slane %v346, 4
        %v445 = vsel %vm418, %v358, %v444
        %v447 = vunpack.c.l.s4 1983009808
        %v448 = vunpack.c.0.s8 %v447
        %v449 = vperm.slane %v443, %v448
        %v451 = vunpack.c.l.s4 1983009808
        %v452 = vunpack.c.0.s8 %v451
        %v453 = vperm.slane %v445, %v452
        %v454 = vrot.slane %v364, 4
        %v455 = vsel %vm418, %v454, %v352
        %v456 = vrot.slane %v352, 4
        %v457 = vsel %vm418, %v364, %v456
        %v459 = vunpack.c.l.s4 1983009808
        %v460 = vunpack.c.0.s8 %v459
        %v461 = vperm.slane %v455, %v460
        %v463 = vunpack.c.l.s4 1983009808
        %v464 = vunpack.c.0.s8 %v463
        %v465 = vperm.slane %v457, %v464
        %v466 = vrot.slane %v437, 4
        %v467 = vsel %vm418, %v466, %v425
        %v468 = vrot.slane %v425, 4
        %v469 = vsel %vm418, %v437, %v468
        %v471 = vunpack.c.l.s4 1934713408
        %v472 = vunpack.c.0.s8 %v471
        %v473 = vperm.slane %v467, %v472
        %v475 = vunpack.c.l.s4 1934713408
        %v476 = vunpack.c.0.s8 %v475
        %v477 = vperm.slane %v469, %v476
        %v478 = vrot.slane %v441, 4
        %v479 = vsel %vm418, %v478, %v429
        %v480 = vrot.slane %v429, 4
        %v481 = vsel %vm418, %v441, %v480
        %v483 = vunpack.c.l.s4 1934713408
        %v484 = vunpack.c.0.s8 %v483
        %v485 = vperm.slane %v479, %v484
        %v487 = vunpack.c.l.s4 1934713408
        %v488 = vunpack.c.0.s8 %v487
        %v489 = vperm.slane %v481, %v488
        %v490 = vrot.slane %v461, 4
        %v491 = vsel %vm418, %v490, %v449
        %v492 = vrot.slane %v449, 4
        %v493 = vsel %vm418, %v461, %v492
        %v495 = vunpack.c.l.s4 1934713408
        %v496 = vunpack.c.0.s8 %v495
        %v497 = vperm.slane %v491, %v496
        %v499 = vunpack.c.l.s4 1934713408
        %v500 = vunpack.c.0.s8 %v499
        %v501 = vperm.slane %v493, %v500
        %v502 = vrot.slane %v465, 4
        %v503 = vsel %vm418, %v502, %v453
        %v504 = vrot.slane %v453, 4
        %v505 = vsel %vm418, %v465, %v504
        %v507 = vunpack.c.l.s4 1934713408
        %v508 = vunpack.c.0.s8 %v507
        %v509 = vperm.slane %v503, %v508
        %v511 = vunpack.c.l.s4 1934713408
        %v512 = vunpack.c.0.s8 %v511
        %v513 = vperm.slane %v505, %v512
        %v514 = vrot.slane %v497, 4
        %v515 = vsel %vm418, %v514, %v473
        %v516 = vrot.slane %v473, 4
        %v517 = vsel %vm418, %v497, %v516
        %v518 = vrot.slane %v501, 4
        %v519 = vsel %vm418, %v518, %v477
        %v520 = vrot.slane %v477, 4
        %v521 = vsel %vm418, %v501, %v520
        %v522 = vrot.slane %v509, 4
        %v523 = vsel %vm418, %v522, %v485
        %v524 = vrot.slane %v485, 4
        %v525 = vsel %vm418, %v509, %v524
        %v526 = vrot.slane %v513, 4
        %v527 = vsel %vm418, %v526, %v489
        %v528 = vrot.slane %v489, 4
        %v529 = vsel %vm418, %v513, %v528
        %v530 = vrot.slane %v382, 4
        %v531 = vsel %vm418, %v530, %v370
        %v532 = vrot.slane %v370, 4
        %v533 = vsel %vm418, %v382, %v532
        %v535 = vunpack.c.l.s4 1983009808
        %v536 = vunpack.c.0.s8 %v535
        %v537 = vperm.slane %v531, %v536
        %v539 = vunpack.c.l.s4 1983009808
        %v540 = vunpack.c.0.s8 %v539
        %v541 = vperm.slane %v533, %v540
        %v542 = vrot.slane %v388, 4
        %v543 = vsel %vm418, %v542, %v376
        %v544 = vrot.slane %v376, 4
        %v545 = vsel %vm418, %v388, %v544
        %v547 = vunpack.c.l.s4 1983009808
        %v548 = vunpack.c.0.s8 %v547
        %v549 = vperm.slane %v543, %v548
        %v551 = vunpack.c.l.s4 1983009808
        %v552 = vunpack.c.0.s8 %v551
        %v553 = vperm.slane %v545, %v552
        %v554 = vrot.slane %v406, 4
        %v555 = vsel %vm418, %v554, %v394
        %v556 = vrot.slane %v394, 4
        %v557 = vsel %vm418, %v406, %v556
        %v559 = vunpack.c.l.s4 1983009808
        %v560 = vunpack.c.0.s8 %v559
        %v561 = vperm.slane %v555, %v560
        %v563 = vunpack.c.l.s4 1983009808
        %v564 = vunpack.c.0.s8 %v563
        %v565 = vperm.slane %v557, %v564
        %v566 = vrot.slane %v412, 4
        %v567 = vsel %vm418, %v566, %v400
        %v568 = vrot.slane %v400, 4
        %v569 = vsel %vm418, %v412, %v568
        %v571 = vunpack.c.l.s4 1983009808
        %v572 = vunpack.c.0.s8 %v571
        %v573 = vperm.slane %v567, %v572
        %v575 = vunpack.c.l.s4 1983009808
        %v576 = vunpack.c.0.s8 %v575
        %v577 = vperm.slane %v569, %v576
        %v578 = vrot.slane %v549, 4
        %v579 = vsel %vm418, %v578, %v537
        %v580 = vrot.slane %v537, 4
        %v581 = vsel %vm418, %v549, %v580
        %v583 = vunpack.c.l.s4 1934713408
        %v584 = vunpack.c.0.s8 %v583
        %v585 = vperm.slane %v579, %v584
        %v587 = vunpack.c.l.s4 1934713408
        %v588 = vunpack.c.0.s8 %v587
        %v589 = vperm.slane %v581, %v588
        %v590 = vrot.slane %v553, 4
        %v591 = vsel %vm418, %v590, %v541
        %v592 = vrot.slane %v541, 4
        %v593 = vsel %vm418, %v553, %v592
        %v595 = vunpack.c.l.s4 1934713408
        %v596 = vunpack.c.0.s8 %v595
        %v597 = vperm.slane %v591, %v596
        %v599 = vunpack.c.l.s4 1934713408
        %v600 = vunpack.c.0.s8 %v599
        %v601 = vperm.slane %v593, %v600
        %v602 = vrot.slane %v573, 4
        %v603 = vsel %vm418, %v602, %v561
        %v604 = vrot.slane %v561, 4
        %v605 = vsel %vm418, %v573, %v604
        %v607 = vunpack.c.l.s4 1934713408
        %v608 = vunpack.c.0.s8 %v607
        %v609 = vperm.slane %v603, %v608
        %v611 = vunpack.c.l.s4 1934713408
        %v612 = vunpack.c.0.s8 %v611
        %v613 = vperm.slane %v605, %v612
        %v614 = vrot.slane %v577, 4
        %v615 = vsel %vm418, %v614, %v565
        %v616 = vrot.slane %v565, 4
        %v617 = vsel %vm418, %v577, %v616
        %v619 = vunpack.c.l.s4 1934713408
        %v620 = vunpack.c.0.s8 %v619
        %v621 = vperm.slane %v615, %v620
        %v623 = vunpack.c.l.s4 1934713408
        %v624 = vunpack.c.0.s8 %v623
        %v625 = vperm.slane %v617, %v624
        %v626 = vrot.slane %v609, 4
        %v627 = vsel %vm418, %v626, %v585
        %v628 = vrot.slane %v585, 4
        %v629 = vsel %vm418, %v609, %v628
        %v630 = vrot.slane %v613, 4
        %v631 = vsel %vm418, %v630, %v589
        %v632 = vrot.slane %v589, 4
        %v633 = vsel %vm418, %v613, %v632
        %v634 = vrot.slane %v621, 4
        %v635 = vsel %vm418, %v634, %v597
        %v636 = vrot.slane %v597, 4
        %v637 = vsel %vm418, %v621, %v636
        %v638 = vrot.slane %v625, 4
        %v639 = vsel %vm418, %v638, %v601
        %v640 = vrot.slane %v601, 4
        %v641 = vsel %vm418, %v625, %v640
        %v642 = vrot.slane %v336, 4
        %v643 = vsel %vm418, %v642, %v324
        %v644 = vrot.slane %v324, 4
        %v645 = vsel %vm418, %v336, %v644
        %v647 = vunpack.c.l.s4 1983009808
        %v648 = vunpack.c.0.s8 %v647
        %v649 = vperm.slane %v643, %v648
        %v651 = vunpack.c.l.s4 1983009808
        %v652 = vunpack.c.0.s8 %v651
        %v653 = vperm.slane %v645, %v652
        %v654 = vrot.slane %v342, 4
        %v655 = vsel %vm418, %v654, %v330
        %v656 = vrot.slane %v330, 4
        %v657 = vsel %vm418, %v342, %v656
        %v659 = vunpack.c.l.s4 1983009808
        %v660 = vunpack.c.0.s8 %v659
        %v661 = vperm.slane %v655, %v660
        %v663 = vunpack.c.l.s4 1983009808
        %v664 = vunpack.c.0.s8 %v663
        %v665 = vperm.slane %v657, %v664
        %v666 = vrot.slane %v360, 4
        %v667 = vsel %vm418, %v666, %v348
        %v668 = vrot.slane %v348, 4
        %v669 = vsel %vm418, %v360, %v668
        %v671 = vunpack.c.l.s4 1983009808
        %v672 = vunpack.c.0.s8 %v671
        %v673 = vperm.slane %v667, %v672
        %v675 = vunpack.c.l.s4 1983009808
        %v676 = vunpack.c.0.s8 %v675
        %v677 = vperm.slane %v669, %v676
        %v678 = vrot.slane %v366, 4
        %v679 = vsel %vm418, %v678, %v354
        %v680 = vrot.slane %v354, 4
        %v681 = vsel %vm418, %v366, %v680
        %v683 = vunpack.c.l.s4 1983009808
        %v684 = vunpack.c.0.s8 %v683
        %v685 = vperm.slane %v679, %v684
        %v687 = vunpack.c.l.s4 1983009808
        %v688 = vunpack.c.0.s8 %v687
        %v689 = vperm.slane %v681, %v688
        %v690 = vrot.slane %v661, 4
        %v691 = vsel %vm418, %v690, %v649
        %v692 = vrot.slane %v649, 4
        %v693 = vsel %vm418, %v661, %v692
        %v695 = vunpack.c.l.s4 1934713408
        %v696 = vunpack.c.0.s8 %v695
        %v697 = vperm.slane %v691, %v696
        %v699 = vunpack.c.l.s4 1934713408
        %v700 = vunpack.c.0.s8 %v699
        %v701 = vperm.slane %v693, %v700
        %v702 = vrot.slane %v665, 4
        %v703 = vsel %vm418, %v702, %v653
        %v704 = vrot.slane %v653, 4
        %v705 = vsel %vm418, %v665, %v704
        %v707 = vunpack.c.l.s4 1934713408
        %v708 = vunpack.c.0.s8 %v707
        %v709 = vperm.slane %v703, %v708
        %v711 = vunpack.c.l.s4 1934713408
        %v712 = vunpack.c.0.s8 %v711
        %v713 = vperm.slane %v705, %v712
        %v714 = vrot.slane %v685, 4
        %v715 = vsel %vm418, %v714, %v673
        %v716 = vrot.slane %v673, 4
        %v717 = vsel %vm418, %v685, %v716
        %v719 = vunpack.c.l.s4 1934713408
        %v720 = vunpack.c.0.s8 %v719
        %v721 = vperm.slane %v715, %v720
        %v723 = vunpack.c.l.s4 1934713408
        %v724 = vunpack.c.0.s8 %v723
        %v725 = vperm.slane %v717, %v724
        %v726 = vrot.slane %v689, 4
        %v727 = vsel %vm418, %v726, %v677
        %v728 = vrot.slane %v677, 4
        %v729 = vsel %vm418, %v689, %v728
        %v731 = vunpack.c.l.s4 1934713408
        %v732 = vunpack.c.0.s8 %v731
        %v733 = vperm.slane %v727, %v732
        %v735 = vunpack.c.l.s4 1934713408
        %v736 = vunpack.c.0.s8 %v735
        %v737 = vperm.slane %v729, %v736
        %v738 = vrot.slane %v721, 4
        %v739 = vsel %vm418, %v738, %v697
        %v740 = vrot.slane %v697, 4
        %v741 = vsel %vm418, %v721, %v740
        %v742 = vrot.slane %v725, 4
        %v743 = vsel %vm418, %v742, %v701
        %v744 = vrot.slane %v701, 4
        %v745 = vsel %vm418, %v725, %v744
        %v746 = vrot.slane %v733, 4
        %v747 = vsel %vm418, %v746, %v709
        %v748 = vrot.slane %v709, 4
        %v749 = vsel %vm418, %v733, %v748
        %v750 = vrot.slane %v737, 4
        %v751 = vsel %vm418, %v750, %v713
        %v752 = vrot.slane %v713, 4
        %v753 = vsel %vm418, %v737, %v752
        %v754 = vrot.slane %v384, 4
        %v755 = vsel %vm418, %v754, %v372
        %v756 = vrot.slane %v372, 4
        %v757 = vsel %vm418, %v384, %v756
        %v759 = vunpack.c.l.s4 1983009808
        %v760 = vunpack.c.0.s8 %v759
        %v761 = vperm.slane %v755, %v760
        %v763 = vunpack.c.l.s4 1983009808
        %v764 = vunpack.c.0.s8 %v763
        %v765 = vperm.slane %v757, %v764
        %v766 = vrot.slane %v390, 4
        %v767 = vsel %vm418, %v766, %v378
        %v768 = vrot.slane %v378, 4
        %v769 = vsel %vm418, %v390, %v768
        %v771 = vunpack.c.l.s4 1983009808
        %v772 = vunpack.c.0.s8 %v771
        %v773 = vperm.slane %v767, %v772
        %v775 = vunpack.c.l.s4 1983009808
        %v776 = vunpack.c.0.s8 %v775
        %v777 = vperm.slane %v769, %v776
        %v778 = vrot.slane %v408, 4
        %v779 = vsel %vm418, %v778, %v396
        %v780 = vrot.slane %v396, 4
        %v781 = vsel %vm418, %v408, %v780
        %v783 = vunpack.c.l.s4 1983009808
        %v784 = vunpack.c.0.s8 %v783
        %v785 = vperm.slane %v779, %v784
        %v787 = vunpack.c.l.s4 1983009808
        %v788 = vunpack.c.0.s8 %v787
        %v789 = vperm.slane %v781, %v788
        %v790 = vrot.slane %v414, 4
        %v791 = vsel %vm418, %v790, %v402
        %v792 = vrot.slane %v402, 4
        %v793 = vsel %vm418, %v414, %v792
        %v795 = vunpack.c.l.s4 1983009808
        %v796 = vunpack.c.0.s8 %v795
        %v797 = vperm.slane %v791, %v796
        %v799 = vunpack.c.l.s4 1983009808
        %v800 = vunpack.c.0.s8 %v799
        %v801 = vperm.slane %v793, %v800
        %v802 = vrot.slane %v773, 4
        %v803 = vsel %vm418, %v802, %v761
        %v804 = vrot.slane %v761, 4
        %v805 = vsel %vm418, %v773, %v804
        %v807 = vunpack.c.l.s4 1934713408
        %v808 = vunpack.c.0.s8 %v807
        %v809 = vperm.slane %v803, %v808
        %v811 = vunpack.c.l.s4 1934713408
        %v812 = vunpack.c.0.s8 %v811
        %v813 = vperm.slane %v805, %v812
        %v814 = vrot.slane %v777, 4
        %v815 = vsel %vm418, %v814, %v765
        %v816 = vrot.slane %v765, 4
        %v817 = vsel %vm418, %v777, %v816
        %v819 = vunpack.c.l.s4 1934713408
        %v820 = vunpack.c.0.s8 %v819
        %v821 = vperm.slane %v815, %v820
        %v823 = vunpack.c.l.s4 1934713408
        %v824 = vunpack.c.0.s8 %v823
        %v825 = vperm.slane %v817, %v824
        %v826 = vrot.slane %v797, 4
        %v827 = vsel %vm418, %v826, %v785
        %v828 = vrot.slane %v785, 4
        %v829 = vsel %vm418, %v797, %v828
        %v831 = vunpack.c.l.s4 1934713408
        %v832 = vunpack.c.0.s8 %v831
        %v833 = vperm.slane %v827, %v832
        %v835 = vunpack.c.l.s4 1934713408
        %v836 = vunpack.c.0.s8 %v835
        %v837 = vperm.slane %v829, %v836
        %v838 = vrot.slane %v801, 4
        %v839 = vsel %vm418, %v838, %v789
        %v840 = vrot.slane %v789, 4
        %v841 = vsel %vm418, %v801, %v840
        %v843 = vunpack.c.l.s4 1934713408
        %v844 = vunpack.c.0.s8 %v843
        %v845 = vperm.slane %v839, %v844
        %v847 = vunpack.c.l.s4 1934713408
        %v848 = vunpack.c.0.s8 %v847
        %v849 = vperm.slane %v841, %v848
        %v850 = vrot.slane %v833, 4
        %v851 = vsel %vm418, %v850, %v809
        %v852 = vrot.slane %v809, 4
        %v853 = vsel %vm418, %v833, %v852
        %v854 = vrot.slane %v837, 4
        %v855 = vsel %vm418, %v854, %v813
        %v856 = vrot.slane %v813, 4
        %v857 = vsel %vm418, %v837, %v856
        %v858 = vrot.slane %v845, 4
        %v859 = vsel %vm418, %v858, %v821
        %v860 = vrot.slane %v821, 4
        %v861 = vsel %vm418, %v845, %v860
        %v862 = vrot.slane %v849, 4
        %v863 = vsel %vm418, %v862, %v825
        %v864 = vrot.slane %v825, 4
        %v865 = vsel %vm418, %v849, %v864
        %v866 = vld [vmem:[%s1] sm:$0x1]
        %v868 = vperm.slane %v866, 0
        %v870 = vmul.f32 %v515, %v868
        %v871 = vmul.f32 %v627, %v868
        %v872 = vmul.f32 %v517, %v868
        %v873 = vmul.f32 %v629, %v868
        %v874 = vmul.f32 %v519, %v868
        %v875 = vmul.f32 %v631, %v868
        %v876 = vmul.f32 %v521, %v868
        %v877 = vmul.f32 %v633, %v868
        %v878 = vmul.f32 %v523, %v868
        %v879 = vmul.f32 %v635, %v868
        %v880 = vmul.f32 %v525, %v868
        %v881 = vmul.f32 %v637, %v868
        %v882 = vmul.f32 %v527, %v868
        %v883 = vmul.f32 %v639, %v868
        %v884 = vmul.f32 %v529, %v868
        %v885 = vmul.f32 %v641, %v868
        %v886 = vmul.f32 %v739, %v868
        %v887 = vmul.f32 %v851, %v868
        %v888 = vmul.f32 %v741, %v868
        %v889 = vmul.f32 %v853, %v868
        %v890 = vmul.f32 %v743, %v868
        %v891 = vmul.f32 %v855, %v868
        %v892 = vmul.f32 %v745, %v868
        %v893 = vmul.f32 %v857, %v868
        %v894 = vmul.f32 %v747, %v868
        %v895 = vmul.f32 %v859, %v868
        %v896 = vmul.f32 %v749, %v868
        %v897 = vmul.f32 %v861, %v868
        %v898 = vmul.f32 %v751, %v868
        %v899 = vmul.f32 %v863, %v868
        %v900 = vmul.f32 %v753, %v868
        %v901 = vmul.f32 %v865, %v868
        %v902 = vld [vmem:[%s2] sm:$0x1]
        %v904 = vperm.slane %v902, 0
        %v906 = vadd.f32 %v870, %v904
        %v907 = vadd.f32 %v871, %v904
        %v908 = vadd.f32 %v872, %v904
        %v909 = vadd.f32 %v873, %v904
        %v910 = vadd.f32 %v874, %v904
        %v911 = vadd.f32 %v875, %v904
        %v912 = vadd.f32 %v876, %v904
        %v913 = vadd.f32 %v877, %v904
        %v914 = vadd.f32 %v878, %v904
        %v915 = vadd.f32 %v879, %v904
        %v916 = vadd.f32 %v880, %v904
        %v917 = vadd.f32 %v881, %v904
        %v918 = vadd.f32 %v882, %v904
        %v919 = vadd.f32 %v883, %v904
        %v920 = vadd.f32 %v884, %v904
        %v921 = vadd.f32 %v885, %v904
        %v922 = vadd.f32 %v886, %v904
        %v923 = vadd.f32 %v887, %v904
        %v924 = vadd.f32 %v888, %v904
        %v925 = vadd.f32 %v889, %v904
        %v926 = vadd.f32 %v890, %v904
        %v927 = vadd.f32 %v891, %v904
        %v928 = vadd.f32 %v892, %v904
        %v929 = vadd.f32 %v893, %v904
        %v930 = vadd.f32 %v894, %v904
        %v931 = vadd.f32 %v895, %v904
        %v932 = vadd.f32 %v896, %v904
        %v933 = vadd.f32 %v897, %v904
        %v934 = vadd.f32 %v898, %v904
        %v935 = vadd.f32 %v899, %v904
        %v936 = vadd.f32 %v900, %v904
        %v937 = vadd.f32 %v901, %v904
        %v938 = vmax.f32 %v906, 0.0
        %v939 = vmax.f32 %v907, 0.0
        %v940 = vmax.f32 %v908, 0.0
        %v941 = vmax.f32 %v909, 0.0
        %v942 = vmax.f32 %v910, 0.0
        %v943 = vmax.f32 %v911, 0.0
        %v944 = vmax.f32 %v912, 0.0
        %v945 = vmax.f32 %v913, 0.0
        %v946 = vmax.f32 %v914, 0.0
        %v947 = vmax.f32 %v915, 0.0
        %v948 = vmax.f32 %v916, 0.0
        %v949 = vmax.f32 %v917, 0.0
        %v950 = vmax.f32 %v918, 0.0
        %v951 = vmax.f32 %v919, 0.0
        %v952 = vmax.f32 %v920, 0.0
        %v953 = vmax.f32 %v921, 0.0
        %v954 = vmax.f32 %v922, 0.0
        %v955 = vmax.f32 %v923, 0.0
        %v956 = vmax.f32 %v924, 0.0
        %v957 = vmax.f32 %v925, 0.0
        %v958 = vmax.f32 %v926, 0.0
        %v959 = vmax.f32 %v927, 0.0
        %v960 = vmax.f32 %v928, 0.0
        %v961 = vmax.f32 %v929, 0.0
        %v962 = vmax.f32 %v930, 0.0
        %v963 = vmax.f32 %v931, 0.0
        %v964 = vmax.f32 %v932, 0.0
        %v965 = vmax.f32 %v933, 0.0
        %v966 = vmax.f32 %v934, 0.0
        %v967 = vmax.f32 %v935, 0.0
        %v968 = vmax.f32 %v936, 0.0
        %v969 = vmax.f32 %v937, 0.0
        %s970 = scalar_lea.vmem [#allocation2], 24
        %971 = vst.msk [vmem:[%s970 + $0x1] sm:$0xff] %vm277, %v938
        %972 = vst.msk [vmem:[%s970 + $0x9] sm:$0xff] %vm277, %v939
        %973 = vst.msk [vmem:[%s970 + $0x19] sm:$0xff] %vm277, %v940
        %974 = vst.msk [vmem:[%s970 + $0x21] sm:$0xff] %vm277, %v941
        %975 = vst.msk [vmem:[%s970 + $0x31] sm:$0xff] %vm277, %v942
        %976 = vst.msk [vmem:[%s970 + $0x39] sm:$0xff] %vm277, %v943
        %977 = vst.msk [vmem:[%s970 + $0x49] sm:$0xff] %vm277, %v944
        %978 = vst.msk [vmem:[%s970 + $0x51] sm:$0xff] %vm277, %v945
        %979 = vst.msk [vmem:[%s970 + $0x61] sm:$0xff] %vm277, %v946
        %980 = vst.msk [vmem:[%s970 + $0x69] sm:$0xff] %vm277, %v947
        %981 = vst.msk [vmem:[%s970 + $0x79] sm:$0xff] %vm277, %v948
        %982 = vst.msk [vmem:[%s970 + $0x81] sm:$0xff] %vm277, %v949
        %983 = vst.msk [vmem:[%s970 + $0x91] sm:$0xff] %vm277, %v950
        %984 = vst.msk [vmem:[%s970 + $0x99] sm:$0xff] %vm277, %v951
        %985 = vst.msk [vmem:[%s970 + $0xa9] sm:$0xff] %vm277, %v952
        %986 = vst.msk [vmem:[%s970 + $0xb1] sm:$0xff] %vm277, %v953
        %987 = vst.msk [vmem:[%s970 + $0xc1] sm:$0xff] %vm277, %v954
        %988 = vst.msk [vmem:[%s970 + $0xc9] sm:$0xff] %vm277, %v955
        %989 = vst.msk [vmem:[%s970 + $0xd9] sm:$0xff] %vm277, %v956
        %990 = vst.msk [vmem:[%s970 + $0xe1] sm:$0xff] %vm277, %v957
        %991 = vst.msk [vmem:[%s970 + $0xf1] sm:$0xff] %vm277, %v958
        %992 = vst.msk [vmem:[%s970 + $0xf9] sm:$0xff] %vm277, %v959
        %993 = vst.msk [vmem:[%s970 + $0x109] sm:$0xff] %vm277, %v960
        %994 = vst.msk [vmem:[%s970 + $0x111] sm:$0xff] %vm277, %v961
        %995 = vst.msk [vmem:[%s970 + $0x121] sm:$0xff] %vm277, %v962
        %996 = vst.msk [vmem:[%s970 + $0x129] sm:$0xff] %vm277, %v963
        %997 = vst.msk [vmem:[%s970 + $0x139] sm:$0xff] %vm277, %v964
        %998 = vst.msk [vmem:[%s970 + $0x141] sm:$0xff] %vm277, %v965
        %999 = vst.msk [vmem:[%s970 + $0x151] sm:$0xff] %vm277, %v966
        %1000 = vst.msk [vmem:[%s970 + $0x159] sm:$0xff] %vm277, %v967
        %1001 = vst.msk [vmem:[%s970 + $0x169] sm:$0xff] %vm277, %v968
        %1002 = vst.msk [vmem:[%s970 + $0x171] sm:$0xff] %vm277, %v969
        %v1003 = vld [vmem:[#allocation2] sm:$0xff]
        %v1004 = vld [vmem:[#allocation2 + $0x8] sm:$0xff]
        %v1005 = vld [vmem:[#allocation2 + $0x10] sm:$0x3]
        %v1006 = vld [vmem:[#allocation2 + $0x18] sm:$0xff]
        %v1007 = vld [vmem:[#allocation2 + $0x20] sm:$0xff]
        %v1008 = vld [vmem:[#allocation2 + $0x28] sm:$0x3]
        %v1009 = vld [vmem:[#allocation2 + $0x30] sm:$0xff]
        %v1010 = vld [vmem:[#allocation2 + $0x38] sm:$0xff]
        %v1011 = vld [vmem:[#allocation2 + $0x40] sm:$0x3]
        %v1012 = vld [vmem:[#allocation2 + $0x48] sm:$0xff]
        %v1013 = vld [vmem:[#allocation2 + $0x50] sm:$0xff]
        %v1014 = vld [vmem:[#allocation2 + $0x58] sm:$0x3]
        %v1015 = vld [vmem:[#allocation2 + $0x60] sm:$0xff]
        %v1016 = vld [vmem:[#allocation2 + $0x68] sm:$0xff]
        %v1017 = vld [vmem:[#allocation2 + $0x70] sm:$0x3]
        %v1018 = vld [vmem:[#allocation2 + $0x78] sm:$0xff]
        %v1019 = vld [vmem:[#allocation2 + $0x80] sm:$0xff]
        %v1020 = vld [vmem:[#allocation2 + $0x88] sm:$0x3]
        %v1021 = vld [vmem:[#allocation2 + $0x90] sm:$0xff]
        %v1022 = vld [vmem:[#allocation2 + $0x98] sm:$0xff]
        %v1023 = vld [vmem:[#allocation2 + $0xa0] sm:$0x3]
        %v1024 = vld [vmem:[#allocation2 + $0xa8] sm:$0xff]
        %v1025 = vld [vmem:[#allocation2 + $0xb0] sm:$0xff]
        %v1026 = vld [vmem:[#allocation2 + $0xb8] sm:$0x3]
        %v1027 = vld [vmem:[#allocation2 + $0xc0] sm:$0xff]
        %v1028 = vld [vmem:[#allocation2 + $0xc8] sm:$0xff]
        %v1029 = vld [vmem:[#allocation2 + $0xd0] sm:$0x3]
        %v1030 = vld [vmem:[#allocation2 + $0xd8] sm:$0xff]
        %v1031 = vld [vmem:[#allocation2 + $0xe0] sm:$0xff]
        %v1032 = vld [vmem:[#allocation2 + $0xe8] sm:$0x3]
        %v1033 = vld [vmem:[#allocation2 + $0xf0] sm:$0xff]
        %v1034 = vld [vmem:[#allocation2 + $0xf8] sm:$0xff]
        %v1035 = vld [vmem:[#allocation2 + $0x100] sm:$0x3]
        %v1036 = vld [vmem:[#allocation2 + $0x108] sm:$0xff]
        %v1037 = vld [vmem:[#allocation2 + $0x110] sm:$0xff]
        %v1038 = vld [vmem:[#allocation2 + $0x118] sm:$0x3]
        %v1039 = vld [vmem:[#allocation2 + $0x120] sm:$0xff]
        %v1040 = vld [vmem:[#allocation2 + $0x128] sm:$0xff]
        %v1041 = vld [vmem:[#allocation2 + $0x130] sm:$0x3]
        %v1042 = vld [vmem:[#allocation2 + $0x138] sm:$0xff]
        %v1043 = vld [vmem:[#allocation2 + $0x140] sm:$0xff]
        %v1044 = vld [vmem:[#allocation2 + $0x148] sm:$0x3]
        %v1045 = vld [vmem:[#allocation2 + $0x150] sm:$0xff]
        %v1046 = vld [vmem:[#allocation2 + $0x158] sm:$0xff]
        %v1047 = vld [vmem:[#allocation2 + $0x160] sm:$0x3]
        %v1048 = vld [vmem:[#allocation2 + $0x168] sm:$0xff]
        %v1049 = vld [vmem:[#allocation2 + $0x170] sm:$0xff]
        %v1050 = vld [vmem:[#allocation2 + $0x178] sm:$0x3]
        %v1051 = vld [vmem:[#allocation2 + $0x180] sm:$0xff]
        %v1052 = vld [vmem:[#allocation2 + $0x188] sm:$0xff]
        %v1053 = vld [vmem:[#allocation2 + $0x190] sm:$0x3]
        %v1054 = vld [vmem:[#allocation2 + $0x198] sm:$0xff]
        %v1055 = vld [vmem:[#allocation2 + $0x1a0] sm:$0xff]
        %v1056 = vld [vmem:[#allocation2 + $0x1a8] sm:$0x3]
        %vm1105 = vcmask 1046528
        %v1106 = vrot.slane %v1003, 1
        %v1107 = vrot.slane %v1004, 1
        %v1108 = vsel %vm1105, %v1106, %v1107
        %v1109 = vrot.slane %v1005, 1
        %v1110 = vsel %vm1105, %v1107, %v1109
        %v1111 = vrot.slane %v1006, 1
        %v1112 = vrot.slane %v1007, 1
        %v1113 = vsel %vm1105, %v1111, %v1112
        %v1114 = vrot.slane %v1008, 1
        %v1115 = vsel %vm1105, %v1112, %v1114
        %v1116 = vrot.slane %v1009, 1
        %v1117 = vrot.slane %v1010, 1
        %v1118 = vsel %vm1105, %v1116, %v1117
        %v1119 = vrot.slane %v1011, 1
        %v1120 = vsel %vm1105, %v1117, %v1119
        %v1121 = vrot.slane %v1012, 1
        %v1122 = vrot.slane %v1013, 1
        %v1123 = vsel %vm1105, %v1121, %v1122
        %v1124 = vrot.slane %v1014, 1
        %v1125 = vsel %vm1105, %v1122, %v1124
        %v1126 = vrot.slane %v1015, 1
        %v1127 = vrot.slane %v1016, 1
        %v1128 = vsel %vm1105, %v1126, %v1127
        %v1129 = vrot.slane %v1017, 1
        %v1130 = vsel %vm1105, %v1127, %v1129
        %v1131 = vrot.slane %v1018, 1
        %v1132 = vrot.slane %v1019, 1
        %v1133 = vsel %vm1105, %v1131, %v1132
        %v1134 = vrot.slane %v1020, 1
        %v1135 = vsel %vm1105, %v1132, %v1134
        %v1136 = vrot.slane %v1021, 1
        %v1137 = vrot.slane %v1022, 1
        %v1138 = vsel %vm1105, %v1136, %v1137
        %v1139 = vrot.slane %v1023, 1
        %v1140 = vsel %vm1105, %v1137, %v1139
        %v1141 = vrot.slane %v1024, 1
        %v1142 = vrot.slane %v1025, 1
        %v1143 = vsel %vm1105, %v1141, %v1142
        %v1144 = vrot.slane %v1026, 1
        %v1145 = vsel %vm1105, %v1142, %v1144
        %v1146 = vrot.slane %v1027, 1
        %v1147 = vrot.slane %v1028, 1
        %v1148 = vsel %vm1105, %v1146, %v1147
        %v1149 = vrot.slane %v1029, 1
        %v1150 = vsel %vm1105, %v1147, %v1149
        %v1151 = vrot.slane %v1030, 1
        %v1152 = vrot.slane %v1031, 1
        %v1153 = vsel %vm1105, %v1151, %v1152
        %v1154 = vrot.slane %v1032, 1
        %v1155 = vsel %vm1105, %v1152, %v1154
        %v1156 = vrot.slane %v1033, 1
        %v1157 = vrot.slane %v1034, 1
        %v1158 = vsel %vm1105, %v1156, %v1157
        %v1159 = vrot.slane %v1035, 1
        %v1160 = vsel %vm1105, %v1157, %v1159
        %v1161 = vrot.slane %v1036, 1
        %v1162 = vrot.slane %v1037, 1
        %v1163 = vsel %vm1105, %v1161, %v1162
        %v1164 = vrot.slane %v1038, 1
        %v1165 = vsel %vm1105, %v1162, %v1164
        %v1166 = vrot.slane %v1039, 1
        %v1167 = vrot.slane %v1040, 1
        %v1168 = vsel %vm1105, %v1166, %v1167
        %v1169 = vrot.slane %v1041, 1
        %v1170 = vsel %vm1105, %v1167, %v1169
        %v1171 = vrot.slane %v1042, 1
        %v1172 = vrot.slane %v1043, 1
        %v1173 = vsel %vm1105, %v1171, %v1172
        %v1174 = vrot.slane %v1044, 1
        %v1175 = vsel %vm1105, %v1172, %v1174
        %v1176 = vrot.slane %v1045, 1
        %v1177 = vrot.slane %v1046, 1
        %v1178 = vsel %vm1105, %v1176, %v1177
        %v1179 = vrot.slane %v1047, 1
        %v1180 = vsel %vm1105, %v1177, %v1179
        %v1181 = vrot.slane %v1048, 1
        %v1182 = vrot.slane %v1049, 1
        %v1183 = vsel %vm1105, %v1181, %v1182
        %v1184 = vrot.slane %v1050, 1
        %v1185 = vsel %vm1105, %v1182, %v1184
        %1186 = vrot.lane.b32.xlu0 %v1108, 4
        %v1187 = vpop.permute.xlu0 %1186
        %1188 = vrot.lane.b32.xlu0 %v1110, 4
        %v1189 = vpop.permute.xlu0 %1188
        %1190 = vrot.lane.b32.xlu0 %v1113, 4
        %v1191 = vpop.permute.xlu0 %1190
        %1192 = vrot.lane.b32.xlu0 %v1115, 4
        %v1193 = vpop.permute.xlu0 %1192
        %1194 = vrot.lane.b32.xlu0 %v1118, 4
        %v1195 = vpop.permute.xlu0 %1194
        %1196 = vrot.lane.b32.xlu0 %v1120, 4
        %v1197 = vpop.permute.xlu0 %1196
        %1198 = vrot.lane.b32.xlu0 %v1123, 4
        %v1199 = vpop.permute.xlu0 %1198
        %1200 = vrot.lane.b32.xlu0 %v1125, 4
        %v1201 = vpop.permute.xlu0 %1200
        %1202 = vrot.lane.b32.xlu0 %v1128, 4
        %v1203 = vpop.permute.xlu0 %1202
        %1204 = vrot.lane.b32.xlu0 %v1130, 4
        %v1205 = vpop.permute.xlu0 %1204
        %1206 = vrot.lane.b32.xlu0 %v1133, 4
        %v1207 = vpop.permute.xlu0 %1206
        %1208 = vrot.lane.b32.xlu0 %v1135, 4
        %v1209 = vpop.permute.xlu0 %1208
        %1210 = vrot.lane.b32.xlu0 %v1138, 4
        %v1211 = vpop.permute.xlu0 %1210
        %1212 = vrot.lane.b32.xlu0 %v1140, 4
        %v1213 = vpop.permute.xlu0 %1212
        %1214 = vrot.lane.b32.xlu0 %v1143, 4
        %v1215 = vpop.permute.xlu0 %1214
        %1216 = vrot.lane.b32.xlu0 %v1145, 4
        %v1217 = vpop.permute.xlu0 %1216
        %1218 = vrot.lane.b32.xlu0 %v1148, 4
        %v1219 = vpop.permute.xlu0 %1218
        %1220 = vrot.lane.b32.xlu0 %v1150, 4
        %v1221 = vpop.permute.xlu0 %1220
        %1222 = vrot.lane.b32.xlu0 %v1153, 4
        %v1223 = vpop.permute.xlu0 %1222
        %1224 = vrot.lane.b32.xlu0 %v1155, 4
        %v1225 = vpop.permute.xlu0 %1224
        %1226 = vrot.lane.b32.xlu0 %v1158, 4
        %v1227 = vpop.permute.xlu0 %1226
        %1228 = vrot.lane.b32.xlu0 %v1160, 4
        %v1229 = vpop.permute.xlu0 %1228
        %1230 = vrot.lane.b32.xlu0 %v1163, 4
        %v1231 = vpop.permute.xlu0 %1230
        %1232 = vrot.lane.b32.xlu0 %v1165, 4
        %v1233 = vpop.permute.xlu0 %1232
        %1234 = vrot.lane.b32.xlu0 %v1168, 4
        %v1235 = vpop.permute.xlu0 %1234
        %1236 = vrot.lane.b32.xlu0 %v1170, 4
        %v1237 = vpop.permute.xlu0 %1236
        %1238 = vrot.lane.b32.xlu0 %v1173, 4
        %v1239 = vpop.permute.xlu0 %1238
        %1240 = vrot.lane.b32.xlu0 %v1175, 4
        %v1241 = vpop.permute.xlu0 %1240
        %1242 = vrot.lane.b32.xlu0 %v1178, 4
        %v1243 = vpop.permute.xlu0 %1242
        %1244 = vrot.lane.b32.xlu0 %v1180, 4
        %v1245 = vpop.permute.xlu0 %1244
        %1246 = vrot.lane.b32.xlu0 %v1183, 4
        %v1247 = vpop.permute.xlu0 %1246
        %1248 = vrot.lane.b32.xlu0 %v1185, 4
        %v1249 = vpop.permute.xlu0 %1248
        %vm1282 = vcmask 1045504
        %v1283 = vrot.slane %v1003, 2
        %v1284 = vrot.slane %v1004, 2
        %v1285 = vsel %vm1282, %v1283, %v1284
        %v1286 = vrot.slane %v1005, 2
        %v1287 = vsel %vm1282, %v1284, %v1286
        %v1288 = vrot.slane %v1006, 2
        %v1289 = vrot.slane %v1007, 2
        %v1290 = vsel %vm1282, %v1288, %v1289
        %v1291 = vrot.slane %v1008, 2
        %v1292 = vsel %vm1282, %v1289, %v1291
        %v1293 = vrot.slane %v1009, 2
        %v1294 = vrot.slane %v1010, 2
        %v1295 = vsel %vm1282, %v1293, %v1294
        %v1296 = vrot.slane %v1011, 2
        %v1297 = vsel %vm1282, %v1294, %v1296
        %v1298 = vrot.slane %v1012, 2
        %v1299 = vrot.slane %v1013, 2
        %v1300 = vsel %vm1282, %v1298, %v1299
        %v1301 = vrot.slane %v1014, 2
        %v1302 = vsel %vm1282, %v1299, %v1301
        %v1303 = vrot.slane %v1015, 2
        %v1304 = vrot.slane %v1016, 2
        %v1305 = vsel %vm1282, %v1303, %v1304
        %v1306 = vrot.slane %v1017, 2
        %v1307 = vsel %vm1282, %v1304, %v1306
        %v1308 = vrot.slane %v1018, 2
        %v1309 = vrot.slane %v1019, 2
        %v1310 = vsel %vm1282, %v1308, %v1309
        %v1311 = vrot.slane %v1020, 2
        %v1312 = vsel %vm1282, %v1309, %v1311
        %v1313 = vrot.slane %v1021, 2
        %v1314 = vrot.slane %v1022, 2
        %v1315 = vsel %vm1282, %v1313, %v1314
        %v1316 = vrot.slane %v1023, 2
        %v1317 = vsel %vm1282, %v1314, %v1316
        %v1318 = vrot.slane %v1024, 2
        %v1319 = vrot.slane %v1025, 2
        %v1320 = vsel %vm1282, %v1318, %v1319
        %v1321 = vrot.slane %v1026, 2
        %v1322 = vsel %vm1282, %v1319, %v1321
        %v1323 = vrot.slane %v1027, 2
        %v1324 = vrot.slane %v1028, 2
        %v1325 = vsel %vm1282, %v1323, %v1324
        %v1326 = vrot.slane %v1029, 2
        %v1327 = vsel %vm1282, %v1324, %v1326
        %v1328 = vrot.slane %v1030, 2
        %v1329 = vrot.slane %v1031, 2
        %v1330 = vsel %vm1282, %v1328, %v1329
        %v1331 = vrot.slane %v1032, 2
        %v1332 = vsel %vm1282, %v1329, %v1331
        %v1333 = vrot.slane %v1033, 2
        %v1334 = vrot.slane %v1034, 2
        %v1335 = vsel %vm1282, %v1333, %v1334
        %v1336 = vrot.slane %v1035, 2
        %v1337 = vsel %vm1282, %v1334, %v1336
        %v1338 = vrot.slane %v1036, 2
        %v1339 = vrot.slane %v1037, 2
        %v1340 = vsel %vm1282, %v1338, %v1339
        %v1341 = vrot.slane %v1038, 2
        %v1342 = vsel %vm1282, %v1339, %v1341
        %v1343 = vrot.slane %v1039, 2
        %v1344 = vrot.slane %v1040, 2
        %v1345 = vsel %vm1282, %v1343, %v1344
        %v1346 = vrot.slane %v1041, 2
        %v1347 = vsel %vm1282, %v1344, %v1346
        %v1348 = vrot.slane %v1042, 2
        %v1349 = vrot.slane %v1043, 2
        %v1350 = vsel %vm1282, %v1348, %v1349
        %v1351 = vrot.slane %v1044, 2
        %v1352 = vsel %vm1282, %v1349, %v1351
        %v1353 = vrot.slane %v1045, 2
        %v1354 = vrot.slane %v1046, 2
        %v1355 = vsel %vm1282, %v1353, %v1354
        %v1356 = vrot.slane %v1047, 2
        %v1357 = vsel %vm1282, %v1354, %v1356
        %v1358 = vrot.slane %v1048, 2
        %v1359 = vrot.slane %v1049, 2
        %v1360 = vsel %vm1282, %v1358, %v1359
        %v1361 = vrot.slane %v1050, 2
        %v1362 = vsel %vm1282, %v1359, %v1361
        %1363 = vrot.lane.b32.xlu0 %v1285, 8
        %v1364 = vpop.permute.xlu0 %1363
        %1365 = vrot.lane.b32.xlu0 %v1287, 8
        %v1366 = vpop.permute.xlu0 %1365
        %1367 = vrot.lane.b32.xlu0 %v1290, 8
        %v1368 = vpop.permute.xlu0 %1367
        %1369 = vrot.lane.b32.xlu0 %v1292, 8
        %v1370 = vpop.permute.xlu0 %1369
        %1371 = vrot.lane.b32.xlu0 %v1295, 8
        %v1372 = vpop.permute.xlu0 %1371
        %1373 = vrot.lane.b32.xlu0 %v1297, 8
        %v1374 = vpop.permute.xlu0 %1373
        %1375 = vrot.lane.b32.xlu0 %v1300, 8
        %v1376 = vpop.permute.xlu0 %1375
        %1377 = vrot.lane.b32.xlu0 %v1302, 8
        %v1378 = vpop.permute.xlu0 %1377
        %1379 = vrot.lane.b32.xlu0 %v1305, 8
        %v1380 = vpop.permute.xlu0 %1379
        %1381 = vrot.lane.b32.xlu0 %v1307, 8
        %v1382 = vpop.permute.xlu0 %1381
        %1383 = vrot.lane.b32.xlu0 %v1310, 8
        %v1384 = vpop.permute.xlu0 %1383
        %1385 = vrot.lane.b32.xlu0 %v1312, 8
        %v1386 = vpop.permute.xlu0 %1385
        %1387 = vrot.lane.b32.xlu0 %v1315, 8
        %v1388 = vpop.permute.xlu0 %1387
        %1389 = vrot.lane.b32.xlu0 %v1317, 8
        %v1390 = vpop.permute.xlu0 %1389
        %1391 = vrot.lane.b32.xlu0 %v1320, 8
        %v1392 = vpop.permute.xlu0 %1391
        %1393 = vrot.lane.b32.xlu0 %v1322, 8
        %v1394 = vpop.permute.xlu0 %1393
        %1395 = vrot.lane.b32.xlu0 %v1325, 8
        %v1396 = vpop.permute.xlu0 %1395
        %1397 = vrot.lane.b32.xlu0 %v1327, 8
        %v1398 = vpop.permute.xlu0 %1397
        %1399 = vrot.lane.b32.xlu0 %v1330, 8
        %v1400 = vpop.permute.xlu0 %1399
        %1401 = vrot.lane.b32.xlu0 %v1332, 8
        %v1402 = vpop.permute.xlu0 %1401
        %1403 = vrot.lane.b32.xlu0 %v1335, 8
        %v1404 = vpop.permute.xlu0 %1403
        %1405 = vrot.lane.b32.xlu0 %v1337, 8
        %v1406 = vpop.permute.xlu0 %1405
        %1407 = vrot.lane.b32.xlu0 %v1340, 8
        %v1408 = vpop.permute.xlu0 %1407
        %1409 = vrot.lane.b32.xlu0 %v1342, 8
        %v1410 = vpop.permute.xlu0 %1409
        %1411 = vrot.lane.b32.xlu0 %v1345, 8
        %v1412 = vpop.permute.xlu0 %1411
        %1413 = vrot.lane.b32.xlu0 %v1347, 8
        %v1414 = vpop.permute.xlu0 %1413
        %1415 = vrot.lane.b32.xlu0 %v1350, 8
        %v1416 = vpop.permute.xlu0 %1415
        %1417 = vrot.lane.b32.xlu0 %v1352, 8
        %v1418 = vpop.permute.xlu0 %1417
        %1419 = vrot.lane.b32.xlu0 %v1355, 8
        %v1420 = vpop.permute.xlu0 %1419
        %1421 = vrot.lane.b32.xlu0 %v1357, 8
        %v1422 = vpop.permute.xlu0 %1421
        %1423 = vrot.lane.b32.xlu0 %v1360, 8
        %v1424 = vpop.permute.xlu0 %1423
        %1425 = vrot.lane.b32.xlu0 %v1362, 8
        %v1426 = vpop.permute.xlu0 %1425
        %1461 = vrot.lane.b32.xlu0 %v1006, 12
        %v1462 = vpop.permute.xlu0 %1461
        %1463 = vrot.lane.b32.xlu0 %v1007, 12
        %v1464 = vpop.permute.xlu0 %1463
        %1465 = vrot.lane.b32.xlu0 %v1009, 12
        %v1466 = vpop.permute.xlu0 %1465
        %1467 = vrot.lane.b32.xlu0 %v1010, 12
        %v1468 = vpop.permute.xlu0 %1467
        %1469 = vrot.lane.b32.xlu0 %v1012, 12
        %v1470 = vpop.permute.xlu0 %1469
        %1471 = vrot.lane.b32.xlu0 %v1013, 12
        %v1472 = vpop.permute.xlu0 %1471
        %1473 = vrot.lane.b32.xlu0 %v1015, 12
        %v1474 = vpop.permute.xlu0 %1473
        %1475 = vrot.lane.b32.xlu0 %v1016, 12
        %v1476 = vpop.permute.xlu0 %1475
        %1477 = vrot.lane.b32.xlu0 %v1018, 12
        %v1478 = vpop.permute.xlu0 %1477
        %1479 = vrot.lane.b32.xlu0 %v1019, 12
        %v1480 = vpop.permute.xlu0 %1479
        %1481 = vrot.lane.b32.xlu0 %v1021, 12
        %v1482 = vpop.permute.xlu0 %1481
        %1483 = vrot.lane.b32.xlu0 %v1022, 12
        %v1484 = vpop.permute.xlu0 %1483
        %1485 = vrot.lane.b32.xlu0 %v1024, 12
        %v1486 = vpop.permute.xlu0 %1485
        %1487 = vrot.lane.b32.xlu0 %v1025, 12
        %v1488 = vpop.permute.xlu0 %1487
        %1489 = vrot.lane.b32.xlu0 %v1027, 12
        %v1490 = vpop.permute.xlu0 %1489
        %1491 = vrot.lane.b32.xlu0 %v1028, 12
        %v1492 = vpop.permute.xlu0 %1491
        %1493 = vrot.lane.b32.xlu0 %v1030, 12
        %v1494 = vpop.permute.xlu0 %1493
        %1495 = vrot.lane.b32.xlu0 %v1031, 12
        %v1496 = vpop.permute.xlu0 %1495
        %1497 = vrot.lane.b32.xlu0 %v1033, 12
        %v1498 = vpop.permute.xlu0 %1497
        %1499 = vrot.lane.b32.xlu0 %v1034, 12
        %v1500 = vpop.permute.xlu0 %1499
        %1501 = vrot.lane.b32.xlu0 %v1036, 12
        %v1502 = vpop.permute.xlu0 %1501
        %1503 = vrot.lane.b32.xlu0 %v1037, 12
        %v1504 = vpop.permute.xlu0 %1503
        %1505 = vrot.lane.b32.xlu0 %v1039, 12
        %v1506 = vpop.permute.xlu0 %1505
        %1507 = vrot.lane.b32.xlu0 %v1040, 12
        %v1508 = vpop.permute.xlu0 %1507
        %1509 = vrot.lane.b32.xlu0 %v1042, 12
        %v1510 = vpop.permute.xlu0 %1509
        %1511 = vrot.lane.b32.xlu0 %v1043, 12
        %v1512 = vpop.permute.xlu0 %1511
        %1513 = vrot.lane.b32.xlu0 %v1045, 12
        %v1514 = vpop.permute.xlu0 %1513
        %1515 = vrot.lane.b32.xlu0 %v1046, 12
        %v1516 = vpop.permute.xlu0 %1515
        %1517 = vrot.lane.b32.xlu0 %v1048, 12
        %v1518 = vpop.permute.xlu0 %1517
        %1519 = vrot.lane.b32.xlu0 %v1049, 12
        %v1520 = vpop.permute.xlu0 %1519
        %1521 = vrot.lane.b32.xlu0 %v1051, 12
        %v1522 = vpop.permute.xlu0 %1521
        %1523 = vrot.lane.b32.xlu0 %v1052, 12
        %v1524 = vpop.permute.xlu0 %1523
        %v1558 = vrot.slane %v1051, 1
        %v1559 = vrot.slane %v1052, 1
        %v1560 = vsel %vm1105, %v1558, %v1559
        %v1561 = vrot.slane %v1053, 1
        %v1562 = vsel %vm1105, %v1559, %v1561
        %1563 = vrot.lane.b32.xlu0 %v1113, 16
        %v1564 = vpop.permute.xlu0 %1563
        %1565 = vrot.lane.b32.xlu0 %v1115, 16
        %v1566 = vpop.permute.xlu0 %1565
        %1567 = vrot.lane.b32.xlu0 %v1118, 16
        %v1568 = vpop.permute.xlu0 %1567
        %1569 = vrot.lane.b32.xlu0 %v1120, 16
        %v1570 = vpop.permute.xlu0 %1569
        %1571 = vrot.lane.b32.xlu0 %v1123, 16
        %v1572 = vpop.permute.xlu0 %1571
        %1573 = vrot.lane.b32.xlu0 %v1125, 16
        %v1574 = vpop.permute.xlu0 %1573
        %1575 = vrot.lane.b32.xlu0 %v1128, 16
        %v1576 = vpop.permute.xlu0 %1575
        %1577 = vrot.lane.b32.xlu0 %v1130, 16
        %v1578 = vpop.permute.xlu0 %1577
        %1579 = vrot.lane.b32.xlu0 %v1133, 16
        %v1580 = vpop.permute.xlu0 %1579
        %1581 = vrot.lane.b32.xlu0 %v1135, 16
        %v1582 = vpop.permute.xlu0 %1581
        %1583 = vrot.lane.b32.xlu0 %v1138, 16
        %v1584 = vpop.permute.xlu0 %1583
        %1585 = vrot.lane.b32.xlu0 %v1140, 16
        %v1586 = vpop.permute.xlu0 %1585
        %1587 = vrot.lane.b32.xlu0 %v1143, 16
        %v1588 = vpop.permute.xlu0 %1587
        %1589 = vrot.lane.b32.xlu0 %v1145, 16
        %v1590 = vpop.permute.xlu0 %1589
        %1591 = vrot.lane.b32.xlu0 %v1148, 16
        %v1592 = vpop.permute.xlu0 %1591
        %1593 = vrot.lane.b32.xlu0 %v1150, 16
        %v1594 = vpop.permute.xlu0 %1593
        %1595 = vrot.lane.b32.xlu0 %v1153, 16
        %v1596 = vpop.permute.xlu0 %1595
        %1597 = vrot.lane.b32.xlu0 %v1155, 16
        %v1598 = vpop.permute.xlu0 %1597
        %1599 = vrot.lane.b32.xlu0 %v1158, 16
        %v1600 = vpop.permute.xlu0 %1599
        %1601 = vrot.lane.b32.xlu0 %v1160, 16
        %v1602 = vpop.permute.xlu0 %1601
        %1603 = vrot.lane.b32.xlu0 %v1163, 16
        %v1604 = vpop.permute.xlu0 %1603
        %1605 = vrot.lane.b32.xlu0 %v1165, 16
        %v1606 = vpop.permute.xlu0 %1605
        %1607 = vrot.lane.b32.xlu0 %v1168, 16
        %v1608 = vpop.permute.xlu0 %1607
        %1609 = vrot.lane.b32.xlu0 %v1170, 16
        %v1610 = vpop.permute.xlu0 %1609
        %1611 = vrot.lane.b32.xlu0 %v1173, 16
        %v1612 = vpop.permute.xlu0 %1611
        %1613 = vrot.lane.b32.xlu0 %v1175, 16
        %v1614 = vpop.permute.xlu0 %1613
        %1615 = vrot.lane.b32.xlu0 %v1178, 16
        %v1616 = vpop.permute.xlu0 %1615
        %1617 = vrot.lane.b32.xlu0 %v1180, 16
        %v1618 = vpop.permute.xlu0 %1617
        %1619 = vrot.lane.b32.xlu0 %v1183, 16
        %v1620 = vpop.permute.xlu0 %1619
        %1621 = vrot.lane.b32.xlu0 %v1185, 16
        %v1622 = vpop.permute.xlu0 %1621
        %1623 = vrot.lane.b32.xlu0 %v1560, 16
        %v1624 = vpop.permute.xlu0 %1623
        %1625 = vrot.lane.b32.xlu0 %v1562, 16
        %v1626 = vpop.permute.xlu0 %1625
        %v1659 = vrot.slane %v1051, 2
        %v1660 = vrot.slane %v1052, 2
        %v1661 = vsel %vm1282, %v1659, %v1660
        %v1662 = vrot.slane %v1053, 2
        %v1663 = vsel %vm1282, %v1660, %v1662
        %1664 = vrot.lane.b32.xlu0 %v1290, 20
        %v1665 = vpop.permute.xlu0 %1664
        %1666 = vrot.lane.b32.xlu0 %v1292, 20
        %v1667 = vpop.permute.xlu0 %1666
        %1668 = vrot.lane.b32.xlu0 %v1295, 20
        %v1669 = vpop.permute.xlu0 %1668
        %1670 = vrot.lane.b32.xlu0 %v1297, 20
        %v1671 = vpop.permute.xlu0 %1670
        %1672 = vrot.lane.b32.xlu0 %v1300, 20
        %v1673 = vpop.permute.xlu0 %1672
        %1674 = vrot.lane.b32.xlu0 %v1302, 20
        %v1675 = vpop.permute.xlu0 %1674
        %1676 = vrot.lane.b32.xlu0 %v1305, 20
        %v1677 = vpop.permute.xlu0 %1676
        %1678 = vrot.lane.b32.xlu0 %v1307, 20
        %v1679 = vpop.permute.xlu0 %1678
        %1680 = vrot.lane.b32.xlu0 %v1310, 20
        %v1681 = vpop.permute.xlu0 %1680
        %1682 = vrot.lane.b32.xlu0 %v1312, 20
        %v1683 = vpop.permute.xlu0 %1682
        %1684 = vrot.lane.b32.xlu0 %v1315, 20
        %v1685 = vpop.permute.xlu0 %1684
        %1686 = vrot.lane.b32.xlu0 %v1317, 20
        %v1687 = vpop.permute.xlu0 %1686
        %1688 = vrot.lane.b32.xlu0 %v1320, 20
        %v1689 = vpop.permute.xlu0 %1688
        %1690 = vrot.lane.b32.xlu0 %v1322, 20
        %v1691 = vpop.permute.xlu0 %1690
        %1692 = vrot.lane.b32.xlu0 %v1325, 20
        %v1693 = vpop.permute.xlu0 %1692
        %1694 = vrot.lane.b32.xlu0 %v1327, 20
        %v1695 = vpop.permute.xlu0 %1694
        %1696 = vrot.lane.b32.xlu0 %v1330, 20
        %v1697 = vpop.permute.xlu0 %1696
        %1698 = vrot.lane.b32.xlu0 %v1332, 20
        %v1699 = vpop.permute.xlu0 %1698
        %1700 = vrot.lane.b32.xlu0 %v1335, 20
        %v1701 = vpop.permute.xlu0 %1700
        %1702 = vrot.lane.b32.xlu0 %v1337, 20
        %v1703 = vpop.permute.xlu0 %1702
        %1704 = vrot.lane.b32.xlu0 %v1340, 20
        %v1705 = vpop.permute.xlu0 %1704
        %1706 = vrot.lane.b32.xlu0 %v1342, 20
        %v1707 = vpop.permute.xlu0 %1706
        %1708 = vrot.lane.b32.xlu0 %v1345, 20
        %v1709 = vpop.permute.xlu0 %1708
        %1710 = vrot.lane.b32.xlu0 %v1347, 20
        %v1711 = vpop.permute.xlu0 %1710
        %1712 = vrot.lane.b32.xlu0 %v1350, 20
        %v1713 = vpop.permute.xlu0 %1712
        %1714 = vrot.lane.b32.xlu0 %v1352, 20
        %v1715 = vpop.permute.xlu0 %1714
        %1716 = vrot.lane.b32.xlu0 %v1355, 20
        %v1717 = vpop.permute.xlu0 %1716
        %1718 = vrot.lane.b32.xlu0 %v1357, 20
        %v1719 = vpop.permute.xlu0 %1718
        %1720 = vrot.lane.b32.xlu0 %v1360, 20
        %v1721 = vpop.permute.xlu0 %1720
        %1722 = vrot.lane.b32.xlu0 %v1362, 20
        %v1723 = vpop.permute.xlu0 %1722
        %1724 = vrot.lane.b32.xlu0 %v1661, 20
        %v1725 = vpop.permute.xlu0 %1724
        %1726 = vrot.lane.b32.xlu0 %v1663, 20
        %v1727 = vpop.permute.xlu0 %1726
        %1762 = vrot.lane.b32.xlu0 %v1009, 24
        %v1763 = vpop.permute.xlu0 %1762
        %1764 = vrot.lane.b32.xlu0 %v1010, 24
        %v1765 = vpop.permute.xlu0 %1764
        %1766 = vrot.lane.b32.xlu0 %v1012, 24
        %v1767 = vpop.permute.xlu0 %1766
        %1768 = vrot.lane.b32.xlu0 %v1013, 24
        %v1769 = vpop.permute.xlu0 %1768
        %1770 = vrot.lane.b32.xlu0 %v1015, 24
        %v1771 = vpop.permute.xlu0 %1770
        %1772 = vrot.lane.b32.xlu0 %v1016, 24
        %v1773 = vpop.permute.xlu0 %1772
        %1774 = vrot.lane.b32.xlu0 %v1018, 24
        %v1775 = vpop.permute.xlu0 %1774
        %1776 = vrot.lane.b32.xlu0 %v1019, 24
        %v1777 = vpop.permute.xlu0 %1776
        %1778 = vrot.lane.b32.xlu0 %v1021, 24
        %v1779 = vpop.permute.xlu0 %1778
        %1780 = vrot.lane.b32.xlu0 %v1022, 24
        %v1781 = vpop.permute.xlu0 %1780
        %1782 = vrot.lane.b32.xlu0 %v1024, 24
        %v1783 = vpop.permute.xlu0 %1782
        %1784 = vrot.lane.b32.xlu0 %v1025, 24
        %v1785 = vpop.permute.xlu0 %1784
        %1786 = vrot.lane.b32.xlu0 %v1027, 24
        %v1787 = vpop.permute.xlu0 %1786
        %1788 = vrot.lane.b32.xlu0 %v1028, 24
        %v1789 = vpop.permute.xlu0 %1788
        %1790 = vrot.lane.b32.xlu0 %v1030, 24
        %v1791 = vpop.permute.xlu0 %1790
        %1792 = vrot.lane.b32.xlu0 %v1031, 24
        %v1793 = vpop.permute.xlu0 %1792
        %1794 = vrot.lane.b32.xlu0 %v1033, 24
        %v1795 = vpop.permute.xlu0 %1794
        %1796 = vrot.lane.b32.xlu0 %v1034, 24
        %v1797 = vpop.permute.xlu0 %1796
        %1798 = vrot.lane.b32.xlu0 %v1036, 24
        %v1799 = vpop.permute.xlu0 %1798
        %1800 = vrot.lane.b32.xlu0 %v1037, 24
        %v1801 = vpop.permute.xlu0 %1800
        %1802 = vrot.lane.b32.xlu0 %v1039, 24
        %v1803 = vpop.permute.xlu0 %1802
        %1804 = vrot.lane.b32.xlu0 %v1040, 24
        %v1805 = vpop.permute.xlu0 %1804
        %1806 = vrot.lane.b32.xlu0 %v1042, 24
        %v1807 = vpop.permute.xlu0 %1806
        %1808 = vrot.lane.b32.xlu0 %v1043, 24
        %v1809 = vpop.permute.xlu0 %1808
        %1810 = vrot.lane.b32.xlu0 %v1045, 24
        %v1811 = vpop.permute.xlu0 %1810
        %1812 = vrot.lane.b32.xlu0 %v1046, 24
        %v1813 = vpop.permute.xlu0 %1812
        %1814 = vrot.lane.b32.xlu0 %v1048, 24
        %v1815 = vpop.permute.xlu0 %1814
        %1816 = vrot.lane.b32.xlu0 %v1049, 24
        %v1817 = vpop.permute.xlu0 %1816
        %1818 = vrot.lane.b32.xlu0 %v1051, 24
        %v1819 = vpop.permute.xlu0 %1818
        %1820 = vrot.lane.b32.xlu0 %v1052, 24
        %v1821 = vpop.permute.xlu0 %1820
        %1822 = vrot.lane.b32.xlu0 %v1054, 24
        %v1823 = vpop.permute.xlu0 %1822
        %1824 = vrot.lane.b32.xlu0 %v1055, 24
        %v1825 = vpop.permute.xlu0 %1824
        %v1859 = vrot.slane %v1054, 1
        %v1860 = vrot.slane %v1055, 1
        %v1861 = vsel %vm1105, %v1859, %v1860
        %v1862 = vrot.slane %v1056, 1
        %v1863 = vsel %vm1105, %v1860, %v1862
        %1864 = vrot.lane.b32.xlu0 %v1118, 28
        %v1865 = vpop.permute.xlu0 %1864
        %1866 = vrot.lane.b32.xlu0 %v1120, 28
        %v1867 = vpop.permute.xlu0 %1866
        %1868 = vrot.lane.b32.xlu0 %v1123, 28
        %v1869 = vpop.permute.xlu0 %1868
        %1870 = vrot.lane.b32.xlu0 %v1125, 28
        %v1871 = vpop.permute.xlu0 %1870
        %1872 = vrot.lane.b32.xlu0 %v1128, 28
        %v1873 = vpop.permute.xlu0 %1872
        %1874 = vrot.lane.b32.xlu0 %v1130, 28
        %v1875 = vpop.permute.xlu0 %1874
        %1876 = vrot.lane.b32.xlu0 %v1133, 28
        %v1877 = vpop.permute.xlu0 %1876
        %1878 = vrot.lane.b32.xlu0 %v1135, 28
        %v1879 = vpop.permute.xlu0 %1878
        %1880 = vrot.lane.b32.xlu0 %v1138, 28
        %v1881 = vpop.permute.xlu0 %1880
        %1882 = vrot.lane.b32.xlu0 %v1140, 28
        %v1883 = vpop.permute.xlu0 %1882
        %1884 = vrot.lane.b32.xlu0 %v1143, 28
        %v1885 = vpop.permute.xlu0 %1884
        %1886 = vrot.lane.b32.xlu0 %v1145, 28
        %v1887 = vpop.permute.xlu0 %1886
        %1888 = vrot.lane.b32.xlu0 %v1148, 28
        %v1889 = vpop.permute.xlu0 %1888
        %1890 = vrot.lane.b32.xlu0 %v1150, 28
        %v1891 = vpop.permute.xlu0 %1890
        %1892 = vrot.lane.b32.xlu0 %v1153, 28
        %v1893 = vpop.permute.xlu0 %1892
        %1894 = vrot.lane.b32.xlu0 %v1155, 28
        %v1895 = vpop.permute.xlu0 %1894
        %1896 = vrot.lane.b32.xlu0 %v1158, 28
        %v1897 = vpop.permute.xlu0 %1896
        %1898 = vrot.lane.b32.xlu0 %v1160, 28
        %v1899 = vpop.permute.xlu0 %1898
        %1900 = vrot.lane.b32.xlu0 %v1163, 28
        %v1901 = vpop.permute.xlu0 %1900
        %1902 = vrot.lane.b32.xlu0 %v1165, 28
        %v1903 = vpop.permute.xlu0 %1902
        %1904 = vrot.lane.b32.xlu0 %v1168, 28
        %v1905 = vpop.permute.xlu0 %1904
        %1906 = vrot.lane.b32.xlu0 %v1170, 28
        %v1907 = vpop.permute.xlu0 %1906
        %1908 = vrot.lane.b32.xlu0 %v1173, 28
        %v1909 = vpop.permute.xlu0 %1908
        %1910 = vrot.lane.b32.xlu0 %v1175, 28
        %v1911 = vpop.permute.xlu0 %1910
        %1912 = vrot.lane.b32.xlu0 %v1178, 28
        %v1913 = vpop.permute.xlu0 %1912
        %1914 = vrot.lane.b32.xlu0 %v1180, 28
        %v1915 = vpop.permute.xlu0 %1914
        %1916 = vrot.lane.b32.xlu0 %v1183, 28
        %v1917 = vpop.permute.xlu0 %1916
        %1918 = vrot.lane.b32.xlu0 %v1185, 28
        %v1919 = vpop.permute.xlu0 %1918
        %1920 = vrot.lane.b32.xlu0 %v1560, 28
        %v1921 = vpop.permute.xlu0 %1920
        %1922 = vrot.lane.b32.xlu0 %v1562, 28
        %v1923 = vpop.permute.xlu0 %1922
        %1924 = vrot.lane.b32.xlu0 %v1861, 28
        %v1925 = vpop.permute.xlu0 %1924
        %1926 = vrot.lane.b32.xlu0 %v1863, 28
        %v1927 = vpop.permute.xlu0 %1926
        %v1960 = vrot.slane %v1054, 2
        %v1961 = vrot.slane %v1055, 2
        %v1962 = vsel %vm1282, %v1960, %v1961
        %v1963 = vrot.slane %v1056, 2
        %v1964 = vsel %vm1282, %v1961, %v1963
        %1965 = vrot.lane.b32.xlu0 %v1295, 32
        %v1966 = vpop.permute.xlu0 %1965
        %1967 = vrot.lane.b32.xlu0 %v1297, 32
        %v1968 = vpop.permute.xlu0 %1967
        %1969 = vrot.lane.b32.xlu0 %v1300, 32
        %v1970 = vpop.permute.xlu0 %1969
        %1971 = vrot.lane.b32.xlu0 %v1302, 32
        %v1972 = vpop.permute.xlu0 %1971
        %1973 = vrot.lane.b32.xlu0 %v1305, 32
        %v1974 = vpop.permute.xlu0 %1973
        %1975 = vrot.lane.b32.xlu0 %v1307, 32
        %v1976 = vpop.permute.xlu0 %1975
        %1977 = vrot.lane.b32.xlu0 %v1310, 32
        %v1978 = vpop.permute.xlu0 %1977
        %1979 = vrot.lane.b32.xlu0 %v1312, 32
        %v1980 = vpop.permute.xlu0 %1979
        %1981 = vrot.lane.b32.xlu0 %v1315, 32
        %v1982 = vpop.permute.xlu0 %1981
        %1983 = vrot.lane.b32.xlu0 %v1317, 32
        %v1984 = vpop.permute.xlu0 %1983
        %1985 = vrot.lane.b32.xlu0 %v1320, 32
        %v1986 = vpop.permute.xlu0 %1985
        %1987 = vrot.lane.b32.xlu0 %v1322, 32
        %v1988 = vpop.permute.xlu0 %1987
        %1989 = vrot.lane.b32.xlu0 %v1325, 32
        %v1990 = vpop.permute.xlu0 %1989
        %1991 = vrot.lane.b32.xlu0 %v1327, 32
        %v1992 = vpop.permute.xlu0 %1991
        %1993 = vrot.lane.b32.xlu0 %v1330, 32
        %v1994 = vpop.permute.xlu0 %1993
        %1995 = vrot.lane.b32.xlu0 %v1332, 32
        %v1996 = vpop.permute.xlu0 %1995
        %1997 = vrot.lane.b32.xlu0 %v1335, 32
        %v1998 = vpop.permute.xlu0 %1997
        %1999 = vrot.lane.b32.xlu0 %v1337, 32
        %v2000 = vpop.permute.xlu0 %1999
        %2001 = vrot.lane.b32.xlu0 %v1340, 32
        %v2002 = vpop.permute.xlu0 %2001
        %2003 = vrot.lane.b32.xlu0 %v1342, 32
        %v2004 = vpop.permute.xlu0 %2003
        %2005 = vrot.lane.b32.xlu0 %v1345, 32
        %v2006 = vpop.permute.xlu0 %2005
        %2007 = vrot.lane.b32.xlu0 %v1347, 32
        %v2008 = vpop.permute.xlu0 %2007
        %2009 = vrot.lane.b32.xlu0 %v1350, 32
        %v2010 = vpop.permute.xlu0 %2009
        %2011 = vrot.lane.b32.xlu0 %v1352, 32
        %v2012 = vpop.permute.xlu0 %2011
        %2013 = vrot.lane.b32.xlu0 %v1355, 32
        %v2014 = vpop.permute.xlu0 %2013
        %2015 = vrot.lane.b32.xlu0 %v1357, 32
        %v2016 = vpop.permute.xlu0 %2015
        %2017 = vrot.lane.b32.xlu0 %v1360, 32
        %v2018 = vpop.permute.xlu0 %2017
        %2019 = vrot.lane.b32.xlu0 %v1362, 32
        %v2020 = vpop.permute.xlu0 %2019
        %2021 = vrot.lane.b32.xlu0 %v1661, 32
        %v2022 = vpop.permute.xlu0 %2021
        %2023 = vrot.lane.b32.xlu0 %v1663, 32
        %v2024 = vpop.permute.xlu0 %2023
        %2025 = vrot.lane.b32.xlu0 %v1962, 32
        %v2026 = vpop.permute.xlu0 %2025
        %2027 = vrot.lane.b32.xlu0 %v1964, 32
        %v2028 = vpop.permute.xlu0 %2027
        %v2061 = vsel %vm277, %v1003, %v1187
        %v2062 = vsel %vm277, %v1004, %v1189
        %v2063 = vsel %vm277, %v1006, %v1191
        %v2064 = vsel %vm277, %v1007, %v1193
        %v2065 = vsel %vm277, %v1009, %v1195
        %v2066 = vsel %vm277, %v1010, %v1197
        %v2067 = vsel %vm277, %v1012, %v1199
        %v2068 = vsel %vm277, %v1013, %v1201
        %v2069 = vsel %vm277, %v1015, %v1203
        %v2070 = vsel %vm277, %v1016, %v1205
        %v2071 = vsel %vm277, %v1018, %v1207
        %v2072 = vsel %vm277, %v1019, %v1209
        %v2073 = vsel %vm277, %v1021, %v1211
        %v2074 = vsel %vm277, %v1022, %v1213
        %v2075 = vsel %vm277, %v1024, %v1215
        %v2076 = vsel %vm277, %v1025, %v1217
        %v2077 = vsel %vm277, %v1027, %v1219
        %v2078 = vsel %vm277, %v1028, %v1221
        %v2079 = vsel %vm277, %v1030, %v1223
        %v2080 = vsel %vm277, %v1031, %v1225
        %v2081 = vsel %vm277, %v1033, %v1227
        %v2082 = vsel %vm277, %v1034, %v1229
        %v2083 = vsel %vm277, %v1036, %v1231
        %v2084 = vsel %vm277, %v1037, %v1233
        %v2085 = vsel %vm277, %v1039, %v1235
        %v2086 = vsel %vm277, %v1040, %v1237
        %v2087 = vsel %vm277, %v1042, %v1239
        %v2088 = vsel %vm277, %v1043, %v1241
        %v2089 = vsel %vm277, %v1045, %v1243
        %v2090 = vsel %vm277, %v1046, %v1245
        %v2091 = vsel %vm277, %v1048, %v1247
        %v2092 = vsel %vm277, %v1049, %v1249
        %vm2093 = vcmask 64512
        %v2094 = vsel %vm2093, %v2061, %v1364
        %v2095 = vsel %vm2093, %v2062, %v1366
        %v2096 = vsel %vm2093, %v2063, %v1368
        %v2097 = vsel %vm2093, %v2064, %v1370
        %v2098 = vsel %vm2093, %v2065, %v1372
        %v2099 = vsel %vm2093, %v2066, %v1374
        %v2100 = vsel %vm2093, %v2067, %v1376
        %v2101 = vsel %vm2093, %v2068, %v1378
        %v2102 = vsel %vm2093, %v2069, %v1380
        %v2103 = vsel %vm2093, %v2070, %v1382
        %v2104 = vsel %vm2093, %v2071, %v1384
        %v2105 = vsel %vm2093, %v2072, %v1386
        %v2106 = vsel %vm2093, %v2073, %v1388
        %v2107 = vsel %vm2093, %v2074, %v1390
        %v2108 = vsel %vm2093, %v2075, %v1392
        %v2109 = vsel %vm2093, %v2076, %v1394
        %v2110 = vsel %vm2093, %v2077, %v1396
        %v2111 = vsel %vm2093, %v2078, %v1398
        %v2112 = vsel %vm2093, %v2079, %v1400
        %v2113 = vsel %vm2093, %v2080, %v1402
        %v2114 = vsel %vm2093, %v2081, %v1404
        %v2115 = vsel %vm2093, %v2082, %v1406
        %v2116 = vsel %vm2093, %v2083, %v1408
        %v2117 = vsel %vm2093, %v2084, %v1410
        %v2118 = vsel %vm2093, %v2085, %v1412
        %v2119 = vsel %vm2093, %v2086, %v1414
        %v2120 = vsel %vm2093, %v2087, %v1416
        %v2121 = vsel %vm2093, %v2088, %v1418
        %v2122 = vsel %vm2093, %v2089, %v1420
        %v2123 = vsel %vm2093, %v2090, %v1422
        %v2124 = vsel %vm2093, %v2091, %v1424
        %v2125 = vsel %vm2093, %v2092, %v1426
        %vm2126 = vcmask 97280
        %v2127 = vsel %vm2126, %v2094, %v1462
        %v2128 = vsel %vm2126, %v2095, %v1464
        %v2129 = vsel %vm2126, %v2096, %v1466
        %v2130 = vsel %vm2126, %v2097, %v1468
        %v2131 = vsel %vm2126, %v2098, %v1470
        %v2132 = vsel %vm2126, %v2099, %v1472
        %v2133 = vsel %vm2126, %v2100, %v1474
        %v2134 = vsel %vm2126, %v2101, %v1476
        %v2135 = vsel %vm2126, %v2102, %v1478
        %v2136 = vsel %vm2126, %v2103, %v1480
        %v2137 = vsel %vm2126, %v2104, %v1482
        %v2138 = vsel %vm2126, %v2105, %v1484
        %v2139 = vsel %vm2126, %v2106, %v1486
        %v2140 = vsel %vm2126, %v2107, %v1488
        %v2141 = vsel %vm2126, %v2108, %v1490
        %v2142 = vsel %vm2126, %v2109, %v1492
        %v2143 = vsel %vm2126, %v2110, %v1494
        %v2144 = vsel %vm2126, %v2111, %v1496
        %v2145 = vsel %vm2126, %v2112, %v1498
        %v2146 = vsel %vm2126, %v2113, %v1500
        %v2147 = vsel %vm2126, %v2114, %v1502
        %v2148 = vsel %vm2126, %v2115, %v1504
        %v2149 = vsel %vm2126, %v2116, %v1506
        %v2150 = vsel %vm2126, %v2117, %v1508
        %v2151 = vsel %vm2126, %v2118, %v1510
        %v2152 = vsel %vm2126, %v2119, %v1512
        %v2153 = vsel %vm2126, %v2120, %v1514
        %v2154 = vsel %vm2126, %v2121, %v1516
        %v2155 = vsel %vm2126, %v2122, %v1518
        %v2156 = vsel %vm2126, %v2123, %v1520
        %v2157 = vsel %vm2126, %v2124, %v1522
        %v2158 = vsel %vm2126, %v2125, %v1524
        %vm2159 = vcmask 130048
        %v2160 = vsel %vm2159, %v2127, %v1564
        %v2161 = vsel %vm2159, %v2128, %v1566
        %v2162 = vsel %vm2159, %v2129, %v1568
        %v2163 = vsel %vm2159, %v2130, %v1570
        %v2164 = vsel %vm2159, %v2131, %v1572
        %v2165 = vsel %vm2159, %v2132, %v1574
        %v2166 = vsel %vm2159, %v2133, %v1576
        %v2167 = vsel %vm2159, %v2134, %v1578
        %v2168 = vsel %vm2159, %v2135, %v1580
        %v2169 = vsel %vm2159, %v2136, %v1582
        %v2170 = vsel %vm2159, %v2137, %v1584
        %v2171 = vsel %vm2159, %v2138, %v1586
        %v2172 = vsel %vm2159, %v2139, %v1588
        %v2173 = vsel %vm2159, %v2140, %v1590
        %v2174 = vsel %vm2159, %v2141, %v1592
        %v2175 = vsel %vm2159, %v2142, %v1594
        %v2176 = vsel %vm2159, %v2143, %v1596
        %v2177 = vsel %vm2159, %v2144, %v1598
        %v2178 = vsel %vm2159, %v2145, %v1600
        %v2179 = vsel %vm2159, %v2146, %v1602
        %v2180 = vsel %vm2159, %v2147, %v1604
        %v2181 = vsel %vm2159, %v2148, %v1606
        %v2182 = vsel %vm2159, %v2149, %v1608
        %v2183 = vsel %vm2159, %v2150, %v1610
        %v2184 = vsel %vm2159, %v2151, %v1612
        %v2185 = vsel %vm2159, %v2152, %v1614
        %v2186 = vsel %vm2159, %v2153, %v1616
        %v2187 = vsel %vm2159, %v2154, %v1618
        %v2188 = vsel %vm2159, %v2155, %v1620
        %v2189 = vsel %vm2159, %v2156, %v1622
        %v2190 = vsel %vm2159, %v2157, %v1624
        %v2191 = vsel %vm2159, %v2158, %v1626
        %vm2192 = vcmask 162816
        %v2193 = vsel %vm2192, %v2160, %v1665
        %v2194 = vsel %vm2192, %v2161, %v1667
        %v2195 = vsel %vm2192, %v2162, %v1669
        %v2196 = vsel %vm2192, %v2163, %v1671
        %v2197 = vsel %vm2192, %v2164, %v1673
        %v2198 = vsel %vm2192, %v2165, %v1675
        %v2199 = vsel %vm2192, %v2166, %v1677
        %v2200 = vsel %vm2192, %v2167, %v1679
        %v2201 = vsel %vm2192, %v2168, %v1681
        %v2202 = vsel %vm2192, %v2169, %v1683
        %v2203 = vsel %vm2192, %v2170, %v1685
        %v2204 = vsel %vm2192, %v2171, %v1687
        %v2205 = vsel %vm2192, %v2172, %v1689
        %v2206 = vsel %vm2192, %v2173, %v1691
        %v2207 = vsel %vm2192, %v2174, %v1693
        %v2208 = vsel %vm2192, %v2175, %v1695
        %v2209 = vsel %vm2192, %v2176, %v1697
        %v2210 = vsel %vm2192, %v2177, %v1699
        %v2211 = vsel %vm2192, %v2178, %v1701
        %v2212 = vsel %vm2192, %v2179, %v1703
        %v2213 = vsel %vm2192, %v2180, %v1705
        %v2214 = vsel %vm2192, %v2181, %v1707
        %v2215 = vsel %vm2192, %v2182, %v1709
        %v2216 = vsel %vm2192, %v2183, %v1711
        %v2217 = vsel %vm2192, %v2184, %v1713
        %v2218 = vsel %vm2192, %v2185, %v1715
        %v2219 = vsel %vm2192, %v2186, %v1717
        %v2220 = vsel %vm2192, %v2187, %v1719
        %v2221 = vsel %vm2192, %v2188, %v1721
        %v2222 = vsel %vm2192, %v2189, %v1723
        %v2223 = vsel %vm2192, %v2190, %v1725
        %v2224 = vsel %vm2192, %v2191, %v1727
        %vm2225 = vcmask 195584
        %v2226 = vsel %vm2225, %v2193, %v1763
        %v2227 = vsel %vm2225, %v2194, %v1765
        %v2228 = vsel %vm2225, %v2195, %v1767
        %v2229 = vsel %vm2225, %v2196, %v1769
        %v2230 = vsel %vm2225, %v2197, %v1771
        %v2231 = vsel %vm2225, %v2198, %v1773
        %v2232 = vsel %vm2225, %v2199, %v1775
        %v2233 = vsel %vm2225, %v2200, %v1777
        %v2234 = vsel %vm2225, %v2201, %v1779
        %v2235 = vsel %vm2225, %v2202, %v1781
        %v2236 = vsel %vm2225, %v2203, %v1783
        %v2237 = vsel %vm2225, %v2204, %v1785
        %v2238 = vsel %vm2225, %v2205, %v1787
        %v2239 = vsel %vm2225, %v2206, %v1789
        %v2240 = vsel %vm2225, %v2207, %v1791
        %v2241 = vsel %vm2225, %v2208, %v1793
        %v2242 = vsel %vm2225, %v2209, %v1795
        %v2243 = vsel %vm2225, %v2210, %v1797
        %v2244 = vsel %vm2225, %v2211, %v1799
        %v2245 = vsel %vm2225, %v2212, %v1801
        %v2246 = vsel %vm2225, %v2213, %v1803
        %v2247 = vsel %vm2225, %v2214, %v1805
        %v2248 = vsel %vm2225, %v2215, %v1807
        %v2249 = vsel %vm2225, %v2216, %v1809
        %v2250 = vsel %vm2225, %v2217, %v1811
        %v2251 = vsel %vm2225, %v2218, %v1813
        %v2252 = vsel %vm2225, %v2219, %v1815
        %v2253 = vsel %vm2225, %v2220, %v1817
        %v2254 = vsel %vm2225, %v2221, %v1819
        %v2255 = vsel %vm2225, %v2222, %v1821
        %v2256 = vsel %vm2225, %v2223, %v1823
        %v2257 = vsel %vm2225, %v2224, %v1825
        %vm2258 = vcmask 228352
        %v2259 = vsel %vm2258, %v2226, %v1865
        %v2260 = vsel %vm2258, %v2227, %v1867
        %v2261 = vsel %vm2258, %v2228, %v1869
        %v2262 = vsel %vm2258, %v2229, %v1871
        %v2263 = vsel %vm2258, %v2230, %v1873
        %v2264 = vsel %vm2258, %v2231, %v1875
        %v2265 = vsel %vm2258, %v2232, %v1877
        %v2266 = vsel %vm2258, %v2233, %v1879
        %v2267 = vsel %vm2258, %v2234, %v1881
        %v2268 = vsel %vm2258, %v2235, %v1883
        %v2269 = vsel %vm2258, %v2236, %v1885
        %v2270 = vsel %vm2258, %v2237, %v1887
        %v2271 = vsel %vm2258, %v2238, %v1889
        %v2272 = vsel %vm2258, %v2239, %v1891
        %v2273 = vsel %vm2258, %v2240, %v1893
        %v2274 = vsel %vm2258, %v2241, %v1895
        %v2275 = vsel %vm2258, %v2242, %v1897
        %v2276 = vsel %vm2258, %v2243, %v1899
        %v2277 = vsel %vm2258, %v2244, %v1901
        %v2278 = vsel %vm2258, %v2245, %v1903
        %v2279 = vsel %vm2258, %v2246, %v1905
        %v2280 = vsel %vm2258, %v2247, %v1907
        %v2281 = vsel %vm2258, %v2248, %v1909
        %v2282 = vsel %vm2258, %v2249, %v1911
        %v2283 = vsel %vm2258, %v2250, %v1913
        %v2284 = vsel %vm2258, %v2251, %v1915
        %v2285 = vsel %vm2258, %v2252, %v1917
        %v2286 = vsel %vm2258, %v2253, %v1919
        %v2287 = vsel %vm2258, %v2254, %v1921
        %v2288 = vsel %vm2258, %v2255, %v1923
        %v2289 = vsel %vm2258, %v2256, %v1925
        %v2290 = vsel %vm2258, %v2257, %v1927
        %vm2291 = vcmask 261120
        %v2292 = vsel %vm2291, %v2259, %v1966
        %v2293 = vsel %vm2291, %v2260, %v1968
        %v2294 = vsel %vm2291, %v2261, %v1970
        %v2295 = vsel %vm2291, %v2262, %v1972
        %v2296 = vsel %vm2291, %v2263, %v1974
        %v2297 = vsel %vm2291, %v2264, %v1976
        %v2298 = vsel %vm2291, %v2265, %v1978
        %v2299 = vsel %vm2291, %v2266, %v1980
        %v2300 = vsel %vm2291, %v2267, %v1982
        %v2301 = vsel %vm2291, %v2268, %v1984
        %v2302 = vsel %vm2291, %v2269, %v1986
        %v2303 = vsel %vm2291, %v2270, %v1988
        %v2304 = vsel %vm2291, %v2271, %v1990
        %v2305 = vsel %vm2291, %v2272, %v1992
        %v2306 = vsel %vm2291, %v2273, %v1994
        %v2307 = vsel %vm2291, %v2274, %v1996
        %v2308 = vsel %vm2291, %v2275, %v1998
        %v2309 = vsel %vm2291, %v2276, %v2000
        %v2310 = vsel %vm2291, %v2277, %v2002
        %v2311 = vsel %vm2291, %v2278, %v2004
        %v2312 = vsel %vm2291, %v2279, %v2006
        %v2313 = vsel %vm2291, %v2280, %v2008
        %v2314 = vsel %vm2291, %v2281, %v2010
        %v2315 = vsel %vm2291, %v2282, %v2012
        %v2316 = vsel %vm2291, %v2283, %v2014
        %v2317 = vsel %vm2291, %v2284, %v2016
        %v2318 = vsel %vm2291, %v2285, %v2018
        %v2319 = vsel %vm2291, %v2286, %v2020
        %v2320 = vsel %vm2291, %v2287, %v2022
        %v2321 = vsel %vm2291, %v2288, %v2024
        %v2322 = vsel %vm2291, %v2289, %v2026
        %v2323 = vsel %vm2291, %v2290, %v2028
        %v2324 = vld [vmem:[%s3] sm:$0xff]
        %v2325 = vld [vmem:[%s3 + $0x8] sm:$0xff]
        %v2326 = vld [vmem:[%s3 + $0x10] sm:$0xff]
        %v2327 = vld [vmem:[%s3 + $0x18] sm:$0xff]
        %v2328 = vld [vmem:[%s3 + $0x20] sm:$0xf]
        %vm2329 = vcmask 293888
        %v2331 = vsel %vm2329, %v2292, 0
        %v2334 = vsel %vm2329, %v2293, 0
        %v2337 = vsel %vm2329, %v2294, 0
        %v2340 = vsel %vm2329, %v2295, 0
        %v2343 = vsel %vm2329, %v2296, 0
        %v2346 = vsel %vm2329, %v2297, 0
        %v2349 = vsel %vm2329, %v2298, 0
        %v2352 = vsel %vm2329, %v2299, 0
        %v2355 = vsel %vm2329, %v2300, 0
        %v2358 = vsel %vm2329, %v2301, 0
        %v2361 = vsel %vm2329, %v2302, 0
        %v2364 = vsel %vm2329, %v2303, 0
        %v2367 = vsel %vm2329, %v2304, 0
        %v2370 = vsel %vm2329, %v2305, 0
        %v2373 = vsel %vm2329, %v2306, 0
        %v2376 = vsel %vm2329, %v2307, 0
        %v2379 = vsel %vm2329, %v2308, 0
        %v2382 = vsel %vm2329, %v2309, 0
        %v2385 = vsel %vm2329, %v2310, 0
        %v2388 = vsel %vm2329, %v2311, 0
        %v2391 = vsel %vm2329, %v2312, 0
        %v2394 = vsel %vm2329, %v2313, 0
        %v2397 = vsel %vm2329, %v2314, 0
        %v2400 = vsel %vm2329, %v2315, 0
        %v2403 = vsel %vm2329, %v2316, 0
        %v2406 = vsel %vm2329, %v2317, 0
        %v2409 = vsel %vm2329, %v2318, 0
        %v2412 = vsel %vm2329, %v2319, 0
        %v2415 = vsel %vm2329, %v2320, 0
        %v2418 = vsel %vm2329, %v2321, 0
        %v2421 = vsel %vm2329, %v2322, 0
        %v2424 = vsel %vm2329, %v2323, 0
        %vm2426 = vcmask 1043456
        %v2428 = vsel %vm2426, %v2328, 0
        %2430 = vmatpush.msra.mxu0 0.0
        %2431 = vmatpush.msra.mxu0 0.0
        %2432 = vmatpush.msra.mxu0 0.0
        %2433 = vmatpush.msra.mxu0 0.0
        %2434 = vmatpush.msra.mxu0 0.0
        %2435 = vmatpush.msra.mxu0 0.0
        %2436 = vmatpush.msra.mxu0 0.0
        %2437 = vmatpush.msra.mxu0 0.0
        %2438 = vmatpush.msra.mxu0 0.0
        %2439 = vmatpush.msra.mxu0 0.0
        %2440 = vmatpush.msra.mxu0 0.0
        %2441 = vmatpush.msra.mxu0 %v2428
        %2442 = vmatpush.msra.mxu0 %v2327
        %2443 = vmatpush.msra.mxu0 %v2326
        %2444 = vmatpush.msra.mxu0 %v2325
        %2445 = vmatpush.msra.mxu0 %v2324
        %2446 = vmatmul.f32.gmra.mxu0 %v2331
        %v2447 = vpop.f32.mrf.mxu0
        %v2448 = vadd.f32 0.0, %v2447
        %2449 = vmatmul.f32.gmra.mxu0 %v2334
        %v2450 = vpop.f32.mrf.mxu0
        %v2451 = vadd.f32 0.0, %v2450
        %2452 = vmatmul.f32.gmra.mxu0 %v2337
        %v2453 = vpop.f32.mrf.mxu0
        %v2454 = vadd.f32 0.0, %v2453
        %2455 = vmatmul.f32.gmra.mxu0 %v2340
        %v2456 = vpop.f32.mrf.mxu0
        %v2457 = vadd.f32 0.0, %v2456
        %2458 = vmatmul.f32.gmra.mxu0 %v2343
        %v2459 = vpop.f32.mrf.mxu0
        %v2460 = vadd.f32 0.0, %v2459
        %2461 = vmatmul.f32.gmra.mxu0 %v2346
        %v2462 = vpop.f32.mrf.mxu0
        %v2463 = vadd.f32 0.0, %v2462
        %2464 = vmatmul.f32.gmra.mxu0 %v2349
        %v2465 = vpop.f32.mrf.mxu0
        %v2466 = vadd.f32 0.0, %v2465
        %2467 = vmatmul.f32.gmra.mxu0 %v2352
        %v2468 = vpop.f32.mrf.mxu0
        %v2469 = vadd.f32 0.0, %v2468
        %2470 = vmatmul.f32.gmra.mxu0 %v2355
        %v2471 = vpop.f32.mrf.mxu0
        %v2472 = vadd.f32 0.0, %v2471
        %2473 = vmatmul.f32.gmra.mxu0 %v2358
        %v2474 = vpop.f32.mrf.mxu0
        %v2475 = vadd.f32 0.0, %v2474
        %2476 = vmatmul.f32.gmra.mxu0 %v2361
        %v2477 = vpop.f32.mrf.mxu0
        %v2478 = vadd.f32 0.0, %v2477
        %2479 = vmatmul.f32.gmra.mxu0 %v2364
        %v2480 = vpop.f32.mrf.mxu0
        %v2481 = vadd.f32 0.0, %v2480
        %2482 = vmatmul.f32.gmra.mxu0 %v2367
        %v2483 = vpop.f32.mrf.mxu0
        %v2484 = vadd.f32 0.0, %v2483
        %2485 = vmatmul.f32.gmra.mxu0 %v2370
        %v2486 = vpop.f32.mrf.mxu0
        %v2487 = vadd.f32 0.0, %v2486
        %2488 = vmatmul.f32.gmra.mxu0 %v2373
        %v2489 = vpop.f32.mrf.mxu0
        %v2490 = vadd.f32 0.0, %v2489
        %2491 = vmatmul.f32.gmra.mxu0 %v2376
        %v2492 = vpop.f32.mrf.mxu0
        %v2493 = vadd.f32 0.0, %v2492
        %2494 = vmatmul.f32.gmra.mxu0 %v2379
        %v2495 = vpop.f32.mrf.mxu0
        %v2496 = vadd.f32 0.0, %v2495
        %2497 = vmatmul.f32.gmra.mxu0 %v2382
        %v2498 = vpop.f32.mrf.mxu0
        %v2499 = vadd.f32 0.0, %v2498
        %2500 = vmatmul.f32.gmra.mxu0 %v2385
        %v2501 = vpop.f32.mrf.mxu0
        %v2502 = vadd.f32 0.0, %v2501
        %2503 = vmatmul.f32.gmra.mxu0 %v2388
        %v2504 = vpop.f32.mrf.mxu0
        %v2505 = vadd.f32 0.0, %v2504
        %2506 = vmatmul.f32.gmra.mxu0 %v2391
        %v2507 = vpop.f32.mrf.mxu0
        %v2508 = vadd.f32 0.0, %v2507
        %2509 = vmatmul.f32.gmra.mxu0 %v2394
        %v2510 = vpop.f32.mrf.mxu0
        %v2511 = vadd.f32 0.0, %v2510
        %2512 = vmatmul.f32.gmra.mxu0 %v2397
        %v2513 = vpop.f32.mrf.mxu0
        %v2514 = vadd.f32 0.0, %v2513
        %2515 = vmatmul.f32.gmra.mxu0 %v2400
        %v2516 = vpop.f32.mrf.mxu0
        %v2517 = vadd.f32 0.0, %v2516
        %2518 = vmatmul.f32.gmra.mxu0 %v2403
        %v2519 = vpop.f32.mrf.mxu0
        %v2520 = vadd.f32 0.0, %v2519
        %2521 = vmatmul.f32.gmra.mxu0 %v2406
        %v2522 = vpop.f32.mrf.mxu0
        %v2523 = vadd.f32 0.0, %v2522
        %2524 = vmatmul.f32.gmra.mxu0 %v2409
        %v2525 = vpop.f32.mrf.mxu0
        %v2526 = vadd.f32 0.0, %v2525
        %2527 = vmatmul.f32.gmra.mxu0 %v2412
        %v2528 = vpop.f32.mrf.mxu0
        %v2529 = vadd.f32 0.0, %v2528
        %2530 = vmatmul.f32.gmra.mxu0 %v2415
        %v2531 = vpop.f32.mrf.mxu0
        %v2532 = vadd.f32 0.0, %v2531
        %2533 = vmatmul.f32.gmra.mxu0 %v2418
        %v2534 = vpop.f32.mrf.mxu0
        %v2535 = vadd.f32 0.0, %v2534
        %2536 = vmatmul.f32.gmra.mxu0 %v2421
        %v2537 = vpop.f32.mrf.mxu0
        %v2538 = vadd.f32 0.0, %v2537
        %2539 = vmatmul.f32.gmra.mxu0 %v2424
        %v2540 = vpop.f32.mrf.mxu0
        %v2541 = vadd.f32 0.0, %v2540
        %2542 = vdwg.mxu0
        %v2543 = vld [vmem:[%s4] sm:$0x1]
        %v2545 = vperm.slane %v2543, 0
        %v2547 = vmul.f32 %v2448, %v2545
        %v2548 = vmul.f32 %v2451, %v2545
        %v2549 = vmul.f32 %v2454, %v2545
        %v2550 = vmul.f32 %v2457, %v2545
        %v2551 = vmul.f32 %v2460, %v2545
        %v2552 = vmul.f32 %v2463, %v2545
        %v2553 = vmul.f32 %v2466, %v2545
        %v2554 = vmul.f32 %v2469, %v2545
        %v2555 = vmul.f32 %v2472, %v2545
        %v2556 = vmul.f32 %v2475, %v2545
        %v2557 = vmul.f32 %v2478, %v2545
        %v2558 = vmul.f32 %v2481, %v2545
        %v2559 = vmul.f32 %v2484, %v2545
        %v2560 = vmul.f32 %v2487, %v2545
        %v2561 = vmul.f32 %v2490, %v2545
        %v2562 = vmul.f32 %v2493, %v2545
        %v2563 = vmul.f32 %v2496, %v2545
        %v2564 = vmul.f32 %v2499, %v2545
        %v2565 = vmul.f32 %v2502, %v2545
        %v2566 = vmul.f32 %v2505, %v2545
        %v2567 = vmul.f32 %v2508, %v2545
        %v2568 = vmul.f32 %v2511, %v2545
        %v2569 = vmul.f32 %v2514, %v2545
        %v2570 = vmul.f32 %v2517, %v2545
        %v2571 = vmul.f32 %v2520, %v2545
        %v2572 = vmul.f32 %v2523, %v2545
        %v2573 = vmul.f32 %v2526, %v2545
        %v2574 = vmul.f32 %v2529, %v2545
        %v2575 = vmul.f32 %v2532, %v2545
        %v2576 = vmul.f32 %v2535, %v2545
        %v2577 = vmul.f32 %v2538, %v2545
        %v2578 = vmul.f32 %v2541, %v2545
        %v2579 = vld [vmem:[%s5] sm:$0x1]
        %v2581 = vperm.slane %v2579, 0
        %v2583 = vadd.f32 %v2547, %v2581
        %v2584 = vadd.f32 %v2548, %v2581
        %v2585 = vadd.f32 %v2549, %v2581
        %v2586 = vadd.f32 %v2550, %v2581
        %v2587 = vadd.f32 %v2551, %v2581
        %v2588 = vadd.f32 %v2552, %v2581
        %v2589 = vadd.f32 %v2553, %v2581
        %v2590 = vadd.f32 %v2554, %v2581
        %v2591 = vadd.f32 %v2555, %v2581
        %v2592 = vadd.f32 %v2556, %v2581
        %v2593 = vadd.f32 %v2557, %v2581
        %v2594 = vadd.f32 %v2558, %v2581
        %v2595 = vadd.f32 %v2559, %v2581
        %v2596 = vadd.f32 %v2560, %v2581
        %v2597 = vadd.f32 %v2561, %v2581
        %v2598 = vadd.f32 %v2562, %v2581
        %v2599 = vadd.f32 %v2563, %v2581
        %v2600 = vadd.f32 %v2564, %v2581
        %v2601 = vadd.f32 %v2565, %v2581
        %v2602 = vadd.f32 %v2566, %v2581
        %v2603 = vadd.f32 %v2567, %v2581
        %v2604 = vadd.f32 %v2568, %v2581
        %v2605 = vadd.f32 %v2569, %v2581
        %v2606 = vadd.f32 %v2570, %v2581
        %v2607 = vadd.f32 %v2571, %v2581
        %v2608 = vadd.f32 %v2572, %v2581
        %v2609 = vadd.f32 %v2573, %v2581
        %v2610 = vadd.f32 %v2574, %v2581
        %v2611 = vadd.f32 %v2575, %v2581
        %v2612 = vadd.f32 %v2576, %v2581
        %v2613 = vadd.f32 %v2577, %v2581
        %v2614 = vadd.f32 %v2578, %v2581
        %v2615 = vmax.f32 %v2583, 0.0
        %v2616 = vmax.f32 %v2584, 0.0
        %v2617 = vmax.f32 %v2585, 0.0
        %v2618 = vmax.f32 %v2586, 0.0
        %v2619 = vmax.f32 %v2587, 0.0
        %v2620 = vmax.f32 %v2588, 0.0
        %v2621 = vmax.f32 %v2589, 0.0
        %v2622 = vmax.f32 %v2590, 0.0
        %v2623 = vmax.f32 %v2591, 0.0
        %v2624 = vmax.f32 %v2592, 0.0
        %v2625 = vmax.f32 %v2593, 0.0
        %v2626 = vmax.f32 %v2594, 0.0
        %v2627 = vmax.f32 %v2595, 0.0
        %v2628 = vmax.f32 %v2596, 0.0
        %v2629 = vmax.f32 %v2597, 0.0
        %v2630 = vmax.f32 %v2598, 0.0
        %v2631 = vmax.f32 %v2599, 0.0
        %v2632 = vmax.f32 %v2600, 0.0
        %v2633 = vmax.f32 %v2601, 0.0
        %v2634 = vmax.f32 %v2602, 0.0
        %v2635 = vmax.f32 %v2603, 0.0
        %v2636 = vmax.f32 %v2604, 0.0
        %v2637 = vmax.f32 %v2605, 0.0
        %v2638 = vmax.f32 %v2606, 0.0
        %v2639 = vmax.f32 %v2607, 0.0
        %v2640 = vmax.f32 %v2608, 0.0
        %v2641 = vmax.f32 %v2609, 0.0
        %v2642 = vmax.f32 %v2610, 0.0
        %v2643 = vmax.f32 %v2611, 0.0
        %v2644 = vmax.f32 %v2612, 0.0
        %v2645 = vmax.f32 %v2613, 0.0
        %v2646 = vmax.f32 %v2614, 0.0
        %2647 = vst.msk [vmem:[%s970 + $0x1] sm:$0xff] %vm277, %v2615
        %2648 = vst.msk [vmem:[%s970 + $0x9] sm:$0xff] %vm277, %v2616
        %2649 = vst.msk [vmem:[%s970 + $0x19] sm:$0xff] %vm277, %v2617
        %2650 = vst.msk [vmem:[%s970 + $0x21] sm:$0xff] %vm277, %v2618
        %2651 = vst.msk [vmem:[%s970 + $0x31] sm:$0xff] %vm277, %v2619
        %2652 = vst.msk [vmem:[%s970 + $0x39] sm:$0xff] %vm277, %v2620
        %2653 = vst.msk [vmem:[%s970 + $0x49] sm:$0xff] %vm277, %v2621
        %2654 = vst.msk [vmem:[%s970 + $0x51] sm:$0xff] %vm277, %v2622
        %2655 = vst.msk [vmem:[%s970 + $0x61] sm:$0xff] %vm277, %v2623
        %2656 = vst.msk [vmem:[%s970 + $0x69] sm:$0xff] %vm277, %v2624
        %2657 = vst.msk [vmem:[%s970 + $0x79] sm:$0xff] %vm277, %v2625
        %2658 = vst.msk [vmem:[%s970 + $0x81] sm:$0xff] %vm277, %v2626
        %2659 = vst.msk [vmem:[%s970 + $0x91] sm:$0xff] %vm277, %v2627
        %2660 = vst.msk [vmem:[%s970 + $0x99] sm:$0xff] %vm277, %v2628
        %2661 = vst.msk [vmem:[%s970 + $0xa9] sm:$0xff] %vm277, %v2629
        %2662 = vst.msk [vmem:[%s970 + $0xb1] sm:$0xff] %vm277, %v2630
        %2663 = vst.msk [vmem:[%s970 + $0xc1] sm:$0xff] %vm277, %v2631
        %2664 = vst.msk [vmem:[%s970 + $0xc9] sm:$0xff] %vm277, %v2632
        %2665 = vst.msk [vmem:[%s970 + $0xd9] sm:$0xff] %vm277, %v2633
        %2666 = vst.msk [vmem:[%s970 + $0xe1] sm:$0xff] %vm277, %v2634
        %2667 = vst.msk [vmem:[%s970 + $0xf1] sm:$0xff] %vm277, %v2635
        %2668 = vst.msk [vmem:[%s970 + $0xf9] sm:$0xff] %vm277, %v2636
        %2669 = vst.msk [vmem:[%s970 + $0x109] sm:$0xff] %vm277, %v2637
        %2670 = vst.msk [vmem:[%s970 + $0x111] sm:$0xff] %vm277, %v2638
        %2671 = vst.msk [vmem:[%s970 + $0x121] sm:$0xff] %vm277, %v2639
        %2672 = vst.msk [vmem:[%s970 + $0x129] sm:$0xff] %vm277, %v2640
        %2673 = vst.msk [vmem:[%s970 + $0x139] sm:$0xff] %vm277, %v2641
        %2674 = vst.msk [vmem:[%s970 + $0x141] sm:$0xff] %vm277, %v2642
        %2675 = vst.msk [vmem:[%s970 + $0x151] sm:$0xff] %vm277, %v2643
        %2676 = vst.msk [vmem:[%s970 + $0x159] sm:$0xff] %vm277, %v2644
        %2677 = vst.msk [vmem:[%s970 + $0x169] sm:$0xff] %vm277, %v2645
        %2678 = vst.msk [vmem:[%s970 + $0x171] sm:$0xff] %vm277, %v2646
        %v2679 = vld [vmem:[#allocation2] sm:$0xff]
        %v2680 = vld [vmem:[#allocation2 + $0x8] sm:$0xff]
        %v2681 = vld [vmem:[#allocation2 + $0x10] sm:$0x3]
        %v2682 = vld [vmem:[#allocation2 + $0x18] sm:$0xff]
        %v2683 = vld [vmem:[#allocation2 + $0x20] sm:$0xff]
        %v2684 = vld [vmem:[#allocation2 + $0x28] sm:$0x3]
        %v2685 = vld [vmem:[#allocation2 + $0x30] sm:$0xff]
        %v2686 = vld [vmem:[#allocation2 + $0x38] sm:$0xff]
        %v2687 = vld [vmem:[#allocation2 + $0x40] sm:$0x3]
        %v2688 = vld [vmem:[#allocation2 + $0x48] sm:$0xff]
        %v2689 = vld [vmem:[#allocation2 + $0x50] sm:$0xff]
        %v2690 = vld [vmem:[#allocation2 + $0x58] sm:$0x3]
        %v2691 = vld [vmem:[#allocation2 + $0x60] sm:$0xff]
        %v2692 = vld [vmem:[#allocation2 + $0x68] sm:$0xff]
        %v2693 = vld [vmem:[#allocation2 + $0x70] sm:$0x3]
        %v2694 = vld [vmem:[#allocation2 + $0x78] sm:$0xff]
        %v2695 = vld [vmem:[#allocation2 + $0x80] sm:$0xff]
        %v2696 = vld [vmem:[#allocation2 + $0x88] sm:$0x3]
        %v2697 = vld [vmem:[#allocation2 + $0x90] sm:$0xff]
        %v2698 = vld [vmem:[#allocation2 + $0x98] sm:$0xff]
        %v2699 = vld [vmem:[#allocation2 + $0xa0] sm:$0x3]
        %v2700 = vld [vmem:[#allocation2 + $0xa8] sm:$0xff]
        %v2701 = vld [vmem:[#allocation2 + $0xb0] sm:$0xff]
        %v2702 = vld [vmem:[#allocation2 + $0xb8] sm:$0x3]
        %v2703 = vld [vmem:[#allocation2 + $0xc0] sm:$0xff]
        %v2704 = vld [vmem:[#allocation2 + $0xc8] sm:$0xff]
        %v2705 = vld [vmem:[#allocation2 + $0xd0] sm:$0x3]
        %v2706 = vld [vmem:[#allocation2 + $0xd8] sm:$0xff]
        %v2707 = vld [vmem:[#allocation2 + $0xe0] sm:$0xff]
        %v2708 = vld [vmem:[#allocation2 + $0xe8] sm:$0x3]
        %v2709 = vld [vmem:[#allocation2 + $0xf0] sm:$0xff]
        %v2710 = vld [vmem:[#allocation2 + $0xf8] sm:$0xff]
        %v2711 = vld [vmem:[#allocation2 + $0x100] sm:$0x3]
        %v2712 = vld [vmem:[#allocation2 + $0x108] sm:$0xff]
        %v2713 = vld [vmem:[#allocation2 + $0x110] sm:$0xff]
        %v2714 = vld [vmem:[#allocation2 + $0x118] sm:$0x3]
        %v2715 = vld [vmem:[#allocation2 + $0x120] sm:$0xff]
        %v2716 = vld [vmem:[#allocation2 + $0x128] sm:$0xff]
        %v2717 = vld [vmem:[#allocation2 + $0x130] sm:$0x3]
        %v2718 = vld [vmem:[#allocation2 + $0x138] sm:$0xff]
        %v2719 = vld [vmem:[#allocation2 + $0x140] sm:$0xff]
        %v2720 = vld [vmem:[#allocation2 + $0x148] sm:$0x3]
        %v2721 = vld [vmem:[#allocation2 + $0x150] sm:$0xff]
        %v2722 = vld [vmem:[#allocation2 + $0x158] sm:$0xff]
        %v2723 = vld [vmem:[#allocation2 + $0x160] sm:$0x3]
        %v2724 = vld [vmem:[#allocation2 + $0x168] sm:$0xff]
        %v2725 = vld [vmem:[#allocation2 + $0x170] sm:$0xff]
        %v2726 = vld [vmem:[#allocation2 + $0x178] sm:$0x3]
        %v2727 = vld [vmem:[#allocation2 + $0x180] sm:$0xff]
        %v2728 = vld [vmem:[#allocation2 + $0x188] sm:$0xff]
        %v2729 = vld [vmem:[#allocation2 + $0x190] sm:$0x3]
        %v2730 = vld [vmem:[#allocation2 + $0x198] sm:$0xff]
        %v2731 = vld [vmem:[#allocation2 + $0x1a0] sm:$0xff]
        %v2732 = vld [vmem:[#allocation2 + $0x1a8] sm:$0x3]
        %v2781 = vrot.slane %v2679, 1
        %v2782 = vrot.slane %v2680, 1
        %v2783 = vsel %vm1105, %v2781, %v2782
        %v2784 = vrot.slane %v2681, 1
        %v2785 = vsel %vm1105, %v2782, %v2784
        %v2786 = vrot.slane %v2682, 1
        %v2787 = vrot.slane %v2683, 1
        %v2788 = vsel %vm1105, %v2786, %v2787
        %v2789 = vrot.slane %v2684, 1
        %v2790 = vsel %vm1105, %v2787, %v2789
        %v2791 = vrot.slane %v2685, 1
        %v2792 = vrot.slane %v2686, 1
        %v2793 = vsel %vm1105, %v2791, %v2792
        %v2794 = vrot.slane %v2687, 1
        %v2795 = vsel %vm1105, %v2792, %v2794
        %v2796 = vrot.slane %v2688, 1
        %v2797 = vrot.slane %v2689, 1
        %v2798 = vsel %vm1105, %v2796, %v2797
        %v2799 = vrot.slane %v2690, 1
        %v2800 = vsel %vm1105, %v2797, %v2799
        %v2801 = vrot.slane %v2691, 1
        %v2802 = vrot.slane %v2692, 1
        %v2803 = vsel %vm1105, %v2801, %v2802
        %v2804 = vrot.slane %v2693, 1
        %v2805 = vsel %vm1105, %v2802, %v2804
        %v2806 = vrot.slane %v2694, 1
        %v2807 = vrot.slane %v2695, 1
        %v2808 = vsel %vm1105, %v2806, %v2807
        %v2809 = vrot.slane %v2696, 1
        %v2810 = vsel %vm1105, %v2807, %v2809
        %v2811 = vrot.slane %v2697, 1
        %v2812 = vrot.slane %v2698, 1
        %v2813 = vsel %vm1105, %v2811, %v2812
        %v2814 = vrot.slane %v2699, 1
        %v2815 = vsel %vm1105, %v2812, %v2814
        %v2816 = vrot.slane %v2700, 1
        %v2817 = vrot.slane %v2701, 1
        %v2818 = vsel %vm1105, %v2816, %v2817
        %v2819 = vrot.slane %v2702, 1
        %v2820 = vsel %vm1105, %v2817, %v2819
        %v2821 = vrot.slane %v2703, 1
        %v2822 = vrot.slane %v2704, 1
        %v2823 = vsel %vm1105, %v2821, %v2822
        %v2824 = vrot.slane %v2705, 1
        %v2825 = vsel %vm1105, %v2822, %v2824
        %v2826 = vrot.slane %v2706, 1
        %v2827 = vrot.slane %v2707, 1
        %v2828 = vsel %vm1105, %v2826, %v2827
        %v2829 = vrot.slane %v2708, 1
        %v2830 = vsel %vm1105, %v2827, %v2829
        %v2831 = vrot.slane %v2709, 1
        %v2832 = vrot.slane %v2710, 1
        %v2833 = vsel %vm1105, %v2831, %v2832
        %v2834 = vrot.slane %v2711, 1
        %v2835 = vsel %vm1105, %v2832, %v2834
        %v2836 = vrot.slane %v2712, 1
        %v2837 = vrot.slane %v2713, 1
        %v2838 = vsel %vm1105, %v2836, %v2837
        %v2839 = vrot.slane %v2714, 1
        %v2840 = vsel %vm1105, %v2837, %v2839
        %v2841 = vrot.slane %v2715, 1
        %v2842 = vrot.slane %v2716, 1
        %v2843 = vsel %vm1105, %v2841, %v2842
        %v2844 = vrot.slane %v2717, 1
        %v2845 = vsel %vm1105, %v2842, %v2844
        %v2846 = vrot.slane %v2718, 1
        %v2847 = vrot.slane %v2719, 1
        %v2848 = vsel %vm1105, %v2846, %v2847
        %v2849 = vrot.slane %v2720, 1
        %v2850 = vsel %vm1105, %v2847, %v2849
        %v2851 = vrot.slane %v2721, 1
        %v2852 = vrot.slane %v2722, 1
        %v2853 = vsel %vm1105, %v2851, %v2852
        %v2854 = vrot.slane %v2723, 1
        %v2855 = vsel %vm1105, %v2852, %v2854
        %v2856 = vrot.slane %v2724, 1
        %v2857 = vrot.slane %v2725, 1
        %v2858 = vsel %vm1105, %v2856, %v2857
        %v2859 = vrot.slane %v2726, 1
        %v2860 = vsel %vm1105, %v2857, %v2859
        %2861 = vrot.lane.b32.xlu0 %v2783, 4
        %v2862 = vpop.permute.xlu0 %2861
        %2863 = vrot.lane.b32.xlu0 %v2785, 4
        %v2864 = vpop.permute.xlu0 %2863
        %2865 = vrot.lane.b32.xlu0 %v2788, 4
        %v2866 = vpop.permute.xlu0 %2865
        %2867 = vrot.lane.b32.xlu0 %v2790, 4
        %v2868 = vpop.permute.xlu0 %2867
        %2869 = vrot.lane.b32.xlu0 %v2793, 4
        %v2870 = vpop.permute.xlu0 %2869
        %2871 = vrot.lane.b32.xlu0 %v2795, 4
        %v2872 = vpop.permute.xlu0 %2871
        %2873 = vrot.lane.b32.xlu0 %v2798, 4
        %v2874 = vpop.permute.xlu0 %2873
        %2875 = vrot.lane.b32.xlu0 %v2800, 4
        %v2876 = vpop.permute.xlu0 %2875
        %2877 = vrot.lane.b32.xlu0 %v2803, 4
        %v2878 = vpop.permute.xlu0 %2877
        %2879 = vrot.lane.b32.xlu0 %v2805, 4
        %v2880 = vpop.permute.xlu0 %2879
        %2881 = vrot.lane.b32.xlu0 %v2808, 4
        %v2882 = vpop.permute.xlu0 %2881
        %2883 = vrot.lane.b32.xlu0 %v2810, 4
        %v2884 = vpop.permute.xlu0 %2883
        %2885 = vrot.lane.b32.xlu0 %v2813, 4
        %v2886 = vpop.permute.xlu0 %2885
        %2887 = vrot.lane.b32.xlu0 %v2815, 4
        %v2888 = vpop.permute.xlu0 %2887
        %2889 = vrot.lane.b32.xlu0 %v2818, 4
        %v2890 = vpop.permute.xlu0 %2889
        %2891 = vrot.lane.b32.xlu0 %v2820, 4
        %v2892 = vpop.permute.xlu0 %2891
        %2893 = vrot.lane.b32.xlu0 %v2823, 4
        %v2894 = vpop.permute.xlu0 %2893
        %2895 = vrot.lane.b32.xlu0 %v2825, 4
        %v2896 = vpop.permute.xlu0 %2895
        %2897 = vrot.lane.b32.xlu0 %v2828, 4
        %v2898 = vpop.permute.xlu0 %2897
        %2899 = vrot.lane.b32.xlu0 %v2830, 4
        %v2900 = vpop.permute.xlu0 %2899
        %2901 = vrot.lane.b32.xlu0 %v2833, 4
        %v2902 = vpop.permute.xlu0 %2901
        %2903 = vrot.lane.b32.xlu0 %v2835, 4
        %v2904 = vpop.permute.xlu0 %2903
        %2905 = vrot.lane.b32.xlu0 %v2838, 4
        %v2906 = vpop.permute.xlu0 %2905
        %2907 = vrot.lane.b32.xlu0 %v2840, 4
        %v2908 = vpop.permute.xlu0 %2907
        %2909 = vrot.lane.b32.xlu0 %v2843, 4
        %v2910 = vpop.permute.xlu0 %2909
        %2911 = vrot.lane.b32.xlu0 %v2845, 4
        %v2912 = vpop.permute.xlu0 %2911
        %2913 = vrot.lane.b32.xlu0 %v2848, 4
        %v2914 = vpop.permute.xlu0 %2913
        %2915 = vrot.lane.b32.xlu0 %v2850, 4
        %v2916 = vpop.permute.xlu0 %2915
        %2917 = vrot.lane.b32.xlu0 %v2853, 4
        %v2918 = vpop.permute.xlu0 %2917
        %2919 = vrot.lane.b32.xlu0 %v2855, 4
        %v2920 = vpop.permute.xlu0 %2919
        %2921 = vrot.lane.b32.xlu0 %v2858, 4
        %v2922 = vpop.permute.xlu0 %2921
        %2923 = vrot.lane.b32.xlu0 %v2860, 4
        %v2924 = vpop.permute.xlu0 %2923
        %v2957 = vrot.slane %v2679, 2
        %v2958 = vrot.slane %v2680, 2
        %v2959 = vsel %vm1282, %v2957, %v2958
        %v2960 = vrot.slane %v2681, 2
        %v2961 = vsel %vm1282, %v2958, %v2960
        %v2962 = vrot.slane %v2682, 2
        %v2963 = vrot.slane %v2683, 2
        %v2964 = vsel %vm1282, %v2962, %v2963
        %v2965 = vrot.slane %v2684, 2
        %v2966 = vsel %vm1282, %v2963, %v2965
        %v2967 = vrot.slane %v2685, 2
        %v2968 = vrot.slane %v2686, 2
        %v2969 = vsel %vm1282, %v2967, %v2968
        %v2970 = vrot.slane %v2687, 2
        %v2971 = vsel %vm1282, %v2968, %v2970
        %v2972 = vrot.slane %v2688, 2
        %v2973 = vrot.slane %v2689, 2
        %v2974 = vsel %vm1282, %v2972, %v2973
        %v2975 = vrot.slane %v2690, 2
        %v2976 = vsel %vm1282, %v2973, %v2975
        %v2977 = vrot.slane %v2691, 2
        %v2978 = vrot.slane %v2692, 2
        %v2979 = vsel %vm1282, %v2977, %v2978
        %v2980 = vrot.slane %v2693, 2
        %v2981 = vsel %vm1282, %v2978, %v2980
        %v2982 = vrot.slane %v2694, 2
        %v2983 = vrot.slane %v2695, 2
        %v2984 = vsel %vm1282, %v2982, %v2983
        %v2985 = vrot.slane %v2696, 2
        %v2986 = vsel %vm1282, %v2983, %v2985
        %v2987 = vrot.slane %v2697, 2
        %v2988 = vrot.slane %v2698, 2
        %v2989 = vsel %vm1282, %v2987, %v2988
        %v2990 = vrot.slane %v2699, 2
        %v2991 = vsel %vm1282, %v2988, %v2990
        %v2992 = vrot.slane %v2700, 2
        %v2993 = vrot.slane %v2701, 2
        %v2994 = vsel %vm1282, %v2992, %v2993
        %v2995 = vrot.slane %v2702, 2
        %v2996 = vsel %vm1282, %v2993, %v2995
        %v2997 = vrot.slane %v2703, 2
        %v2998 = vrot.slane %v2704, 2
        %v2999 = vsel %vm1282, %v2997, %v2998
        %v3000 = vrot.slane %v2705, 2
        %v3001 = vsel %vm1282, %v2998, %v3000
        %v3002 = vrot.slane %v2706, 2
        %v3003 = vrot.slane %v2707, 2
        %v3004 = vsel %vm1282, %v3002, %v3003
        %v3005 = vrot.slane %v2708, 2
        %v3006 = vsel %vm1282, %v3003, %v3005
        %v3007 = vrot.slane %v2709, 2
        %v3008 = vrot.slane %v2710, 2
        %v3009 = vsel %vm1282, %v3007, %v3008
        %v3010 = vrot.slane %v2711, 2
        %v3011 = vsel %vm1282, %v3008, %v3010
        %v3012 = vrot.slane %v2712, 2
        %v3013 = vrot.slane %v2713, 2
        %v3014 = vsel %vm1282, %v3012, %v3013
        %v3015 = vrot.slane %v2714, 2
        %v3016 = vsel %vm1282, %v3013, %v3015
        %v3017 = vrot.slane %v2715, 2
        %v3018 = vrot.slane %v2716, 2
        %v3019 = vsel %vm1282, %v3017, %v3018
        %v3020 = vrot.slane %v2717, 2
        %v3021 = vsel %vm1282, %v3018, %v3020
        %v3022 = vrot.slane %v2718, 2
        %v3023 = vrot.slane %v2719, 2
        %v3024 = vsel %vm1282, %v3022, %v3023
        %v3025 = vrot.slane %v2720, 2
        %v3026 = vsel %vm1282, %v3023, %v3025
        %v3027 = vrot.slane %v2721, 2
        %v3028 = vrot.slane %v2722, 2
        %v3029 = vsel %vm1282, %v3027, %v3028
        %v3030 = vrot.slane %v2723, 2
        %v3031 = vsel %vm1282, %v3028, %v3030
        %v3032 = vrot.slane %v2724, 2
        %v3033 = vrot.slane %v2725, 2
        %v3034 = vsel %vm1282, %v3032, %v3033
        %v3035 = vrot.slane %v2726, 2
        %v3036 = vsel %vm1282, %v3033, %v3035
        %3037 = vrot.lane.b32.xlu0 %v2959, 8
        %v3038 = vpop.permute.xlu0 %3037
        %3039 = vrot.lane.b32.xlu0 %v2961, 8
        %v3040 = vpop.permute.xlu0 %3039
        %3041 = vrot.lane.b32.xlu0 %v2964, 8
        %v3042 = vpop.permute.xlu0 %3041
        %3043 = vrot.lane.b32.xlu0 %v2966, 8
        %v3044 = vpop.permute.xlu0 %3043
        %3045 = vrot.lane.b32.xlu0 %v2969, 8
        %v3046 = vpop.permute.xlu0 %3045
        %3047 = vrot.lane.b32.xlu0 %v2971, 8
        %v3048 = vpop.permute.xlu0 %3047
        %3049 = vrot.lane.b32.xlu0 %v2974, 8
        %v3050 = vpop.permute.xlu0 %3049
        %3051 = vrot.lane.b32.xlu0 %v2976, 8
        %v3052 = vpop.permute.xlu0 %3051
        %3053 = vrot.lane.b32.xlu0 %v2979, 8
        %v3054 = vpop.permute.xlu0 %3053
        %3055 = vrot.lane.b32.xlu0 %v2981, 8
        %v3056 = vpop.permute.xlu0 %3055
        %3057 = vrot.lane.b32.xlu0 %v2984, 8
        %v3058 = vpop.permute.xlu0 %3057
        %3059 = vrot.lane.b32.xlu0 %v2986, 8
        %v3060 = vpop.permute.xlu0 %3059
        %3061 = vrot.lane.b32.xlu0 %v2989, 8
        %v3062 = vpop.permute.xlu0 %3061
        %3063 = vrot.lane.b32.xlu0 %v2991, 8
        %v3064 = vpop.permute.xlu0 %3063
        %3065 = vrot.lane.b32.xlu0 %v2994, 8
        %v3066 = vpop.permute.xlu0 %3065
        %3067 = vrot.lane.b32.xlu0 %v2996, 8
        %v3068 = vpop.permute.xlu0 %3067
        %3069 = vrot.lane.b32.xlu0 %v2999, 8
        %v3070 = vpop.permute.xlu0 %3069
        %3071 = vrot.lane.b32.xlu0 %v3001, 8
        %v3072 = vpop.permute.xlu0 %3071
        %3073 = vrot.lane.b32.xlu0 %v3004, 8
        %v3074 = vpop.permute.xlu0 %3073
        %3075 = vrot.lane.b32.xlu0 %v3006, 8
        %v3076 = vpop.permute.xlu0 %3075
        %3077 = vrot.lane.b32.xlu0 %v3009, 8
        %v3078 = vpop.permute.xlu0 %3077
        %3079 = vrot.lane.b32.xlu0 %v3011, 8
        %v3080 = vpop.permute.xlu0 %3079
        %3081 = vrot.lane.b32.xlu0 %v3014, 8
        %v3082 = vpop.permute.xlu0 %3081
        %3083 = vrot.lane.b32.xlu0 %v3016, 8
        %v3084 = vpop.permute.xlu0 %3083
        %3085 = vrot.lane.b32.xlu0 %v3019, 8
        %v3086 = vpop.permute.xlu0 %3085
        %3087 = vrot.lane.b32.xlu0 %v3021, 8
        %v3088 = vpop.permute.xlu0 %3087
        %3089 = vrot.lane.b32.xlu0 %v3024, 8
        %v3090 = vpop.permute.xlu0 %3089
        %3091 = vrot.lane.b32.xlu0 %v3026, 8
        %v3092 = vpop.permute.xlu0 %3091
        %3093 = vrot.lane.b32.xlu0 %v3029, 8
        %v3094 = vpop.permute.xlu0 %3093
        %3095 = vrot.lane.b32.xlu0 %v3031, 8
        %v3096 = vpop.permute.xlu0 %3095
        %3097 = vrot.lane.b32.xlu0 %v3034, 8
        %v3098 = vpop.permute.xlu0 %3097
        %3099 = vrot.lane.b32.xlu0 %v3036, 8
        %v3100 = vpop.permute.xlu0 %3099
        %3135 = vrot.lane.b32.xlu0 %v2682, 12
        %v3136 = vpop.permute.xlu0 %3135
        %3137 = vrot.lane.b32.xlu0 %v2683, 12
        %v3138 = vpop.permute.xlu0 %3137
        %3139 = vrot.lane.b32.xlu0 %v2685, 12
        %v3140 = vpop.permute.xlu0 %3139
        %3141 = vrot.lane.b32.xlu0 %v2686, 12
        %v3142 = vpop.permute.xlu0 %3141
        %3143 = vrot.lane.b32.xlu0 %v2688, 12
        %v3144 = vpop.permute.xlu0 %3143
        %3145 = vrot.lane.b32.xlu0 %v2689, 12
        %v3146 = vpop.permute.xlu0 %3145
        %3147 = vrot.lane.b32.xlu0 %v2691, 12
        %v3148 = vpop.permute.xlu0 %3147
        %3149 = vrot.lane.b32.xlu0 %v2692, 12
        %v3150 = vpop.permute.xlu0 %3149
        %3151 = vrot.lane.b32.xlu0 %v2694, 12
        %v3152 = vpop.permute.xlu0 %3151
        %3153 = vrot.lane.b32.xlu0 %v2695, 12
        %v3154 = vpop.permute.xlu0 %3153
        %3155 = vrot.lane.b32.xlu0 %v2697, 12
        %v3156 = vpop.permute.xlu0 %3155
        %3157 = vrot.lane.b32.xlu0 %v2698, 12
        %v3158 = vpop.permute.xlu0 %3157
        %3159 = vrot.lane.b32.xlu0 %v2700, 12
        %v3160 = vpop.permute.xlu0 %3159
        %3161 = vrot.lane.b32.xlu0 %v2701, 12
        %v3162 = vpop.permute.xlu0 %3161
        %3163 = vrot.lane.b32.xlu0 %v2703, 12
        %v3164 = vpop.permute.xlu0 %3163
        %3165 = vrot.lane.b32.xlu0 %v2704, 12
        %v3166 = vpop.permute.xlu0 %3165
        %3167 = vrot.lane.b32.xlu0 %v2706, 12
        %v3168 = vpop.permute.xlu0 %3167
        %3169 = vrot.lane.b32.xlu0 %v2707, 12
        %v3170 = vpop.permute.xlu0 %3169
        %3171 = vrot.lane.b32.xlu0 %v2709, 12
        %v3172 = vpop.permute.xlu0 %3171
        %3173 = vrot.lane.b32.xlu0 %v2710, 12
        %v3174 = vpop.permute.xlu0 %3173
        %3175 = vrot.lane.b32.xlu0 %v2712, 12
        %v3176 = vpop.permute.xlu0 %3175
        %3177 = vrot.lane.b32.xlu0 %v2713, 12
        %v3178 = vpop.permute.xlu0 %3177
        %3179 = vrot.lane.b32.xlu0 %v2715, 12
        %v3180 = vpop.permute.xlu0 %3179
        %3181 = vrot.lane.b32.xlu0 %v2716, 12
        %v3182 = vpop.permute.xlu0 %3181
        %3183 = vrot.lane.b32.xlu0 %v2718, 12
        %v3184 = vpop.permute.xlu0 %3183
        %3185 = vrot.lane.b32.xlu0 %v2719, 12
        %v3186 = vpop.permute.xlu0 %3185
        %3187 = vrot.lane.b32.xlu0 %v2721, 12
        %v3188 = vpop.permute.xlu0 %3187
        %3189 = vrot.lane.b32.xlu0 %v2722, 12
        %v3190 = vpop.permute.xlu0 %3189
        %3191 = vrot.lane.b32.xlu0 %v2724, 12
        %v3192 = vpop.permute.xlu0 %3191
        %3193 = vrot.lane.b32.xlu0 %v2725, 12
        %v3194 = vpop.permute.xlu0 %3193
        %3195 = vrot.lane.b32.xlu0 %v2727, 12
        %v3196 = vpop.permute.xlu0 %3195
        %3197 = vrot.lane.b32.xlu0 %v2728, 12
        %v3198 = vpop.permute.xlu0 %3197
        %v3232 = vrot.slane %v2727, 1
        %v3233 = vrot.slane %v2728, 1
        %v3234 = vsel %vm1105, %v3232, %v3233
        %v3235 = vrot.slane %v2729, 1
        %v3236 = vsel %vm1105, %v3233, %v3235
        %3237 = vrot.lane.b32.xlu0 %v2788, 16
        %v3238 = vpop.permute.xlu0 %3237
        %3239 = vrot.lane.b32.xlu0 %v2790, 16
        %v3240 = vpop.permute.xlu0 %3239
        %3241 = vrot.lane.b32.xlu0 %v2793, 16
        %v3242 = vpop.permute.xlu0 %3241
        %3243 = vrot.lane.b32.xlu0 %v2795, 16
        %v3244 = vpop.permute.xlu0 %3243
        %3245 = vrot.lane.b32.xlu0 %v2798, 16
        %v3246 = vpop.permute.xlu0 %3245
        %3247 = vrot.lane.b32.xlu0 %v2800, 16
        %v3248 = vpop.permute.xlu0 %3247
        %3249 = vrot.lane.b32.xlu0 %v2803, 16
        %v3250 = vpop.permute.xlu0 %3249
        %3251 = vrot.lane.b32.xlu0 %v2805, 16
        %v3252 = vpop.permute.xlu0 %3251
        %3253 = vrot.lane.b32.xlu0 %v2808, 16
        %v3254 = vpop.permute.xlu0 %3253
        %3255 = vrot.lane.b32.xlu0 %v2810, 16
        %v3256 = vpop.permute.xlu0 %3255
        %3257 = vrot.lane.b32.xlu0 %v2813, 16
        %v3258 = vpop.permute.xlu0 %3257
        %3259 = vrot.lane.b32.xlu0 %v2815, 16
        %v3260 = vpop.permute.xlu0 %3259
        %3261 = vrot.lane.b32.xlu0 %v2818, 16
        %v3262 = vpop.permute.xlu0 %3261
        %3263 = vrot.lane.b32.xlu0 %v2820, 16
        %v3264 = vpop.permute.xlu0 %3263
        %3265 = vrot.lane.b32.xlu0 %v2823, 16
        %v3266 = vpop.permute.xlu0 %3265
        %3267 = vrot.lane.b32.xlu0 %v2825, 16
        %v3268 = vpop.permute.xlu0 %3267
        %3269 = vrot.lane.b32.xlu0 %v2828, 16
        %v3270 = vpop.permute.xlu0 %3269
        %3271 = vrot.lane.b32.xlu0 %v2830, 16
        %v3272 = vpop.permute.xlu0 %3271
        %3273 = vrot.lane.b32.xlu0 %v2833, 16
        %v3274 = vpop.permute.xlu0 %3273
        %3275 = vrot.lane.b32.xlu0 %v2835, 16
        %v3276 = vpop.permute.xlu0 %3275
        %3277 = vrot.lane.b32.xlu0 %v2838, 16
        %v3278 = vpop.permute.xlu0 %3277
        %3279 = vrot.lane.b32.xlu0 %v2840, 16
        %v3280 = vpop.permute.xlu0 %3279
        %3281 = vrot.lane.b32.xlu0 %v2843, 16
        %v3282 = vpop.permute.xlu0 %3281
        %3283 = vrot.lane.b32.xlu0 %v2845, 16
        %v3284 = vpop.permute.xlu0 %3283
        %3285 = vrot.lane.b32.xlu0 %v2848, 16
        %v3286 = vpop.permute.xlu0 %3285
        %3287 = vrot.lane.b32.xlu0 %v2850, 16
        %v3288 = vpop.permute.xlu0 %3287
        %3289 = vrot.lane.b32.xlu0 %v2853, 16
        %v3290 = vpop.permute.xlu0 %3289
        %3291 = vrot.lane.b32.xlu0 %v2855, 16
        %v3292 = vpop.permute.xlu0 %3291
        %3293 = vrot.lane.b32.xlu0 %v2858, 16
        %v3294 = vpop.permute.xlu0 %3293
        %3295 = vrot.lane.b32.xlu0 %v2860, 16
        %v3296 = vpop.permute.xlu0 %3295
        %3297 = vrot.lane.b32.xlu0 %v3234, 16
        %v3298 = vpop.permute.xlu0 %3297
        %3299 = vrot.lane.b32.xlu0 %v3236, 16
        %v3300 = vpop.permute.xlu0 %3299
        %v3333 = vrot.slane %v2727, 2
        %v3334 = vrot.slane %v2728, 2
        %v3335 = vsel %vm1282, %v3333, %v3334
        %v3336 = vrot.slane %v2729, 2
        %v3337 = vsel %vm1282, %v3334, %v3336
        %3338 = vrot.lane.b32.xlu0 %v2964, 20
        %v3339 = vpop.permute.xlu0 %3338
        %3340 = vrot.lane.b32.xlu0 %v2966, 20
        %v3341 = vpop.permute.xlu0 %3340
        %3342 = vrot.lane.b32.xlu0 %v2969, 20
        %v3343 = vpop.permute.xlu0 %3342
        %3344 = vrot.lane.b32.xlu0 %v2971, 20
        %v3345 = vpop.permute.xlu0 %3344
        %3346 = vrot.lane.b32.xlu0 %v2974, 20
        %v3347 = vpop.permute.xlu0 %3346
        %3348 = vrot.lane.b32.xlu0 %v2976, 20
        %v3349 = vpop.permute.xlu0 %3348
        %3350 = vrot.lane.b32.xlu0 %v2979, 20
        %v3351 = vpop.permute.xlu0 %3350
        %3352 = vrot.lane.b32.xlu0 %v2981, 20
        %v3353 = vpop.permute.xlu0 %3352
        %3354 = vrot.lane.b32.xlu0 %v2984, 20
        %v3355 = vpop.permute.xlu0 %3354
        %3356 = vrot.lane.b32.xlu0 %v2986, 20
        %v3357 = vpop.permute.xlu0 %3356
        %3358 = vrot.lane.b32.xlu0 %v2989, 20
        %v3359 = vpop.permute.xlu0 %3358
        %3360 = vrot.lane.b32.xlu0 %v2991, 20
        %v3361 = vpop.permute.xlu0 %3360
        %3362 = vrot.lane.b32.xlu0 %v2994, 20
        %v3363 = vpop.permute.xlu0 %3362
        %3364 = vrot.lane.b32.xlu0 %v2996, 20
        %v3365 = vpop.permute.xlu0 %3364
        %3366 = vrot.lane.b32.xlu0 %v2999, 20
        %v3367 = vpop.permute.xlu0 %3366
        %3368 = vrot.lane.b32.xlu0 %v3001, 20
        %v3369 = vpop.permute.xlu0 %3368
        %3370 = vrot.lane.b32.xlu0 %v3004, 20
        %v3371 = vpop.permute.xlu0 %3370
        %3372 = vrot.lane.b32.xlu0 %v3006, 20
        %v3373 = vpop.permute.xlu0 %3372
        %3374 = vrot.lane.b32.xlu0 %v3009, 20
        %v3375 = vpop.permute.xlu0 %3374
        %3376 = vrot.lane.b32.xlu0 %v3011, 20
        %v3377 = vpop.permute.xlu0 %3376
        %3378 = vrot.lane.b32.xlu0 %v3014, 20
        %v3379 = vpop.permute.xlu0 %3378
        %3380 = vrot.lane.b32.xlu0 %v3016, 20
        %v3381 = vpop.permute.xlu0 %3380
        %3382 = vrot.lane.b32.xlu0 %v3019, 20
        %v3383 = vpop.permute.xlu0 %3382
        %3384 = vrot.lane.b32.xlu0 %v3021, 20
        %v3385 = vpop.permute.xlu0 %3384
        %3386 = vrot.lane.b32.xlu0 %v3024, 20
        %v3387 = vpop.permute.xlu0 %3386
        %3388 = vrot.lane.b32.xlu0 %v3026, 20
        %v3389 = vpop.permute.xlu0 %3388
        %3390 = vrot.lane.b32.xlu0 %v3029, 20
        %v3391 = vpop.permute.xlu0 %3390
        %3392 = vrot.lane.b32.xlu0 %v3031, 20
        %v3393 = vpop.permute.xlu0 %3392
        %3394 = vrot.lane.b32.xlu0 %v3034, 20
        %v3395 = vpop.permute.xlu0 %3394
        %3396 = vrot.lane.b32.xlu0 %v3036, 20
        %v3397 = vpop.permute.xlu0 %3396
        %3398 = vrot.lane.b32.xlu0 %v3335, 20
        %v3399 = vpop.permute.xlu0 %3398
        %3400 = vrot.lane.b32.xlu0 %v3337, 20
        %v3401 = vpop.permute.xlu0 %3400
        %3436 = vrot.lane.b32.xlu0 %v2685, 24
        %v3437 = vpop.permute.xlu0 %3436
        %3438 = vrot.lane.b32.xlu0 %v2686, 24
        %v3439 = vpop.permute.xlu0 %3438
        %3440 = vrot.lane.b32.xlu0 %v2688, 24
        %v3441 = vpop.permute.xlu0 %3440
        %3442 = vrot.lane.b32.xlu0 %v2689, 24
        %v3443 = vpop.permute.xlu0 %3442
        %3444 = vrot.lane.b32.xlu0 %v2691, 24
        %v3445 = vpop.permute.xlu0 %3444
        %3446 = vrot.lane.b32.xlu0 %v2692, 24
        %v3447 = vpop.permute.xlu0 %3446
        %3448 = vrot.lane.b32.xlu0 %v2694, 24
        %v3449 = vpop.permute.xlu0 %3448
        %3450 = vrot.lane.b32.xlu0 %v2695, 24
        %v3451 = vpop.permute.xlu0 %3450
        %3452 = vrot.lane.b32.xlu0 %v2697, 24
        %v3453 = vpop.permute.xlu0 %3452
        %3454 = vrot.lane.b32.xlu0 %v2698, 24
        %v3455 = vpop.permute.xlu0 %3454
        %3456 = vrot.lane.b32.xlu0 %v2700, 24
        %v3457 = vpop.permute.xlu0 %3456
        %3458 = vrot.lane.b32.xlu0 %v2701, 24
        %v3459 = vpop.permute.xlu0 %3458
        %3460 = vrot.lane.b32.xlu0 %v2703, 24
        %v3461 = vpop.permute.xlu0 %3460
        %3462 = vrot.lane.b32.xlu0 %v2704, 24
        %v3463 = vpop.permute.xlu0 %3462
        %3464 = vrot.lane.b32.xlu0 %v2706, 24
        %v3465 = vpop.permute.xlu0 %3464
        %3466 = vrot.lane.b32.xlu0 %v2707, 24
        %v3467 = vpop.permute.xlu0 %3466
        %3468 = vrot.lane.b32.xlu0 %v2709, 24
        %v3469 = vpop.permute.xlu0 %3468
        %3470 = vrot.lane.b32.xlu0 %v2710, 24
        %v3471 = vpop.permute.xlu0 %3470
        %3472 = vrot.lane.b32.xlu0 %v2712, 24
        %v3473 = vpop.permute.xlu0 %3472
        %3474 = vrot.lane.b32.xlu0 %v2713, 24
        %v3475 = vpop.permute.xlu0 %3474
        %3476 = vrot.lane.b32.xlu0 %v2715, 24
        %v3477 = vpop.permute.xlu0 %3476
        %3478 = vrot.lane.b32.xlu0 %v2716, 24
        %v3479 = vpop.permute.xlu0 %3478
        %3480 = vrot.lane.b32.xlu0 %v2718, 24
        %v3481 = vpop.permute.xlu0 %3480
        %3482 = vrot.lane.b32.xlu0 %v2719, 24
        %v3483 = vpop.permute.xlu0 %3482
        %3484 = vrot.lane.b32.xlu0 %v2721, 24
        %v3485 = vpop.permute.xlu0 %3484
        %3486 = vrot.lane.b32.xlu0 %v2722, 24
        %v3487 = vpop.permute.xlu0 %3486
        %3488 = vrot.lane.b32.xlu0 %v2724, 24
        %v3489 = vpop.permute.xlu0 %3488
        %3490 = vrot.lane.b32.xlu0 %v2725, 24
        %v3491 = vpop.permute.xlu0 %3490
        %3492 = vrot.lane.b32.xlu0 %v2727, 24
        %v3493 = vpop.permute.xlu0 %3492
        %3494 = vrot.lane.b32.xlu0 %v2728, 24
        %v3495 = vpop.permute.xlu0 %3494
        %3496 = vrot.lane.b32.xlu0 %v2730, 24
        %v3497 = vpop.permute.xlu0 %3496
        %3498 = vrot.lane.b32.xlu0 %v2731, 24
        %v3499 = vpop.permute.xlu0 %3498
        %v3533 = vrot.slane %v2730, 1
        %v3534 = vrot.slane %v2731, 1
        %v3535 = vsel %vm1105, %v3533, %v3534
        %v3536 = vrot.slane %v2732, 1
        %v3537 = vsel %vm1105, %v3534, %v3536
        %3538 = vrot.lane.b32.xlu0 %v2793, 28
        %v3539 = vpop.permute.xlu0 %3538
        %3540 = vrot.lane.b32.xlu0 %v2795, 28
        %v3541 = vpop.permute.xlu0 %3540
        %3542 = vrot.lane.b32.xlu0 %v2798, 28
        %v3543 = vpop.permute.xlu0 %3542
        %3544 = vrot.lane.b32.xlu0 %v2800, 28
        %v3545 = vpop.permute.xlu0 %3544
        %3546 = vrot.lane.b32.xlu0 %v2803, 28
        %v3547 = vpop.permute.xlu0 %3546
        %3548 = vrot.lane.b32.xlu0 %v2805, 28
        %v3549 = vpop.permute.xlu0 %3548
        %3550 = vrot.lane.b32.xlu0 %v2808, 28
        %v3551 = vpop.permute.xlu0 %3550
        %3552 = vrot.lane.b32.xlu0 %v2810, 28
        %v3553 = vpop.permute.xlu0 %3552
        %3554 = vrot.lane.b32.xlu0 %v2813, 28
        %v3555 = vpop.permute.xlu0 %3554
        %3556 = vrot.lane.b32.xlu0 %v2815, 28
        %v3557 = vpop.permute.xlu0 %3556
        %3558 = vrot.lane.b32.xlu0 %v2818, 28
        %v3559 = vpop.permute.xlu0 %3558
        %3560 = vrot.lane.b32.xlu0 %v2820, 28
        %v3561 = vpop.permute.xlu0 %3560
        %3562 = vrot.lane.b32.xlu0 %v2823, 28
        %v3563 = vpop.permute.xlu0 %3562
        %3564 = vrot.lane.b32.xlu0 %v2825, 28
        %v3565 = vpop.permute.xlu0 %3564
        %3566 = vrot.lane.b32.xlu0 %v2828, 28
        %v3567 = vpop.permute.xlu0 %3566
        %3568 = vrot.lane.b32.xlu0 %v2830, 28
        %v3569 = vpop.permute.xlu0 %3568
        %3570 = vrot.lane.b32.xlu0 %v2833, 28
        %v3571 = vpop.permute.xlu0 %3570
        %3572 = vrot.lane.b32.xlu0 %v2835, 28
        %v3573 = vpop.permute.xlu0 %3572
        %3574 = vrot.lane.b32.xlu0 %v2838, 28
        %v3575 = vpop.permute.xlu0 %3574
        %3576 = vrot.lane.b32.xlu0 %v2840, 28
        %v3577 = vpop.permute.xlu0 %3576
        %3578 = vrot.lane.b32.xlu0 %v2843, 28
        %v3579 = vpop.permute.xlu0 %3578
        %3580 = vrot.lane.b32.xlu0 %v2845, 28
        %v3581 = vpop.permute.xlu0 %3580
        %3582 = vrot.lane.b32.xlu0 %v2848, 28
        %v3583 = vpop.permute.xlu0 %3582
        %3584 = vrot.lane.b32.xlu0 %v2850, 28
        %v3585 = vpop.permute.xlu0 %3584
        %3586 = vrot.lane.b32.xlu0 %v2853, 28
        %v3587 = vpop.permute.xlu0 %3586
        %3588 = vrot.lane.b32.xlu0 %v2855, 28
        %v3589 = vpop.permute.xlu0 %3588
        %3590 = vrot.lane.b32.xlu0 %v2858, 28
        %v3591 = vpop.permute.xlu0 %3590
        %3592 = vrot.lane.b32.xlu0 %v2860, 28
        %v3593 = vpop.permute.xlu0 %3592
        %3594 = vrot.lane.b32.xlu0 %v3234, 28
        %v3595 = vpop.permute.xlu0 %3594
        %3596 = vrot.lane.b32.xlu0 %v3236, 28
        %v3597 = vpop.permute.xlu0 %3596
        %3598 = vrot.lane.b32.xlu0 %v3535, 28
        %v3599 = vpop.permute.xlu0 %3598
        %3600 = vrot.lane.b32.xlu0 %v3537, 28
        %v3601 = vpop.permute.xlu0 %3600
        %v3634 = vrot.slane %v2730, 2
        %v3635 = vrot.slane %v2731, 2
        %v3636 = vsel %vm1282, %v3634, %v3635
        %v3637 = vrot.slane %v2732, 2
        %v3638 = vsel %vm1282, %v3635, %v3637
        %3639 = vrot.lane.b32.xlu0 %v2969, 32
        %v3640 = vpop.permute.xlu0 %3639
        %3641 = vrot.lane.b32.xlu0 %v2971, 32
        %v3642 = vpop.permute.xlu0 %3641
        %3643 = vrot.lane.b32.xlu0 %v2974, 32
        %v3644 = vpop.permute.xlu0 %3643
        %3645 = vrot.lane.b32.xlu0 %v2976, 32
        %v3646 = vpop.permute.xlu0 %3645
        %3647 = vrot.lane.b32.xlu0 %v2979, 32
        %v3648 = vpop.permute.xlu0 %3647
        %3649 = vrot.lane.b32.xlu0 %v2981, 32
        %v3650 = vpop.permute.xlu0 %3649
        %3651 = vrot.lane.b32.xlu0 %v2984, 32
        %v3652 = vpop.permute.xlu0 %3651
        %3653 = vrot.lane.b32.xlu0 %v2986, 32
        %v3654 = vpop.permute.xlu0 %3653
        %3655 = vrot.lane.b32.xlu0 %v2989, 32
        %v3656 = vpop.permute.xlu0 %3655
        %3657 = vrot.lane.b32.xlu0 %v2991, 32
        %v3658 = vpop.permute.xlu0 %3657
        %3659 = vrot.lane.b32.xlu0 %v2994, 32
        %v3660 = vpop.permute.xlu0 %3659
        %3661 = vrot.lane.b32.xlu0 %v2996, 32
        %v3662 = vpop.permute.xlu0 %3661
        %3663 = vrot.lane.b32.xlu0 %v2999, 32
        %v3664 = vpop.permute.xlu0 %3663
        %3665 = vrot.lane.b32.xlu0 %v3001, 32
        %v3666 = vpop.permute.xlu0 %3665
        %3667 = vrot.lane.b32.xlu0 %v3004, 32
        %v3668 = vpop.permute.xlu0 %3667
        %3669 = vrot.lane.b32.xlu0 %v3006, 32
        %v3670 = vpop.permute.xlu0 %3669
        %3671 = vrot.lane.b32.xlu0 %v3009, 32
        %v3672 = vpop.permute.xlu0 %3671
        %3673 = vrot.lane.b32.xlu0 %v3011, 32
        %v3674 = vpop.permute.xlu0 %3673
        %3675 = vrot.lane.b32.xlu0 %v3014, 32
        %v3676 = vpop.permute.xlu0 %3675
        %3677 = vrot.lane.b32.xlu0 %v3016, 32
        %v3678 = vpop.permute.xlu0 %3677
        %3679 = vrot.lane.b32.xlu0 %v3019, 32
        %v3680 = vpop.permute.xlu0 %3679
        %3681 = vrot.lane.b32.xlu0 %v3021, 32
        %v3682 = vpop.permute.xlu0 %3681
        %3683 = vrot.lane.b32.xlu0 %v3024, 32
        %v3684 = vpop.permute.xlu0 %3683
        %3685 = vrot.lane.b32.xlu0 %v3026, 32
        %v3686 = vpop.permute.xlu0 %3685
        %3687 = vrot.lane.b32.xlu0 %v3029, 32
        %v3688 = vpop.permute.xlu0 %3687
        %3689 = vrot.lane.b32.xlu0 %v3031, 32
        %v3690 = vpop.permute.xlu0 %3689
        %3691 = vrot.lane.b32.xlu0 %v3034, 32
        %v3692 = vpop.permute.xlu0 %3691
        %3693 = vrot.lane.b32.xlu0 %v3036, 32
        %v3694 = vpop.permute.xlu0 %3693
        %3695 = vrot.lane.b32.xlu0 %v3335, 32
        %v3696 = vpop.permute.xlu0 %3695
        %3697 = vrot.lane.b32.xlu0 %v3337, 32
        %v3698 = vpop.permute.xlu0 %3697
        %3699 = vrot.lane.b32.xlu0 %v3636, 32
        %v3700 = vpop.permute.xlu0 %3699
        %3701 = vrot.lane.b32.xlu0 %v3638, 32
        %v3702 = vpop.permute.xlu0 %3701
        %v3735 = vsel %vm277, %v2679, %v2862
        %v3736 = vsel %vm277, %v2680, %v2864
        %v3737 = vsel %vm277, %v2682, %v2866
        %v3738 = vsel %vm277, %v2683, %v2868
        %v3739 = vsel %vm277, %v2685, %v2870
        %v3740 = vsel %vm277, %v2686, %v2872
        %v3741 = vsel %vm277, %v2688, %v2874
        %v3742 = vsel %vm277, %v2689, %v2876
        %v3743 = vsel %vm277, %v2691, %v2878
        %v3744 = vsel %vm277, %v2692, %v2880
        %v3745 = vsel %vm277, %v2694, %v2882
        %v3746 = vsel %vm277, %v2695, %v2884
        %v3747 = vsel %vm277, %v2697, %v2886
        %v3748 = vsel %vm277, %v2698, %v2888
        %v3749 = vsel %vm277, %v2700, %v2890
        %v3750 = vsel %vm277, %v2701, %v2892
        %v3751 = vsel %vm277, %v2703, %v2894
        %v3752 = vsel %vm277, %v2704, %v2896
        %v3753 = vsel %vm277, %v2706, %v2898
        %v3754 = vsel %vm277, %v2707, %v2900
        %v3755 = vsel %vm277, %v2709, %v2902
        %v3756 = vsel %vm277, %v2710, %v2904
        %v3757 = vsel %vm277, %v2712, %v2906
        %v3758 = vsel %vm277, %v2713, %v2908
        %v3759 = vsel %vm277, %v2715, %v2910
        %v3760 = vsel %vm277, %v2716, %v2912
        %v3761 = vsel %vm277, %v2718, %v2914
        %v3762 = vsel %vm277, %v2719, %v2916
        %v3763 = vsel %vm277, %v2721, %v2918
        %v3764 = vsel %vm277, %v2722, %v2920
        %v3765 = vsel %vm277, %v2724, %v2922
        %v3766 = vsel %vm277, %v2725, %v2924
        %v3767 = vsel %vm2093, %v3735, %v3038
        %v3768 = vsel %vm2093, %v3736, %v3040
        %v3769 = vsel %vm2093, %v3737, %v3042
        %v3770 = vsel %vm2093, %v3738, %v3044
        %v3771 = vsel %vm2093, %v3739, %v3046
        %v3772 = vsel %vm2093, %v3740, %v3048
        %v3773 = vsel %vm2093, %v3741, %v3050
        %v3774 = vsel %vm2093, %v3742, %v3052
        %v3775 = vsel %vm2093, %v3743, %v3054
        %v3776 = vsel %vm2093, %v3744, %v3056
        %v3777 = vsel %vm2093, %v3745, %v3058
        %v3778 = vsel %vm2093, %v3746, %v3060
        %v3779 = vsel %vm2093, %v3747, %v3062
        %v3780 = vsel %vm2093, %v3748, %v3064
        %v3781 = vsel %vm2093, %v3749, %v3066
        %v3782 = vsel %vm2093, %v3750, %v3068
        %v3783 = vsel %vm2093, %v3751, %v3070
        %v3784 = vsel %vm2093, %v3752, %v3072
        %v3785 = vsel %vm2093, %v3753, %v3074
        %v3786 = vsel %vm2093, %v3754, %v3076
        %v3787 = vsel %vm2093, %v3755, %v3078
        %v3788 = vsel %vm2093, %v3756, %v3080
        %v3789 = vsel %vm2093, %v3757, %v3082
        %v3790 = vsel %vm2093, %v3758, %v3084
        %v3791 = vsel %vm2093, %v3759, %v3086
        %v3792 = vsel %vm2093, %v3760, %v3088
        %v3793 = vsel %vm2093, %v3761, %v3090
        %v3794 = vsel %vm2093, %v3762, %v3092
        %v3795 = vsel %vm2093, %v3763, %v3094
        %v3796 = vsel %vm2093, %v3764, %v3096
        %v3797 = vsel %vm2093, %v3765, %v3098
        %v3798 = vsel %vm2093, %v3766, %v3100
        %v3799 = vsel %vm2126, %v3767, %v3136
        %v3800 = vsel %vm2126, %v3768, %v3138
        %v3801 = vsel %vm2126, %v3769, %v3140
        %v3802 = vsel %vm2126, %v3770, %v3142
        %v3803 = vsel %vm2126, %v3771, %v3144
        %v3804 = vsel %vm2126, %v3772, %v3146
        %v3805 = vsel %vm2126, %v3773, %v3148
        %v3806 = vsel %vm2126, %v3774, %v3150
        %v3807 = vsel %vm2126, %v3775, %v3152
        %v3808 = vsel %vm2126, %v3776, %v3154
        %v3809 = vsel %vm2126, %v3777, %v3156
        %v3810 = vsel %vm2126, %v3778, %v3158
        %v3811 = vsel %vm2126, %v3779, %v3160
        %v3812 = vsel %vm2126, %v3780, %v3162
        %v3813 = vsel %vm2126, %v3781, %v3164
        %v3814 = vsel %vm2126, %v3782, %v3166
        %v3815 = vsel %vm2126, %v3783, %v3168
        %v3816 = vsel %vm2126, %v3784, %v3170
        %v3817 = vsel %vm2126, %v3785, %v3172
        %v3818 = vsel %vm2126, %v3786, %v3174
        %v3819 = vsel %vm2126, %v3787, %v3176
        %v3820 = vsel %vm2126, %v3788, %v3178
        %v3821 = vsel %vm2126, %v3789, %v3180
        %v3822 = vsel %vm2126, %v3790, %v3182
        %v3823 = vsel %vm2126, %v3791, %v3184
        %v3824 = vsel %vm2126, %v3792, %v3186
        %v3825 = vsel %vm2126, %v3793, %v3188
        %v3826 = vsel %vm2126, %v3794, %v3190
        %v3827 = vsel %vm2126, %v3795, %v3192
        %v3828 = vsel %vm2126, %v3796, %v3194
        %v3829 = vsel %vm2126, %v3797, %v3196
        %v3830 = vsel %vm2126, %v3798, %v3198
        %v3831 = vsel %vm2159, %v3799, %v3238
        %v3832 = vsel %vm2159, %v3800, %v3240
        %v3833 = vsel %vm2159, %v3801, %v3242
        %v3834 = vsel %vm2159, %v3802, %v3244
        %v3835 = vsel %vm2159, %v3803, %v3246
        %v3836 = vsel %vm2159, %v3804, %v3248
        %v3837 = vsel %vm2159, %v3805, %v3250
        %v3838 = vsel %vm2159, %v3806, %v3252
        %v3839 = vsel %vm2159, %v3807, %v3254
        %v3840 = vsel %vm2159, %v3808, %v3256
        %v3841 = vsel %vm2159, %v3809, %v3258
        %v3842 = vsel %vm2159, %v3810, %v3260
        %v3843 = vsel %vm2159, %v3811, %v3262
        %v3844 = vsel %vm2159, %v3812, %v3264
        %v3845 = vsel %vm2159, %v3813, %v3266
        %v3846 = vsel %vm2159, %v3814, %v3268
        %v3847 = vsel %vm2159, %v3815, %v3270
        %v3848 = vsel %vm2159, %v3816, %v3272
        %v3849 = vsel %vm2159, %v3817, %v3274
        %v3850 = vsel %vm2159, %v3818, %v3276
        %v3851 = vsel %vm2159, %v3819, %v3278
        %v3852 = vsel %vm2159, %v3820, %v3280
        %v3853 = vsel %vm2159, %v3821, %v3282
        %v3854 = vsel %vm2159, %v3822, %v3284
        %v3855 = vsel %vm2159, %v3823, %v3286
        %v3856 = vsel %vm2159, %v3824, %v3288
        %v3857 = vsel %vm2159, %v3825, %v3290
        %v3858 = vsel %vm2159, %v3826, %v3292
        %v3859 = vsel %vm2159, %v3827, %v3294
        %v3860 = vsel %vm2159, %v3828, %v3296
        %v3861 = vsel %vm2159, %v3829, %v3298
        %v3862 = vsel %vm2159, %v3830, %v3300
        %v3863 = vsel %vm2192, %v3831, %v3339
        %v3864 = vsel %vm2192, %v3832, %v3341
        %v3865 = vsel %vm2192, %v3833, %v3343
        %v3866 = vsel %vm2192, %v3834, %v3345
        %v3867 = vsel %vm2192, %v3835, %v3347
        %v3868 = vsel %vm2192, %v3836, %v3349
        %v3869 = vsel %vm2192, %v3837, %v3351
        %v3870 = vsel %vm2192, %v3838, %v3353
        %v3871 = vsel %vm2192, %v3839, %v3355
        %v3872 = vsel %vm2192, %v3840, %v3357
        %v3873 = vsel %vm2192, %v3841, %v3359
        %v3874 = vsel %vm2192, %v3842, %v3361
        %v3875 = vsel %vm2192, %v3843, %v3363
        %v3876 = vsel %vm2192, %v3844, %v3365
        %v3877 = vsel %vm2192, %v3845, %v3367
        %v3878 = vsel %vm2192, %v3846, %v3369
        %v3879 = vsel %vm2192, %v3847, %v3371
        %v3880 = vsel %vm2192, %v3848, %v3373
        %v3881 = vsel %vm2192, %v3849, %v3375
        %v3882 = vsel %vm2192, %v3850, %v3377
        %v3883 = vsel %vm2192, %v3851, %v3379
        %v3884 = vsel %vm2192, %v3852, %v3381
        %v3885 = vsel %vm2192, %v3853, %v3383
        %v3886 = vsel %vm2192, %v3854, %v3385
        %v3887 = vsel %vm2192, %v3855, %v3387
        %v3888 = vsel %vm2192, %v3856, %v3389
        %v3889 = vsel %vm2192, %v3857, %v3391
        %v3890 = vsel %vm2192, %v3858, %v3393
        %v3891 = vsel %vm2192, %v3859, %v3395
        %v3892 = vsel %vm2192, %v3860, %v3397
        %v3893 = vsel %vm2192, %v3861, %v3399
        %v3894 = vsel %vm2192, %v3862, %v3401
        %v3895 = vsel %vm2225, %v3863, %v3437
        %v3896 = vsel %vm2225, %v3864, %v3439
        %v3897 = vsel %vm2225, %v3865, %v3441
        %v3898 = vsel %vm2225, %v3866, %v3443
        %v3899 = vsel %vm2225, %v3867, %v3445
        %v3900 = vsel %vm2225, %v3868, %v3447
        %v3901 = vsel %vm2225, %v3869, %v3449
        %v3902 = vsel %vm2225, %v3870, %v3451
        %v3903 = vsel %vm2225, %v3871, %v3453
        %v3904 = vsel %vm2225, %v3872, %v3455
        %v3905 = vsel %vm2225, %v3873, %v3457
        %v3906 = vsel %vm2225, %v3874, %v3459
        %v3907 = vsel %vm2225, %v3875, %v3461
        %v3908 = vsel %vm2225, %v3876, %v3463
        %v3909 = vsel %vm2225, %v3877, %v3465
        %v3910 = vsel %vm2225, %v3878, %v3467
        %v3911 = vsel %vm2225, %v3879, %v3469
        %v3912 = vsel %vm2225, %v3880, %v3471
        %v3913 = vsel %vm2225, %v3881, %v3473
        %v3914 = vsel %vm2225, %v3882, %v3475
        %v3915 = vsel %vm2225, %v3883, %v3477
        %v3916 = vsel %vm2225, %v3884, %v3479
        %v3917 = vsel %vm2225, %v3885, %v3481
        %v3918 = vsel %vm2225, %v3886, %v3483
        %v3919 = vsel %vm2225, %v3887, %v3485
        %v3920 = vsel %vm2225, %v3888, %v3487
        %v3921 = vsel %vm2225, %v3889, %v3489
        %v3922 = vsel %vm2225, %v3890, %v3491
        %v3923 = vsel %vm2225, %v3891, %v3493
        %v3924 = vsel %vm2225, %v3892, %v3495
        %v3925 = vsel %vm2225, %v3893, %v3497
        %v3926 = vsel %vm2225, %v3894, %v3499
        %v3927 = vsel %vm2258, %v3895, %v3539
        %v3928 = vsel %vm2258, %v3896, %v3541
        %v3929 = vsel %vm2258, %v3897, %v3543
        %v3930 = vsel %vm2258, %v3898, %v3545
        %v3931 = vsel %vm2258, %v3899, %v3547
        %v3932 = vsel %vm2258, %v3900, %v3549
        %v3933 = vsel %vm2258, %v3901, %v3551
        %v3934 = vsel %vm2258, %v3902, %v3553
        %v3935 = vsel %vm2258, %v3903, %v3555
        %v3936 = vsel %vm2258, %v3904, %v3557
        %v3937 = vsel %vm2258, %v3905, %v3559
        %v3938 = vsel %vm2258, %v3906, %v3561
        %v3939 = vsel %vm2258, %v3907, %v3563
        %v3940 = vsel %vm2258, %v3908, %v3565
        %v3941 = vsel %vm2258, %v3909, %v3567
        %v3942 = vsel %vm2258, %v3910, %v3569
        %v3943 = vsel %vm2258, %v3911, %v3571
        %v3944 = vsel %vm2258, %v3912, %v3573
        %v3945 = vsel %vm2258, %v3913, %v3575
        %v3946 = vsel %vm2258, %v3914, %v3577
        %v3947 = vsel %vm2258, %v3915, %v3579
        %v3948 = vsel %vm2258, %v3916, %v3581
        %v3949 = vsel %vm2258, %v3917, %v3583
        %v3950 = vsel %vm2258, %v3918, %v3585
        %v3951 = vsel %vm2258, %v3919, %v3587
        %v3952 = vsel %vm2258, %v3920, %v3589
        %v3953 = vsel %vm2258, %v3921, %v3591
        %v3954 = vsel %vm2258, %v3922, %v3593
        %v3955 = vsel %vm2258, %v3923, %v3595
        %v3956 = vsel %vm2258, %v3924, %v3597
        %v3957 = vsel %vm2258, %v3925, %v3599
        %v3958 = vsel %vm2258, %v3926, %v3601
        %v3959 = vsel %vm2291, %v3927, %v3640
        %v3960 = vsel %vm2291, %v3928, %v3642
        %v3961 = vsel %vm2291, %v3929, %v3644
        %v3962 = vsel %vm2291, %v3930, %v3646
        %v3963 = vsel %vm2291, %v3931, %v3648
        %v3964 = vsel %vm2291, %v3932, %v3650
        %v3965 = vsel %vm2291, %v3933, %v3652
        %v3966 = vsel %vm2291, %v3934, %v3654
        %v3967 = vsel %vm2291, %v3935, %v3656
        %v3968 = vsel %vm2291, %v3936, %v3658
        %v3969 = vsel %vm2291, %v3937, %v3660
        %v3970 = vsel %vm2291, %v3938, %v3662
        %v3971 = vsel %vm2291, %v3939, %v3664
        %v3972 = vsel %vm2291, %v3940, %v3666
        %v3973 = vsel %vm2291, %v3941, %v3668
        %v3974 = vsel %vm2291, %v3942, %v3670
        %v3975 = vsel %vm2291, %v3943, %v3672
        %v3976 = vsel %vm2291, %v3944, %v3674
        %v3977 = vsel %vm2291, %v3945, %v3676
        %v3978 = vsel %vm2291, %v3946, %v3678
        %v3979 = vsel %vm2291, %v3947, %v3680
        %v3980 = vsel %vm2291, %v3948, %v3682
        %v3981 = vsel %vm2291, %v3949, %v3684
        %v3982 = vsel %vm2291, %v3950, %v3686
        %v3983 = vsel %vm2291, %v3951, %v3688
        %v3984 = vsel %vm2291, %v3952, %v3690
        %v3985 = vsel %vm2291, %v3953, %v3692
        %v3986 = vsel %vm2291, %v3954, %v3694
        %v3987 = vsel %vm2291, %v3955, %v3696
        %v3988 = vsel %vm2291, %v3956, %v3698
        %v3989 = vsel %vm2291, %v3957, %v3700
        %v3990 = vsel %vm2291, %v3958, %v3702
        %v3991 = vld [vmem:[%s6] sm:$0xff]
        %v3992 = vld [vmem:[%s6 + $0x8] sm:$0xff]
        %v3993 = vld [vmem:[%s6 + $0x10] sm:$0xff]
        %v3994 = vld [vmem:[%s6 + $0x18] sm:$0xff]
        %v3995 = vld [vmem:[%s6 + $0x20] sm:$0xf]
        %v3997 = vsel %vm2329, %v3959, 0
        %v4000 = vsel %vm2329, %v3960, 0
        %v4003 = vsel %vm2329, %v3961, 0
        %v4006 = vsel %vm2329, %v3962, 0
        %v4009 = vsel %vm2329, %v3963, 0
        %v4012 = vsel %vm2329, %v3964, 0
        %v4015 = vsel %vm2329, %v3965, 0
        %v4018 = vsel %vm2329, %v3966, 0
        %v4021 = vsel %vm2329, %v3967, 0
        %v4024 = vsel %vm2329, %v3968, 0
        %v4027 = vsel %vm2329, %v3969, 0
        %v4030 = vsel %vm2329, %v3970, 0
        %v4033 = vsel %vm2329, %v3971, 0
        %v4036 = vsel %vm2329, %v3972, 0
        %v4039 = vsel %vm2329, %v3973, 0
        %v4042 = vsel %vm2329, %v3974, 0
        %v4045 = vsel %vm2329, %v3975, 0
        %v4048 = vsel %vm2329, %v3976, 0
        %v4051 = vsel %vm2329, %v3977, 0
        %v4054 = vsel %vm2329, %v3978, 0
        %v4057 = vsel %vm2329, %v3979, 0
        %v4060 = vsel %vm2329, %v3980, 0
        %v4063 = vsel %vm2329, %v3981, 0
        %v4066 = vsel %vm2329, %v3982, 0
        %v4069 = vsel %vm2329, %v3983, 0
        %v4072 = vsel %vm2329, %v3984, 0
        %v4075 = vsel %vm2329, %v3985, 0
        %v4078 = vsel %vm2329, %v3986, 0
        %v4081 = vsel %vm2329, %v3987, 0
        %v4084 = vsel %vm2329, %v3988, 0
        %v4087 = vsel %vm2329, %v3989, 0
        %v4090 = vsel %vm2329, %v3990, 0
        %v4093 = vsel %vm2426, %v3995, 0
        %4095 = vmatpush.msra.mxu0 0.0
        %4096 = vmatpush.msra.mxu0 0.0
        %4097 = vmatpush.msra.mxu0 0.0
        %4098 = vmatpush.msra.mxu0 0.0
        %4099 = vmatpush.msra.mxu0 0.0
        %4100 = vmatpush.msra.mxu0 0.0
        %4101 = vmatpush.msra.mxu0 0.0
        %4102 = vmatpush.msra.mxu0 0.0
        %4103 = vmatpush.msra.mxu0 0.0
        %4104 = vmatpush.msra.mxu0 0.0
        %4105 = vmatpush.msra.mxu0 0.0
        %4106 = vmatpush.msra.mxu0 %v4093
        %4107 = vmatpush.msra.mxu0 %v3994
        %4108 = vmatpush.msra.mxu0 %v3993
        %4109 = vmatpush.msra.mxu0 %v3992
        %4110 = vmatpush.msra.mxu0 %v3991
        %4111 = vmatmul.f32.gmra.mxu0 %v3997
        %v4112 = vpop.f32.mrf.mxu0
        %v4113 = vadd.f32 0.0, %v4112
        %4114 = vmatmul.f32.gmra.mxu0 %v4000
        %v4115 = vpop.f32.mrf.mxu0
        %v4116 = vadd.f32 0.0, %v4115
        %4117 = vmatmul.f32.gmra.mxu0 %v4003
        %v4118 = vpop.f32.mrf.mxu0
        %v4119 = vadd.f32 0.0, %v4118
        %4120 = vmatmul.f32.gmra.mxu0 %v4006
        %v4121 = vpop.f32.mrf.mxu0
        %v4122 = vadd.f32 0.0, %v4121
        %4123 = vmatmul.f32.gmra.mxu0 %v4009
        %v4124 = vpop.f32.mrf.mxu0
        %v4125 = vadd.f32 0.0, %v4124
        %4126 = vmatmul.f32.gmra.mxu0 %v4012
        %v4127 = vpop.f32.mrf.mxu0
        %v4128 = vadd.f32 0.0, %v4127
        %4129 = vmatmul.f32.gmra.mxu0 %v4015
        %v4130 = vpop.f32.mrf.mxu0
        %v4131 = vadd.f32 0.0, %v4130
        %4132 = vmatmul.f32.gmra.mxu0 %v4018
        %v4133 = vpop.f32.mrf.mxu0
        %v4134 = vadd.f32 0.0, %v4133
        %4135 = vmatmul.f32.gmra.mxu0 %v4021
        %v4136 = vpop.f32.mrf.mxu0
        %v4137 = vadd.f32 0.0, %v4136
        %4138 = vmatmul.f32.gmra.mxu0 %v4024
        %v4139 = vpop.f32.mrf.mxu0
        %v4140 = vadd.f32 0.0, %v4139
        %4141 = vmatmul.f32.gmra.mxu0 %v4027
        %v4142 = vpop.f32.mrf.mxu0
        %v4143 = vadd.f32 0.0, %v4142
        %4144 = vmatmul.f32.gmra.mxu0 %v4030
        %v4145 = vpop.f32.mrf.mxu0
        %v4146 = vadd.f32 0.0, %v4145
        %4147 = vmatmul.f32.gmra.mxu0 %v4033
        %v4148 = vpop.f32.mrf.mxu0
        %v4149 = vadd.f32 0.0, %v4148
        %4150 = vmatmul.f32.gmra.mxu0 %v4036
        %v4151 = vpop.f32.mrf.mxu0
        %v4152 = vadd.f32 0.0, %v4151
        %4153 = vmatmul.f32.gmra.mxu0 %v4039
        %v4154 = vpop.f32.mrf.mxu0
        %v4155 = vadd.f32 0.0, %v4154
        %4156 = vmatmul.f32.gmra.mxu0 %v4042
        %v4157 = vpop.f32.mrf.mxu0
        %v4158 = vadd.f32 0.0, %v4157
        %4159 = vmatmul.f32.gmra.mxu0 %v4045
        %v4160 = vpop.f32.mrf.mxu0
        %v4161 = vadd.f32 0.0, %v4160
        %4162 = vmatmul.f32.gmra.mxu0 %v4048
        %v4163 = vpop.f32.mrf.mxu0
        %v4164 = vadd.f32 0.0, %v4163
        %4165 = vmatmul.f32.gmra.mxu0 %v4051
        %v4166 = vpop.f32.mrf.mxu0
        %v4167 = vadd.f32 0.0, %v4166
        %4168 = vmatmul.f32.gmra.mxu0 %v4054
        %v4169 = vpop.f32.mrf.mxu0
        %v4170 = vadd.f32 0.0, %v4169
        %4171 = vmatmul.f32.gmra.mxu0 %v4057
        %v4172 = vpop.f32.mrf.mxu0
        %v4173 = vadd.f32 0.0, %v4172
        %4174 = vmatmul.f32.gmra.mxu0 %v4060
        %v4175 = vpop.f32.mrf.mxu0
        %v4176 = vadd.f32 0.0, %v4175
        %4177 = vmatmul.f32.gmra.mxu0 %v4063
        %v4178 = vpop.f32.mrf.mxu0
        %v4179 = vadd.f32 0.0, %v4178
        %4180 = vmatmul.f32.gmra.mxu0 %v4066
        %v4181 = vpop.f32.mrf.mxu0
        %v4182 = vadd.f32 0.0, %v4181
        %4183 = vmatmul.f32.gmra.mxu0 %v4069
        %v4184 = vpop.f32.mrf.mxu0
        %v4185 = vadd.f32 0.0, %v4184
        %4186 = vmatmul.f32.gmra.mxu0 %v4072
        %v4187 = vpop.f32.mrf.mxu0
        %v4188 = vadd.f32 0.0, %v4187
        %4189 = vmatmul.f32.gmra.mxu0 %v4075
        %v4190 = vpop.f32.mrf.mxu0
        %v4191 = vadd.f32 0.0, %v4190
        %4192 = vmatmul.f32.gmra.mxu0 %v4078
        %v4193 = vpop.f32.mrf.mxu0
        %v4194 = vadd.f32 0.0, %v4193
        %4195 = vmatmul.f32.gmra.mxu0 %v4081
        %v4196 = vpop.f32.mrf.mxu0
        %v4197 = vadd.f32 0.0, %v4196
        %4198 = vmatmul.f32.gmra.mxu0 %v4084
        %v4199 = vpop.f32.mrf.mxu0
        %v4200 = vadd.f32 0.0, %v4199
        %4201 = vmatmul.f32.gmra.mxu0 %v4087
        %v4202 = vpop.f32.mrf.mxu0
        %v4203 = vadd.f32 0.0, %v4202
        %4204 = vmatmul.f32.gmra.mxu0 %v4090
        %v4205 = vpop.f32.mrf.mxu0
        %v4206 = vadd.f32 0.0, %v4205
        %4207 = vdwg.mxu0
        %v4208 = vadd.f32 %v4113, %v515
        %v4209 = vadd.f32 %v4116, %v627
        %v4210 = vadd.f32 %v4119, %v517
        %v4211 = vadd.f32 %v4122, %v629
        %v4212 = vadd.f32 %v4125, %v519
        %v4213 = vadd.f32 %v4128, %v631
        %v4214 = vadd.f32 %v4131, %v521
        %v4215 = vadd.f32 %v4134, %v633
        %v4216 = vadd.f32 %v4137, %v523
        %v4217 = vadd.f32 %v4140, %v635
        %v4218 = vadd.f32 %v4143, %v525
        %v4219 = vadd.f32 %v4146, %v637
        %v4220 = vadd.f32 %v4149, %v527
        %v4221 = vadd.f32 %v4152, %v639
        %v4222 = vadd.f32 %v4155, %v529
        %v4223 = vadd.f32 %v4158, %v641
        %v4224 = vadd.f32 %v4161, %v739
        %v4225 = vadd.f32 %v4164, %v851
        %v4226 = vadd.f32 %v4167, %v741
        %v4227 = vadd.f32 %v4170, %v853
        %v4228 = vadd.f32 %v4173, %v743
        %v4229 = vadd.f32 %v4176, %v855
        %v4230 = vadd.f32 %v4179, %v745
        %v4231 = vadd.f32 %v4182, %v857
        %v4232 = vadd.f32 %v4185, %v747
        %v4233 = vadd.f32 %v4188, %v859
        %v4234 = vadd.f32 %v4191, %v749
        %v4235 = vadd.f32 %v4194, %v861
        %v4236 = vadd.f32 %v4197, %v751
        %v4237 = vadd.f32 %v4200, %v863
        %v4238 = vadd.f32 %v4203, %v753
        %v4239 = vadd.f32 %v4206, %v865
        %v4240 = vrot.slane %v4212, 4
        %v4241 = vsel %vm418, %v4240, %v4208
        %v4242 = vrot.slane %v4208, 4
        %v4243 = vsel %vm418, %v4212, %v4242
        %v4245 = vunpack.c.l.s4 1983009808
        %v4246 = vunpack.c.0.s8 %v4245
        %v4247 = vperm.slane %v4241, %v4246
        %v4249 = vunpack.c.l.s4 1983009808
        %v4250 = vunpack.c.0.s8 %v4249
        %v4251 = vperm.slane %v4243, %v4250
        %v4252 = vrot.slane %v4214, 4
        %v4253 = vsel %vm418, %v4252, %v4210
        %v4254 = vrot.slane %v4210, 4
        %v4255 = vsel %vm418, %v4214, %v4254
        %v4257 = vunpack.c.l.s4 1983009808
        %v4258 = vunpack.c.0.s8 %v4257
        %v4259 = vperm.slane %v4253, %v4258
        %v4261 = vunpack.c.l.s4 1983009808
        %v4262 = vunpack.c.0.s8 %v4261
        %v4263 = vperm.slane %v4255, %v4262
        %v4264 = vrot.slane %v4220, 4
        %v4265 = vsel %vm418, %v4264, %v4216
        %v4266 = vrot.slane %v4216, 4
        %v4267 = vsel %vm418, %v4220, %v4266
        %v4269 = vunpack.c.l.s4 1983009808
        %v4270 = vunpack.c.0.s8 %v4269
        %v4271 = vperm.slane %v4265, %v4270
        %v4273 = vunpack.c.l.s4 1983009808
        %v4274 = vunpack.c.0.s8 %v4273
        %v4275 = vperm.slane %v4267, %v4274
        %v4276 = vrot.slane %v4222, 4
        %v4277 = vsel %vm418, %v4276, %v4218
        %v4278 = vrot.slane %v4218, 4
        %v4279 = vsel %vm418, %v4222, %v4278
        %v4281 = vunpack.c.l.s4 1983009808
        %v4282 = vunpack.c.0.s8 %v4281
        %v4283 = vperm.slane %v4277, %v4282
        %v4285 = vunpack.c.l.s4 1983009808
        %v4286 = vunpack.c.0.s8 %v4285
        %v4287 = vperm.slane %v4279, %v4286
        %v4288 = vrot.slane %v4259, 4
        %v4289 = vsel %vm418, %v4288, %v4247
        %v4290 = vrot.slane %v4247, 4
        %v4291 = vsel %vm418, %v4259, %v4290
        %v4293 = vunpack.c.l.s4 1934713408
        %v4294 = vunpack.c.0.s8 %v4293
        %v4295 = vperm.slane %v4289, %v4294
        %v4297 = vunpack.c.l.s4 1934713408
        %v4298 = vunpack.c.0.s8 %v4297
        %v4299 = vperm.slane %v4291, %v4298
        %v4300 = vrot.slane %v4263, 4
        %v4301 = vsel %vm418, %v4300, %v4251
        %v4302 = vrot.slane %v4251, 4
        %v4303 = vsel %vm418, %v4263, %v4302
        %v4305 = vunpack.c.l.s4 1934713408
        %v4306 = vunpack.c.0.s8 %v4305
        %v4307 = vperm.slane %v4301, %v4306
        %v4309 = vunpack.c.l.s4 1934713408
        %v4310 = vunpack.c.0.s8 %v4309
        %v4311 = vperm.slane %v4303, %v4310
        %v4312 = vrot.slane %v4283, 4
        %v4313 = vsel %vm418, %v4312, %v4271
        %v4314 = vrot.slane %v4271, 4
        %v4315 = vsel %vm418, %v4283, %v4314
        %v4317 = vunpack.c.l.s4 1934713408
        %v4318 = vunpack.c.0.s8 %v4317
        %v4319 = vperm.slane %v4313, %v4318
        %v4321 = vunpack.c.l.s4 1934713408
        %v4322 = vunpack.c.0.s8 %v4321
        %v4323 = vperm.slane %v4315, %v4322
        %v4324 = vrot.slane %v4287, 4
        %v4325 = vsel %vm418, %v4324, %v4275
        %v4326 = vrot.slane %v4275, 4
        %v4327 = vsel %vm418, %v4287, %v4326
        %v4329 = vunpack.c.l.s4 1934713408
        %v4330 = vunpack.c.0.s8 %v4329
        %v4331 = vperm.slane %v4325, %v4330
        %v4333 = vunpack.c.l.s4 1934713408
        %v4334 = vunpack.c.0.s8 %v4333
        %v4335 = vperm.slane %v4327, %v4334
        %v4336 = vrot.slane %v4319, 4
        %v4337 = vsel %vm418, %v4336, %v4295
        %v4338 = vrot.slane %v4295, 4
        %v4339 = vsel %vm418, %v4319, %v4338
        %v4340 = vrot.slane %v4323, 4
        %v4341 = vsel %vm418, %v4340, %v4299
        %v4342 = vrot.slane %v4299, 4
        %v4343 = vsel %vm418, %v4323, %v4342
        %v4344 = vrot.slane %v4331, 4
        %v4345 = vsel %vm418, %v4344, %v4307
        %v4346 = vrot.slane %v4307, 4
        %v4347 = vsel %vm418, %v4331, %v4346
        %v4348 = vrot.slane %v4335, 4
        %v4349 = vsel %vm418, %v4348, %v4311
        %v4350 = vrot.slane %v4311, 4
        %v4351 = vsel %vm418, %v4335, %v4350
        %v4352 = vrot.slane %v4228, 4
        %v4353 = vsel %vm418, %v4352, %v4224
        %v4354 = vrot.slane %v4224, 4
        %v4355 = vsel %vm418, %v4228, %v4354
        %v4357 = vunpack.c.l.s4 1983009808
        %v4358 = vunpack.c.0.s8 %v4357
        %v4359 = vperm.slane %v4353, %v4358
        %v4361 = vunpack.c.l.s4 1983009808
        %v4362 = vunpack.c.0.s8 %v4361
        %v4363 = vperm.slane %v4355, %v4362
        %v4364 = vrot.slane %v4230, 4
        %v4365 = vsel %vm418, %v4364, %v4226
        %v4366 = vrot.slane %v4226, 4
        %v4367 = vsel %vm418, %v4230, %v4366
        %v4369 = vunpack.c.l.s4 1983009808
        %v4370 = vunpack.c.0.s8 %v4369
        %v4371 = vperm.slane %v4365, %v4370
        %v4373 = vunpack.c.l.s4 1983009808
        %v4374 = vunpack.c.0.s8 %v4373
        %v4375 = vperm.slane %v4367, %v4374
        %v4376 = vrot.slane %v4236, 4
        %v4377 = vsel %vm418, %v4376, %v4232
        %v4378 = vrot.slane %v4232, 4
        %v4379 = vsel %vm418, %v4236, %v4378
        %v4381 = vunpack.c.l.s4 1983009808
        %v4382 = vunpack.c.0.s8 %v4381
        %v4383 = vperm.slane %v4377, %v4382
        %v4385 = vunpack.c.l.s4 1983009808
        %v4386 = vunpack.c.0.s8 %v4385
        %v4387 = vperm.slane %v4379, %v4386
        %v4388 = vrot.slane %v4238, 4
        %v4389 = vsel %vm418, %v4388, %v4234
        %v4390 = vrot.slane %v4234, 4
        %v4391 = vsel %vm418, %v4238, %v4390
        %v4393 = vunpack.c.l.s4 1983009808
        %v4394 = vunpack.c.0.s8 %v4393
        %v4395 = vperm.slane %v4389, %v4394
        %v4397 = vunpack.c.l.s4 1983009808
        %v4398 = vunpack.c.0.s8 %v4397
        %v4399 = vperm.slane %v4391, %v4398
        %v4400 = vrot.slane %v4371, 4
        %v4401 = vsel %vm418, %v4400, %v4359
        %v4402 = vrot.slane %v4359, 4
        %v4403 = vsel %vm418, %v4371, %v4402
        %v4405 = vunpack.c.l.s4 1934713408
        %v4406 = vunpack.c.0.s8 %v4405
        %v4407 = vperm.slane %v4401, %v4406
        %v4409 = vunpack.c.l.s4 1934713408
        %v4410 = vunpack.c.0.s8 %v4409
        %v4411 = vperm.slane %v4403, %v4410
        %v4412 = vrot.slane %v4375, 4
        %v4413 = vsel %vm418, %v4412, %v4363
        %v4414 = vrot.slane %v4363, 4
        %v4415 = vsel %vm418, %v4375, %v4414
        %v4417 = vunpack.c.l.s4 1934713408
        %v4418 = vunpack.c.0.s8 %v4417
        %v4419 = vperm.slane %v4413, %v4418
        %v4421 = vunpack.c.l.s4 1934713408
        %v4422 = vunpack.c.0.s8 %v4421
        %v4423 = vperm.slane %v4415, %v4422
        %v4424 = vrot.slane %v4395, 4
        %v4425 = vsel %vm418, %v4424, %v4383
        %v4426 = vrot.slane %v4383, 4
        %v4427 = vsel %vm418, %v4395, %v4426
        %v4429 = vunpack.c.l.s4 1934713408
        %v4430 = vunpack.c.0.s8 %v4429
        %v4431 = vperm.slane %v4425, %v4430
        %v4433 = vunpack.c.l.s4 1934713408
        %v4434 = vunpack.c.0.s8 %v4433
        %v4435 = vperm.slane %v4427, %v4434
        %v4436 = vrot.slane %v4399, 4
        %v4437 = vsel %vm418, %v4436, %v4387
        %v4438 = vrot.slane %v4387, 4
        %v4439 = vsel %vm418, %v4399, %v4438
        %v4441 = vunpack.c.l.s4 1934713408
        %v4442 = vunpack.c.0.s8 %v4441
        %v4443 = vperm.slane %v4437, %v4442
        %v4445 = vunpack.c.l.s4 1934713408
        %v4446 = vunpack.c.0.s8 %v4445
        %v4447 = vperm.slane %v4439, %v4446
        %v4448 = vrot.slane %v4431, 4
        %v4449 = vsel %vm418, %v4448, %v4407
        %v4450 = vrot.slane %v4407, 4
        %v4451 = vsel %vm418, %v4431, %v4450
        %v4452 = vrot.slane %v4435, 4
        %v4453 = vsel %vm418, %v4452, %v4411
        %v4454 = vrot.slane %v4411, 4
        %v4455 = vsel %vm418, %v4435, %v4454
        %v4456 = vrot.slane %v4443, 4
        %v4457 = vsel %vm418, %v4456, %v4419
        %v4458 = vrot.slane %v4419, 4
        %v4459 = vsel %vm418, %v4443, %v4458
        %v4460 = vrot.slane %v4447, 4
        %v4461 = vsel %vm418, %v4460, %v4423
        %v4462 = vrot.slane %v4423, 4
        %v4463 = vsel %vm418, %v4447, %v4462
        %v4464 = vrot.slane %v4213, 4
        %v4465 = vsel %vm418, %v4464, %v4209
        %v4466 = vrot.slane %v4209, 4
        %v4467 = vsel %vm418, %v4213, %v4466
        %v4469 = vunpack.c.l.s4 1983009808
        %v4470 = vunpack.c.0.s8 %v4469
        %v4471 = vperm.slane %v4465, %v4470
        %v4473 = vunpack.c.l.s4 1983009808
        %v4474 = vunpack.c.0.s8 %v4473
        %v4475 = vperm.slane %v4467, %v4474
        %v4476 = vrot.slane %v4215, 4
        %v4477 = vsel %vm418, %v4476, %v4211
        %v4478 = vrot.slane %v4211, 4
        %v4479 = vsel %vm418, %v4215, %v4478
        %v4481 = vunpack.c.l.s4 1983009808
        %v4482 = vunpack.c.0.s8 %v4481
        %v4483 = vperm.slane %v4477, %v4482
        %v4485 = vunpack.c.l.s4 1983009808
        %v4486 = vunpack.c.0.s8 %v4485
        %v4487 = vperm.slane %v4479, %v4486
        %v4488 = vrot.slane %v4221, 4
        %v4489 = vsel %vm418, %v4488, %v4217
        %v4490 = vrot.slane %v4217, 4
        %v4491 = vsel %vm418, %v4221, %v4490
        %v4493 = vunpack.c.l.s4 1983009808
        %v4494 = vunpack.c.0.s8 %v4493
        %v4495 = vperm.slane %v4489, %v4494
        %v4497 = vunpack.c.l.s4 1983009808
        %v4498 = vunpack.c.0.s8 %v4497
        %v4499 = vperm.slane %v4491, %v4498
        %v4500 = vrot.slane %v4223, 4
        %v4501 = vsel %vm418, %v4500, %v4219
        %v4502 = vrot.slane %v4219, 4
        %v4503 = vsel %vm418, %v4223, %v4502
        %v4505 = vunpack.c.l.s4 1983009808
        %v4506 = vunpack.c.0.s8 %v4505
        %v4507 = vperm.slane %v4501, %v4506
        %v4509 = vunpack.c.l.s4 1983009808
        %v4510 = vunpack.c.0.s8 %v4509
        %v4511 = vperm.slane %v4503, %v4510
        %v4512 = vrot.slane %v4483, 4
        %v4513 = vsel %vm418, %v4512, %v4471
        %v4514 = vrot.slane %v4471, 4
        %v4515 = vsel %vm418, %v4483, %v4514
        %v4517 = vunpack.c.l.s4 1934713408
        %v4518 = vunpack.c.0.s8 %v4517
        %v4519 = vperm.slane %v4513, %v4518
        %v4521 = vunpack.c.l.s4 1934713408
        %v4522 = vunpack.c.0.s8 %v4521
        %v4523 = vperm.slane %v4515, %v4522
        %v4524 = vrot.slane %v4487, 4
        %v4525 = vsel %vm418, %v4524, %v4475
        %v4526 = vrot.slane %v4475, 4
        %v4527 = vsel %vm418, %v4487, %v4526
        %v4529 = vunpack.c.l.s4 1934713408
        %v4530 = vunpack.c.0.s8 %v4529
        %v4531 = vperm.slane %v4525, %v4530
        %v4533 = vunpack.c.l.s4 1934713408
        %v4534 = vunpack.c.0.s8 %v4533
        %v4535 = vperm.slane %v4527, %v4534
        %v4536 = vrot.slane %v4507, 4
        %v4537 = vsel %vm418, %v4536, %v4495
        %v4538 = vrot.slane %v4495, 4
        %v4539 = vsel %vm418, %v4507, %v4538
        %v4541 = vunpack.c.l.s4 1934713408
        %v4542 = vunpack.c.0.s8 %v4541
        %v4543 = vperm.slane %v4537, %v4542
        %v4545 = vunpack.c.l.s4 1934713408
        %v4546 = vunpack.c.0.s8 %v4545
        %v4547 = vperm.slane %v4539, %v4546
        %v4548 = vrot.slane %v4511, 4
        %v4549 = vsel %vm418, %v4548, %v4499
        %v4550 = vrot.slane %v4499, 4
        %v4551 = vsel %vm418, %v4511, %v4550
        %v4553 = vunpack.c.l.s4 1934713408
        %v4554 = vunpack.c.0.s8 %v4553
        %v4555 = vperm.slane %v4549, %v4554
        %v4557 = vunpack.c.l.s4 1934713408
        %v4558 = vunpack.c.0.s8 %v4557
        %v4559 = vperm.slane %v4551, %v4558
        %v4560 = vrot.slane %v4543, 4
        %v4561 = vsel %vm418, %v4560, %v4519
        %v4562 = vrot.slane %v4519, 4
        %v4563 = vsel %vm418, %v4543, %v4562
        %v4564 = vrot.slane %v4547, 4
        %v4565 = vsel %vm418, %v4564, %v4523
        %v4566 = vrot.slane %v4523, 4
        %v4567 = vsel %vm418, %v4547, %v4566
        %v4568 = vrot.slane %v4555, 4
        %v4569 = vsel %vm418, %v4568, %v4531
        %v4570 = vrot.slane %v4531, 4
        %v4571 = vsel %vm418, %v4555, %v4570
        %v4572 = vrot.slane %v4559, 4
        %v4573 = vsel %vm418, %v4572, %v4535
        %v4574 = vrot.slane %v4535, 4
        %v4575 = vsel %vm418, %v4559, %v4574
        %v4576 = vrot.slane %v4229, 4
        %v4577 = vsel %vm418, %v4576, %v4225
        %v4578 = vrot.slane %v4225, 4
        %v4579 = vsel %vm418, %v4229, %v4578
        %v4581 = vunpack.c.l.s4 1983009808
        %v4582 = vunpack.c.0.s8 %v4581
        %v4583 = vperm.slane %v4577, %v4582
        %v4585 = vunpack.c.l.s4 1983009808
        %v4586 = vunpack.c.0.s8 %v4585
        %v4587 = vperm.slane %v4579, %v4586
        %v4588 = vrot.slane %v4231, 4
        %v4589 = vsel %vm418, %v4588, %v4227
        %v4590 = vrot.slane %v4227, 4
        %v4591 = vsel %vm418, %v4231, %v4590
        %v4593 = vunpack.c.l.s4 1983009808
        %v4594 = vunpack.c.0.s8 %v4593
        %v4595 = vperm.slane %v4589, %v4594
        %v4597 = vunpack.c.l.s4 1983009808
        %v4598 = vunpack.c.0.s8 %v4597
        %v4599 = vperm.slane %v4591, %v4598
        %v4600 = vrot.slane %v4237, 4
        %v4601 = vsel %vm418, %v4600, %v4233
        %v4602 = vrot.slane %v4233, 4
        %v4603 = vsel %vm418, %v4237, %v4602
        %v4605 = vunpack.c.l.s4 1983009808
        %v4606 = vunpack.c.0.s8 %v4605
        %v4607 = vperm.slane %v4601, %v4606
        %v4609 = vunpack.c.l.s4 1983009808
        %v4610 = vunpack.c.0.s8 %v4609
        %v4611 = vperm.slane %v4603, %v4610
        %v4612 = vrot.slane %v4239, 4
        %v4613 = vsel %vm418, %v4612, %v4235
        %v4614 = vrot.slane %v4235, 4
        %v4615 = vsel %vm418, %v4239, %v4614
        %v4617 = vunpack.c.l.s4 1983009808
        %v4618 = vunpack.c.0.s8 %v4617
        %v4619 = vperm.slane %v4613, %v4618
        %v4621 = vunpack.c.l.s4 1983009808
        %v4622 = vunpack.c.0.s8 %v4621
        %v4623 = vperm.slane %v4615, %v4622
        %v4624 = vrot.slane %v4595, 4
        %v4625 = vsel %vm418, %v4624, %v4583
        %v4626 = vrot.slane %v4583, 4
        %v4627 = vsel %vm418, %v4595, %v4626
        %v4629 = vunpack.c.l.s4 1934713408
        %v4630 = vunpack.c.0.s8 %v4629
        %v4631 = vperm.slane %v4625, %v4630
        %v4633 = vunpack.c.l.s4 1934713408
        %v4634 = vunpack.c.0.s8 %v4633
        %v4635 = vperm.slane %v4627, %v4634
        %v4636 = vrot.slane %v4599, 4
        %v4637 = vsel %vm418, %v4636, %v4587
        %v4638 = vrot.slane %v4587, 4
        %v4639 = vsel %vm418, %v4599, %v4638
        %v4641 = vunpack.c.l.s4 1934713408
        %v4642 = vunpack.c.0.s8 %v4641
        %v4643 = vperm.slane %v4637, %v4642
        %v4645 = vunpack.c.l.s4 1934713408
        %v4646 = vunpack.c.0.s8 %v4645
        %v4647 = vperm.slane %v4639, %v4646
        %v4648 = vrot.slane %v4619, 4
        %v4649 = vsel %vm418, %v4648, %v4607
        %v4650 = vrot.slane %v4607, 4
        %v4651 = vsel %vm418, %v4619, %v4650
        %v4653 = vunpack.c.l.s4 1934713408
        %v4654 = vunpack.c.0.s8 %v4653
        %v4655 = vperm.slane %v4649, %v4654
        %v4657 = vunpack.c.l.s4 1934713408
        %v4658 = vunpack.c.0.s8 %v4657
        %v4659 = vperm.slane %v4651, %v4658
        %v4660 = vrot.slane %v4623, 4
        %v4661 = vsel %vm418, %v4660, %v4611
        %v4662 = vrot.slane %v4611, 4
        %v4663 = vsel %vm418, %v4623, %v4662
        %v4665 = vunpack.c.l.s4 1934713408
        %v4666 = vunpack.c.0.s8 %v4665
        %v4667 = vperm.slane %v4661, %v4666
        %v4669 = vunpack.c.l.s4 1934713408
        %v4670 = vunpack.c.0.s8 %v4669
        %v4671 = vperm.slane %v4663, %v4670
        %v4672 = vrot.slane %v4655, 4
        %v4673 = vsel %vm418, %v4672, %v4631
        %v4674 = vrot.slane %v4631, 4
        %v4675 = vsel %vm418, %v4655, %v4674
        %v4676 = vrot.slane %v4659, 4
        %v4677 = vsel %vm418, %v4676, %v4635
        %v4678 = vrot.slane %v4635, 4
        %v4679 = vsel %vm418, %v4659, %v4678
        %v4680 = vrot.slane %v4667, 4
        %v4681 = vsel %vm418, %v4680, %v4643
        %v4682 = vrot.slane %v4643, 4
        %v4683 = vsel %vm418, %v4667, %v4682
        %v4684 = vrot.slane %v4671, 4
        %v4685 = vsel %vm418, %v4684, %v4647
        %v4686 = vrot.slane %v4647, 4
        %v4687 = vsel %vm418, %v4671, %v4686
        %4690 = vrot.lane.b32.xlu0 %v4339, 4
        %v4691 = vpop.permute.xlu0 %4690
        %4692 = vrot.lane.b32.xlu0 %v4451, 4
        %v4693 = vpop.permute.xlu0 %4692
        %4698 = vrot.lane.b32.xlu0 %v4341, 8
        %v4699 = vpop.permute.xlu0 %4698
        %4700 = vrot.lane.b32.xlu0 %v4453, 8
        %v4701 = vpop.permute.xlu0 %4700
        %4706 = vrot.lane.b32.xlu0 %v4343, 12
        %v4707 = vpop.permute.xlu0 %4706
        %4708 = vrot.lane.b32.xlu0 %v4455, 12
        %v4709 = vpop.permute.xlu0 %4708
        %4714 = vrot.lane.b32.xlu0 %v4345, 16
        %v4715 = vpop.permute.xlu0 %4714
        %4716 = vrot.lane.b32.xlu0 %v4457, 16
        %v4717 = vpop.permute.xlu0 %4716
        %4722 = vrot.lane.b32.xlu0 %v4347, 20
        %v4723 = vpop.permute.xlu0 %4722
        %4724 = vrot.lane.b32.xlu0 %v4459, 20
        %v4725 = vpop.permute.xlu0 %4724
        %4730 = vrot.lane.b32.xlu0 %v4349, 24
        %v4731 = vpop.permute.xlu0 %4730
        %4732 = vrot.lane.b32.xlu0 %v4461, 24
        %v4733 = vpop.permute.xlu0 %4732
        %4738 = vrot.lane.b32.xlu0 %v4351, 28
        %v4739 = vpop.permute.xlu0 %4738
        %4740 = vrot.lane.b32.xlu0 %v4463, 28
        %v4741 = vpop.permute.xlu0 %4740
        %4746 = vrot.lane.b32.xlu0 %v4561, 32
        %v4747 = vpop.permute.xlu0 %4746
        %4748 = vrot.lane.b32.xlu0 %v4673, 32
        %v4749 = vpop.permute.xlu0 %4748
        %4754 = vrot.lane.b32.xlu0 %v4563, 36
        %v4755 = vpop.permute.xlu0 %4754
        %4756 = vrot.lane.b32.xlu0 %v4675, 36
        %v4757 = vpop.permute.xlu0 %4756
        %4762 = vrot.lane.b32.xlu0 %v4565, 40
        %v4763 = vpop.permute.xlu0 %4762
        %4764 = vrot.lane.b32.xlu0 %v4677, 40
        %v4765 = vpop.permute.xlu0 %4764
        %4770 = vrot.lane.b32.xlu0 %v4567, 44
        %v4771 = vpop.permute.xlu0 %4770
        %4772 = vrot.lane.b32.xlu0 %v4679, 44
        %v4773 = vpop.permute.xlu0 %4772
        %4778 = vrot.lane.b32.xlu0 %v4569, 48
        %v4779 = vpop.permute.xlu0 %4778
        %4780 = vrot.lane.b32.xlu0 %v4681, 48
        %v4781 = vpop.permute.xlu0 %4780
        %4786 = vrot.lane.b32.xlu0 %v4571, 52
        %v4787 = vpop.permute.xlu0 %4786
        %4788 = vrot.lane.b32.xlu0 %v4683, 52
        %v4789 = vpop.permute.xlu0 %4788
        %4794 = vrot.lane.b32.xlu0 %v4573, 56
        %v4795 = vpop.permute.xlu0 %4794
        %4796 = vrot.lane.b32.xlu0 %v4685, 56
        %v4797 = vpop.permute.xlu0 %4796
        %4802 = vrot.lane.b32.xlu0 %v4575, 60
        %v4803 = vpop.permute.xlu0 %4802
        %4804 = vrot.lane.b32.xlu0 %v4687, 60
        %v4805 = vpop.permute.xlu0 %4804
        %v4808 = vsel %vm277, %v4337, %v4691
        %v4809 = vsel %vm277, %v4449, %v4693
        %v4810 = vsel %vm2093, %v4808, %v4699
        %v4811 = vsel %vm2093, %v4809, %v4701
        %v4812 = vsel %vm2126, %v4810, %v4707
        %v4813 = vsel %vm2126, %v4811, %v4709
        %v4814 = vsel %vm2159, %v4812, %v4715
        %v4815 = vsel %vm2159, %v4813, %v4717
        %v4816 = vsel %vm2192, %v4814, %v4723
        %v4817 = vsel %vm2192, %v4815, %v4725
        %v4818 = vsel %vm2225, %v4816, %v4731
        %v4819 = vsel %vm2225, %v4817, %v4733
        %v4820 = vsel %vm2258, %v4818, %v4739
        %v4821 = vsel %vm2258, %v4819, %v4741
        %v4822 = vsel %vm2291, %v4820, %v4747
        %v4823 = vsel %vm2291, %v4821, %v4749
        %v4824 = vsel %vm2329, %v4822, %v4755
        %v4825 = vsel %vm2329, %v4823, %v4757
        %vm4826 = vcmask 326656
        %v4827 = vsel %vm4826, %v4824, %v4763
        %v4828 = vsel %vm4826, %v4825, %v4765
        %vm4829 = vcmask 359424
        %v4830 = vsel %vm4829, %v4827, %v4771
        %v4831 = vsel %vm4829, %v4828, %v4773
        %vm4832 = vcmask 392192
        %v4833 = vsel %vm4832, %v4830, %v4779
        %v4834 = vsel %vm4832, %v4831, %v4781
        %vm4835 = vcmask 424960
        %v4836 = vsel %vm4835, %v4833, %v4787
        %v4837 = vsel %vm4835, %v4834, %v4789
        %vm4838 = vcmask 457728
        %v4839 = vsel %vm4838, %v4836, %v4795
        %v4840 = vsel %vm4838, %v4837, %v4797
        %vm4841 = vcmask 490496
        %v4842 = vsel %vm4841, %v4839, %v4803
        %v4843 = vsel %vm4841, %v4840, %v4805
        %vm4844 = vcmask 523264
        %4845 = vst.msk [vmem:[%s271] sm:$0xff] %vm4844, %v4842
        %4846 = vst.msk [vmem:[%s271 + $0x8] sm:$0xff] %vm4844, %v4843
        %s4847 = sand.u32 %s181, 1
        %s4848 = scalar_lea.sflag [#allocation4], %s4847
        %s4849 = sand.u32 %s181, 1
        %s4850 = smul.addr %s4849, 16
        %s4851 = scalar_lea.vmem [#allocation3], %s4850
        // Predicated region
        $region49: #{tpu_custom_call.1} parent=47 // pred_check
          %p4852 = pneg %p191
        $region50: #{tpu_custom_call.1} parent=47 // pred_check_branch
          %4854 = sbr.rel (%p4852) target = $region52
        $region51: #{tpu_custom_call.1} parent=47 // pred_region
          %4856 = vsyncadd %s4848, 0
          %s4857 = smul.addr %s21, 2
          %s4858 = smul.addr %s4857, 8
          %s4859 = scalar_lea.hbm %s7, %s4858
          %s4860 = sshll.u32 %s4851, 4
          %s4861 = int_to_ptr.vmem [resolvable:$true] %s4860
          %s4862 = sshll.u32 %s4859, 4
          %s4863 = int_to_ptr.hbm [resolvable:$true] %s4862
          %4868 = dma.vmem_to_hbm [thread:$0]  %s4861, 256, %s4863, %s4848, 128, 128, 8
        $region52: #{tpu_custom_call.1} parent=47 // pred_fallthru
          _
      $region48: #{tpu_custom_call.1} parent=5 // pred_fallthru
        _
      %p4869 = scmp.le.s32.totalorder 2, %s16
      // Predicated region
      $region53: #{tpu_custom_call.1} parent=5 // pred_check
        %p4870 = pneg %p4869
      $region54: #{tpu_custom_call.1} parent=5 // pred_check_branch
        %4872 = sbr.rel (%p4870) target = $region56
      $region55: #{tpu_custom_call.1} parent=5 // pred_region
        %s4873 = ssub.s32 %s16, 2
        // Predicated region
        $region57: #{tpu_custom_call.1} parent=55 // pred_check
          %p4874 = pneg %p197
        $region58: #{tpu_custom_call.1} parent=55 // pred_check_branch
          %4876 = sbr.rel (%p4874) target = $region60
        $region59: #{tpu_custom_call.1} parent=55 // pred_region
          %s4877 = sand.u32 %s182, 1
          %s4878 = scalar_lea.sflag [#allocation4], %s4877
          %s4879 = sand.u32 %s182, 1
          %s4880 = smul.addr %s4879, 16
          %s4881 = scalar_lea.vmem [#allocation3], %s4880
          %4883 = dma.done %s4878, 256
        $region60: #{tpu_custom_call.1} parent=55 // pred_fallthru
          _
      $region56: #{tpu_custom_call.1} parent=5 // pred_fallthru
        _
    $region6: #{tpu_custom_call.1} parent=1 // loop_footer
      %s20 = sadd.s32 1, %s16
    $region7: #{tpu_custom_call.1} parent=1 // loop_footer_branch
      %15 = sbr.rel target = $region3
    $region8: #{tpu_custom_call.1} parent=1 // loop_exit
      _
    %4884 = vsyncpa [#allocation4], 1
    %s4885 = scalar_lea.sflag [#allocation4], 1
    %4886 = vsyncpa %s4885, 1

</llo_original>
